<compile_context>
chip_gen: v7x
topology: tpu7x:2x2x1
jax: 0.10.0
libtpu: 0.0.40
codegen_flags: <defaults>
</compile_context>

<pallas_src>
import functools
import math

import jax
import jax.numpy as jnp
import numpy as np
from jax import lax
from jax.experimental import pallas as pl
from jax.experimental.pallas import tpu as pltpu


def _layer_norm(h, gamma, beta, eps):
    mu = jnp.mean(h, axis=-1, keepdims=True)
    c = h - mu
    var = jnp.mean(c * c, axis=-1, keepdims=True)
    return c * lax.rsqrt(var + eps) * gamma + beta


def transformer_block_kernel(
    x_ref, bias_ref,
    win_ref, bin_ref, wout_ref, bout_ref,
    w1_ref, b1_ref, w2_ref, b2_ref, w3_ref, b3_ref,
    g1_ref, be1_ref, g2_ref, be2_ref,
    o_ref, *, num_heads, head_dim, eps):
    Bb, S, E = x_ref.shape
    M = Bb * S

    # Fold batch*seq into the matmul M dimension.
    x = x_ref[...].reshape(M, E)                        # (M, E) f32
    bias = bias_ref[...]                                # (Bb, 1, S) additive key bias

    # ---- QKV projection on the whole slab (q-scale pre-folded into W/b) ----
    qkv = jnp.dot(x, win_ref[...].astype(jnp.float32),
                  preferred_element_type=jnp.float32) + bin_ref[...]   # (M, 3E)

    # ---- attention: static loop over heads, batched over the Bb items ----
    ctx_parts = []
    for h in range(num_heads):
        lo = h * head_dim
        qh = qkv[:, lo:lo + head_dim].reshape(Bb, S, head_dim)
        kh = qkv[:, E + lo:E + lo + head_dim].reshape(Bb, S, head_dim)
        vh = qkv[:, 2 * E + lo:2 * E + lo + head_dim].reshape(Bb, S, head_dim)
        s = jnp.einsum("bqd,bkd->bqk", qh, kh,
                       preferred_element_type=jnp.float32) + bias      # (Bb, S, S)
        m = jnp.max(s, axis=-1, keepdims=True)
        p = jnp.exp(s - m)
        p = p * pl.reciprocal(jnp.sum(p, axis=-1, keepdims=True), approx=True)
        ctx_h = jnp.einsum("bqk,bkd->bqd", p, vh,
                           preferred_element_type=jnp.float32)          # (Bb, S, Dh)
        ctx_parts.append(ctx_h.reshape(M, head_dim))
    ctx = jnp.concatenate(ctx_parts, axis=-1)                           # (M, E)

    attn = jnp.dot(ctx, wout_ref[...].astype(jnp.float32),
                   preferred_element_type=jnp.float32) + bout_ref[...]

    # TODO(synk): dropout is identity (inference semantics); a training-mode
    # kernel would use pltpu.prng_seed / pltpu.prng_random_bits here.
    h1 = _layer_norm(x + attn, g1_ref[...], be1_ref[...], eps)

    # ---- FFN: Linear -> ReLU -> Linear -> ReLU -> Linear on the (M, *) slab ----
    f = jnp.maximum(jnp.dot(h1, w1_ref[...].astype(jnp.float32),
                            preferred_element_type=jnp.float32) + b1_ref[...], 0.0)
    f = jnp.maximum(jnp.dot(f, w2_ref[...].astype(jnp.float32),
                            preferred_element_type=jnp.float32) + b2_ref[...], 0.0)
    f = jnp.dot(f, w3_ref[...].astype(jnp.float32),
                preferred_element_type=jnp.float32) + b3_ref[...]

    out = _layer_norm(h1 + f, g2_ref[...], be2_ref[...], eps)
    o_ref[...] = out.reshape(Bb, S, E).astype(o_ref.dtype)


def _pick_batch_block(B, S):
    """Largest Bb dividing B s.t. the grid keeps >= 2 steps (feeds both v7x
    TensorCores) and the per-step token slab stays modest."""
    best = 1
    for d in range(1, B + 1):
        if B % d == 0 and d * S <= 1024 and (B // d) >= 2:
            best = d
    return best


def custom_transformer_block(x, key_padding_mask, params, *, num_heads,
                             eps=1e-5, batch_block=None,
                             weights_dtype=jnp.bfloat16):
    B, S, E = x.shape
    assert E % num_heads == 0
    head_dim = E // num_heads
    Fh = params["w1"].shape[0]

    Bb = batch_block if batch_block is not None else _pick_batch_block(B, S)
    assert B % Bb == 0
    NB = B // Bb

    # ---- host-side layout / precision plumbing only ----
    scale = 1.0 / math.sqrt(head_dim)
    win_t = params["w_in"].T                                        # (E, 3E)
    win_t = jnp.concatenate([win_t[:, :E] * scale, win_t[:, E:]], axis=1)
    b_in = jnp.concatenate([params["b_in"][:, :E] * scale,
                            params["b_in"][:, E:]], axis=1)
    win_t = win_t.astype(weights_dtype)
    wout_t = params["w_out"].T.astype(weights_dtype)                # (E, E)
    w1_t = params["w1"].T.astype(weights_dtype)                     # (E, Fh)
    w2_t = params["w2"].T.astype(weights_dtype)                     # (Fh, Fh)
    w3_t = params["w3"].T.astype(weights_dtype)                     # (Fh, E)

    # key_padding_mask (True == ignore key) -> additive f32 score bias.
    mask_bias = jnp.where(key_padding_mask, -1e30, 0.0).astype(jnp.float32)
    mask_bias = mask_bias.reshape(B, 1, S)

    kernel = functools.partial(transformer_block_kernel, num_heads=num_heads,
                               head_dim=head_dim, eps=eps)
    const = lambda b: (0, 0)

    out = pl.pallas_call(
        kernel,
        grid=(NB,),
        in_specs=[
            pl.BlockSpec((Bb, S, E), lambda b: (b, 0, 0)),     # x block
            pl.BlockSpec((Bb, 1, S), lambda b: (b, 0, 0)),     # additive mask bias
            pl.BlockSpec((E, 3 * E), const),                   # W_in^T (q-scaled, bf16)
            pl.BlockSpec((1, 3 * E), const),                   # b_in   (q-scaled, f32)
            pl.BlockSpec((E, E), const),                       # W_out^T
            pl.BlockSpec((1, E), const),                       # b_out
            pl.BlockSpec((E, Fh), const),                      # W1^T
            pl.BlockSpec((1, Fh), const),                      # b1
            pl.BlockSpec((Fh, Fh), const),                     # W2^T
            pl.BlockSpec((1, Fh), const),                      # b2
            pl.BlockSpec((Fh, E), const),                      # W3^T
            pl.BlockSpec((1, E), const),                       # b3
            pl.BlockSpec((1, E), const),                       # gamma1
            pl.BlockSpec((1, E), const),                       # beta1
            pl.BlockSpec((1, E), const),                       # gamma2
            pl.BlockSpec((1, E), const),                       # beta2
        ],
        out_specs=pl.BlockSpec((Bb, S, E), lambda b: (b, 0, 0)),
        out_shape=jax.ShapeDtypeStruct((B, S, E), x.dtype),
        compiler_params=pltpu.CompilerParams(dimension_semantics=("parallel",)),
    )(x, mask_bias, win_t, b_in, wout_t, params["b_out"],
      w1_t, params["b1"], w2_t, params["b2"], w3_t, params["b3"],
      params["g1"], params["be1"], params["g2"], params["be2"])
    return out


def reference_block(x, key_padding_mask, p, *, num_heads, eps=1e-5):
    """Pure-JAX reference mirroring torch nn.MultiheadAttention + block."""
    B, S, E = x.shape
    Dh = E // num_heads
    qkv = x @ p["w_in"].T + p["b_in"]
    q, k, v = jnp.split(qkv, 3, axis=-1)

    def heads(t):
        return t.reshape(B, S, num_heads, Dh).transpose(0, 2, 1, 3)

    q, k, v = heads(q), heads(k), heads(v)
    s = jnp.einsum("bhqd,bhkd->bhqk", q, k) / math.sqrt(Dh)
    s = jnp.where(key_padding_mask[:, None, None, :], -jnp.inf, s)
    a = jax.nn.softmax(s, axis=-1)
    ctx = jnp.einsum("bhqk,bhkd->bhqd", a, v).transpose(0, 2, 1, 3).reshape(B, S, E)
    attn = ctx @ p["w_out"].T + p["b_out"]
    h1 = _layer_norm(x + attn, p["g1"], p["be1"], eps)
    f = jax.nn.relu(h1 @ p["w1"].T + p["b1"])
    f = jax.nn.relu(f @ p["w2"].T + p["b2"])
    f = f @ p["w3"].T + p["b3"]
    return _layer_norm(h1 + f, p["g2"], p["be2"], eps)


if __name__ == "__main__":
    B, S, E, H, Fh = 8, 8, 128, 4, 256   # lane-dense: E, Fh multiples of 128
    key = jax.random.PRNGKey(0)
    ks = jax.random.split(key, 16)

    def u(k, shape, fan_in):
        b = 1.0 / math.sqrt(fan_in)
        return jax.random.uniform(k, shape, jnp.float32, -b, b)

    params = {
        "w_in": u(ks[0], (3 * E, E), E),     # in_proj_weight (3E, E)
        "b_in": u(ks[1], (1, 3 * E), E),
        "w_out": u(ks[2], (E, E), E),        # out_proj
        "b_out": u(ks[3], (1, E), E),
        "w1": u(ks[4], (Fh, E), E),          # Linear(E, Fh)
        "b1": u(ks[5], (1, Fh), E),
        "w2": u(ks[6], (Fh, Fh), Fh),        # Linear(Fh, Fh)
        "b2": u(ks[7], (1, Fh), Fh),
        "w3": u(ks[8], (E, Fh), Fh),         # Linear(Fh, E)
        "b3": u(ks[9], (1, E), Fh),
        "g1": 1.0 + 0.1 * jax.random.normal(ks[10], (1, E), jnp.float32),
        "be1": 0.1 * jax.random.normal(ks[11], (1, E), jnp.float32),
        "g2": 1.0 + 0.1 * jax.random.normal(ks[12], (1, E), jnp.float32),
        "be2": 0.1 * jax.random.normal(ks[13], (1, E), jnp.float32),
    }

    # The kernel stores the large weight matrices in bf16; round them to
    # bf16-representable values up front so kernel and reference use the
    # same effective weights.
    for name in ("w_in", "w_out", "w1", "w2", "w3"):
        params[name] = params[name].astype(jnp.bfloat16).astype(jnp.float32)

    x = jax.random.normal(ks[14], (B, S, E), jnp.float32)
    lengths = jnp.array([8, 5, 8, 3, 7, 8, 1, 6], jnp.int32)          # ragged lengths
    key_padding_mask = jnp.arange(S)[None, :] >= lengths[:, None]     # (B,S) True => pad

    out = custom_transformer_block(x, key_padding_mask, params, num_heads=H)
    jax.block_until_ready(out)

    ref = reference_block(x, key_padding_mask, params, num_heads=H)
    assert out.shape == (B, S, E) and out.dtype == jnp.float32
    assert np.isfinite(np.asarray(out)).all()
    max_err = float(np.max(np.abs(np.asarray(out) - np.asarray(ref))))
    assert np.allclose(np.asarray(out), np.asarray(ref), atol=2e-2, rtol=2e-2), max_err

    print("KERNEL_OK")
</pallas_src>

<mosaic_0001>
module attributes {stable_mosaic.version = 11 : i64} {
  func.func @transformer_block_kernel(%arg0: i32, %arg1: memref<4x8x128xf32, #tpu.memory_space<vmem>>, %arg2: memref<4x1x8xf32, #tpu.memory_space<vmem>>, %arg3: memref<128x384xbf16, #tpu.memory_space<vmem>>, %arg4: memref<1x384xf32, #tpu.memory_space<vmem>>, %arg5: memref<128x128xbf16, #tpu.memory_space<vmem>>, %arg6: memref<1x128xf32, #tpu.memory_space<vmem>>, %arg7: memref<128x256xbf16, #tpu.memory_space<vmem>>, %arg8: memref<1x256xf32, #tpu.memory_space<vmem>>, %arg9: memref<256x256xbf16, #tpu.memory_space<vmem>>, %arg10: memref<1x256xf32, #tpu.memory_space<vmem>>, %arg11: memref<256x128xbf16, #tpu.memory_space<vmem>>, %arg12: memref<1x128xf32, #tpu.memory_space<vmem>>, %arg13: memref<1x128xf32, #tpu.memory_space<vmem>>, %arg14: memref<1x128xf32, #tpu.memory_space<vmem>>, %arg15: memref<1x128xf32, #tpu.memory_space<vmem>>, %arg16: memref<1x128xf32, #tpu.memory_space<vmem>>, %arg17: memref<4x8x128xf32, #tpu.memory_space<vmem>>) attributes {dimension_semantics = [#tpu.dimension_semantics<parallel>], iteration_bounds = array<i64: 2>, scalar_prefetch = 0 : i64, scratch_operands = 0 : i64, tpu.core_type = #tpu.core_type<tc>, window_params = [{transform_indices = @transform_0, window_bounds = array<i64: 4, 8, 128>}, {transform_indices = @transform_1, window_bounds = array<i64: 4, 1, 8>}, {pipeline_mode = #tpu.pipeline_mode<synchronous>, transform_indices = @transform_2, window_bounds = array<i64: 128, 384>}, {pipeline_mode = #tpu.pipeline_mode<synchronous>, transform_indices = @transform_3, window_bounds = array<i64: 1, 384>}, {pipeline_mode = #tpu.pipeline_mode<synchronous>, transform_indices = @transform_4, window_bounds = array<i64: 128, 128>}, {pipeline_mode = #tpu.pipeline_mode<synchronous>, transform_indices = @transform_5, window_bounds = array<i64: 1, 128>}, {pipeline_mode = #tpu.pipeline_mode<synchronous>, transform_indices = @transform_6, window_bounds = array<i64: 128, 256>}, {pipeline_mode = #tpu.pipeline_mode<synchronous>, transform_indices = @transform_7, window_bounds = array<i64: 1, 256>}, {pipeline_mode = #tpu.pipeline_mode<synchronous>, transform_indices = @transform_8, window_bounds = array<i64: 256, 256>}, {pipeline_mode = #tpu.pipeline_mode<synchronous>, transform_indices = @transform_9, window_bounds = array<i64: 1, 256>}, {pipeline_mode = #tpu.pipeline_mode<synchronous>, transform_indices = @transform_10, window_bounds = array<i64: 256, 128>}, {pipeline_mode = #tpu.pipeline_mode<synchronous>, transform_indices = @transform_11, window_bounds = array<i64: 1, 128>}, {pipeline_mode = #tpu.pipeline_mode<synchronous>, transform_indices = @transform_12, window_bounds = array<i64: 1, 128>}, {pipeline_mode = #tpu.pipeline_mode<synchronous>, transform_indices = @transform_13, window_bounds = array<i64: 1, 128>}, {pipeline_mode = #tpu.pipeline_mode<synchronous>, transform_indices = @transform_14, window_bounds = array<i64: 1, 128>}, {pipeline_mode = #tpu.pipeline_mode<synchronous>, transform_indices = @transform_15, window_bounds = array<i64: 1, 128>}, {transform_indices = @transform_16, window_bounds = array<i64: 4, 8, 128>}]} {
    %c0 = arith.constant 0 : index
    %c0_0 = arith.constant 0 : index
    %c0_1 = arith.constant 0 : index
    %0 = vector.load %arg1[%c0, %c0_0, %c0_1] : memref<4x8x128xf32, #tpu.memory_space<vmem>>, vector<4x8x128xf32>
    %1 = vector.shape_cast %0 : vector<4x8x128xf32> to vector<32x128xf32>
    %c0_2 = arith.constant 0 : index
    %c0_3 = arith.constant 0 : index
    %c0_4 = arith.constant 0 : index
    %2 = vector.load %arg2[%c0_2, %c0_3, %c0_4] : memref<4x1x8xf32, #tpu.memory_space<vmem>>, vector<4x1x8xf32>
    %c0_5 = arith.constant 0 : index
    %c0_6 = arith.constant 0 : index
    %3 = vector.load %arg3[%c0_5, %c0_6] : memref<128x384xbf16, #tpu.memory_space<vmem>>, vector<128x384xbf16>
    %4 = arith.extf %3 : vector<128x384xbf16> to vector<128x384xf32>
    %cst = arith.constant dense<0.000000e+00> : vector<32x384xf32>
    %5 = tpu.matmul %1, %4, %cst {dimension_numbers = #tpu.dot_dimension_numbers<[1], [0], [0], [1], [0, 0, 1, 1], [], []>} : vector<32x128xf32>, vector<128x384xf32>, vector<32x384xf32> -> vector<32x384xf32>
    %c0_7 = arith.constant 0 : index
    %c0_8 = arith.constant 0 : index
    %6 = vector.load %arg4[%c0_7, %c0_8] : memref<1x384xf32, #tpu.memory_space<vmem>>, vector<1x384xf32>
    %7 = vector.broadcast %6 : vector<1x384xf32> to vector<32x384xf32>
    %8 = arith.addf %5, %7 : vector<32x384xf32>
    %9 = vector.extract_strided_slice %8 {offsets = [0, 0], sizes = [32, 32], strides = [1, 1]} : vector<32x384xf32> to vector<32x32xf32>
    %10 = vector.shape_cast %9 : vector<32x32xf32> to vector<4x8x32xf32>
    %11 = vector.extract_strided_slice %8 {offsets = [0, 128], sizes = [32, 32], strides = [1, 1]} : vector<32x384xf32> to vector<32x32xf32>
    %12 = vector.shape_cast %11 : vector<32x32xf32> to vector<4x8x32xf32>
    %13 = vector.extract_strided_slice %8 {offsets = [0, 256], sizes = [32, 32], strides = [1, 1]} : vector<32x384xf32> to vector<32x32xf32>
    %14 = vector.shape_cast %13 : vector<32x32xf32> to vector<4x8x32xf32>
    "tpu.trace_start"() <{level = 10 : i32, message = "bqd,bkd->bqk"}> : () -> ()
    %cst_9 = arith.constant dense<0.000000e+00> : vector<4x8x8xf32>
    %15 = tpu.matmul %10, %12, %cst_9 {dimension_numbers = #tpu.dot_dimension_numbers<[2], [2], [1], [1], [0, 0, 0, 1, 1, 1], [0], [0]>} : vector<4x8x32xf32>, vector<4x8x32xf32>, vector<4x8x8xf32> -> vector<4x8x8xf32>
    "tpu.trace_stop"() : () -> ()
    %16 = vector.broadcast %2 : vector<4x1x8xf32> to vector<4x8x8xf32>
    %17 = arith.addf %15, %16 : vector<4x8x8xf32>
    %cst_10 = arith.constant dense<0xFF800000> : vector<4x8xf32>
    %18 = vector.multi_reduction <maximumf>, %17, %cst_10 [2] : vector<4x8x8xf32> to vector<4x8xf32>
    %19 = vector.shape_cast %18 : vector<4x8xf32> to vector<4x8x1xf32>
    %20 = vector.broadcast %19 : vector<4x8x1xf32> to vector<4x8x8xf32>
    %21 = arith.subf %17, %20 : vector<4x8x8xf32>
    %22 = math.exp %21 : vector<4x8x8xf32>
    %cst_11 = arith.constant dense<0.000000e+00> : vector<4x8xf32>
    %23 = vector.multi_reduction <add>, %22, %cst_11 [2] : vector<4x8x8xf32> to vector<4x8xf32>
    %24 = vector.shape_cast %23 : vector<4x8xf32> to vector<4x8x1xf32>
    %25 = tpu.reciprocal %24 {approx = true} : vector<4x8x1xf32> -> vector<4x8x1xf32>
    %26 = vector.broadcast %25 : vector<4x8x1xf32> to vector<4x8x8xf32>
    %27 = arith.mulf %22, %26 : vector<4x8x8xf32>
    "tpu.trace_start"() <{level = 10 : i32, message = "bqk,bkd->bqd"}> : () -> ()
    %cst_12 = arith.constant dense<0.000000e+00> : vector<4x8x32xf32>
    %28 = tpu.matmul %27, %14, %cst_12 {dimension_numbers = #tpu.dot_dimension_numbers<[2], [1], [1], [2], [0, 0, 0, 1, 1, 2], [0], [0]>} : vector<4x8x8xf32>, vector<4x8x32xf32>, vector<4x8x32xf32> -> vector<4x8x32xf32>
    "tpu.trace_stop"() : () -> ()
    %29 = vector.shape_cast %28 : vector<4x8x32xf32> to vector<32x32xf32>
    %30 = vector.extract_strided_slice %8 {offsets = [0, 32], sizes = [32, 32], strides = [1, 1]} : vector<32x384xf32> to vector<32x32xf32>
    %31 = vector.shape_cast %30 : vector<32x32xf32> to vector<4x8x32xf32>
    %32 = vector.extract_strided_slice %8 {offsets = [0, 160], sizes = [32, 32], strides = [1, 1]} : vector<32x384xf32> to vector<32x32xf32>
    %33 = vector.shape_cast %32 : vector<32x32xf32> to vector<4x8x32xf32>
    %34 = vector.extract_strided_slice %8 {offsets = [0, 288], sizes = [32, 32], strides = [1, 1]} : vector<32x384xf32> to vector<32x32xf32>
    %35 = vector.shape_cast %34 : vector<32x32xf32> to vector<4x8x32xf32>
    "tpu.trace_start"() <{level = 10 : i32, message = "bqd,bkd->bqk"}> : () -> ()
    %cst_13 = arith.constant dense<0.000000e+00> : vector<4x8x8xf32>
    %36 = tpu.matmul %31, %33, %cst_13 {dimension_numbers = #tpu.dot_dimension_numbers<[2], [2], [1], [1], [0, 0, 0, 1, 1, 1], [0], [0]>} : vector<4x8x32xf32>, vector<4x8x32xf32>, vector<4x8x8xf32> -> vector<4x8x8xf32>
    "tpu.trace_stop"() : () -> ()
    %37 = vector.broadcast %2 : vector<4x1x8xf32> to vector<4x8x8xf32>
    %38 = arith.addf %36, %37 : vector<4x8x8xf32>
    %cst_14 = arith.constant dense<0xFF800000> : vector<4x8xf32>
    %39 = vector.multi_reduction <maximumf>, %38, %cst_14 [2] : vector<4x8x8xf32> to vector<4x8xf32>
    %40 = vector.shape_cast %39 : vector<4x8xf32> to vector<4x8x1xf32>
    %41 = vector.broadcast %40 : vector<4x8x1xf32> to vector<4x8x8xf32>
    %42 = arith.subf %38, %41 : vector<4x8x8xf32>
    %43 = math.exp %42 : vector<4x8x8xf32>
    %cst_15 = arith.constant dense<0.000000e+00> : vector<4x8xf32>
    %44 = vector.multi_reduction <add>, %43, %cst_15 [2] : vector<4x8x8xf32> to vector<4x8xf32>
    %45 = vector.shape_cast %44 : vector<4x8xf32> to vector<4x8x1xf32>
    %46 = tpu.reciprocal %45 {approx = true} : vector<4x8x1xf32> -> vector<4x8x1xf32>
    %47 = vector.broadcast %46 : vector<4x8x1xf32> to vector<4x8x8xf32>
    %48 = arith.mulf %43, %47 : vector<4x8x8xf32>
    "tpu.trace_start"() <{level = 10 : i32, message = "bqk,bkd->bqd"}> : () -> ()
    %cst_16 = arith.constant dense<0.000000e+00> : vector<4x8x32xf32>
    %49 = tpu.matmul %48, %35, %cst_16 {dimension_numbers = #tpu.dot_dimension_numbers<[2], [1], [1], [2], [0, 0, 0, 1, 1, 2], [0], [0]>} : vector<4x8x8xf32>, vector<4x8x32xf32>, vector<4x8x32xf32> -> vector<4x8x32xf32>
    "tpu.trace_stop"() : () -> ()
    %50 = vector.shape_cast %49 : vector<4x8x32xf32> to vector<32x32xf32>
    %51 = vector.extract_strided_slice %8 {offsets = [0, 64], sizes = [32, 32], strides = [1, 1]} : vector<32x384xf32> to vector<32x32xf32>
    %52 = vector.shape_cast %51 : vector<32x32xf32> to vector<4x8x32xf32>
    %53 = vector.extract_strided_slice %8 {offsets = [0, 192], sizes = [32, 32], strides = [1, 1]} : vector<32x384xf32> to vector<32x32xf32>
    %54 = vector.shape_cast %53 : vector<32x32xf32> to vector<4x8x32xf32>
    %55 = vector.extract_strided_slice %8 {offsets = [0, 320], sizes = [32, 32], strides = [1, 1]} : vector<32x384xf32> to vector<32x32xf32>
    %56 = vector.shape_cast %55 : vector<32x32xf32> to vector<4x8x32xf32>
    "tpu.trace_start"() <{level = 10 : i32, message = "bqd,bkd->bqk"}> : () -> ()
    %cst_17 = arith.constant dense<0.000000e+00> : vector<4x8x8xf32>
    %57 = tpu.matmul %52, %54, %cst_17 {dimension_numbers = #tpu.dot_dimension_numbers<[2], [2], [1], [1], [0, 0, 0, 1, 1, 1], [0], [0]>} : vector<4x8x32xf32>, vector<4x8x32xf32>, vector<4x8x8xf32> -> vector<4x8x8xf32>
    "tpu.trace_stop"() : () -> ()
    %58 = vector.broadcast %2 : vector<4x1x8xf32> to vector<4x8x8xf32>
    %59 = arith.addf %57, %58 : vector<4x8x8xf32>
    %cst_18 = arith.constant dense<0xFF800000> : vector<4x8xf32>
    %60 = vector.multi_reduction <maximumf>, %59, %cst_18 [2] : vector<4x8x8xf32> to vector<4x8xf32>
    %61 = vector.shape_cast %60 : vector<4x8xf32> to vector<4x8x1xf32>
    %62 = vector.broadcast %61 : vector<4x8x1xf32> to vector<4x8x8xf32>
    %63 = arith.subf %59, %62 : vector<4x8x8xf32>
    %64 = math.exp %63 : vector<4x8x8xf32>
    %cst_19 = arith.constant dense<0.000000e+00> : vector<4x8xf32>
    %65 = vector.multi_reduction <add>, %64, %cst_19 [2] : vector<4x8x8xf32> to vector<4x8xf32>
    %66 = vector.shape_cast %65 : vector<4x8xf32> to vector<4x8x1xf32>
    %67 = tpu.reciprocal %66 {approx = true} : vector<4x8x1xf32> -> vector<4x8x1xf32>
    %68 = vector.broadcast %67 : vector<4x8x1xf32> to vector<4x8x8xf32>
    %69 = arith.mulf %64, %68 : vector<4x8x8xf32>
    "tpu.trace_start"() <{level = 10 : i32, message = "bqk,bkd->bqd"}> : () -> ()
    %cst_20 = arith.constant dense<0.000000e+00> : vector<4x8x32xf32>
    %70 = tpu.matmul %69, %56, %cst_20 {dimension_numbers = #tpu.dot_dimension_numbers<[2], [1], [1], [2], [0, 0, 0, 1, 1, 2], [0], [0]>} : vector<4x8x8xf32>, vector<4x8x32xf32>, vector<4x8x32xf32> -> vector<4x8x32xf32>
    "tpu.trace_stop"() : () -> ()
    %71 = vector.shape_cast %70 : vector<4x8x32xf32> to vector<32x32xf32>
    %72 = vector.extract_strided_slice %8 {offsets = [0, 96], sizes = [32, 32], strides = [1, 1]} : vector<32x384xf32> to vector<32x32xf32>
    %73 = vector.shape_cast %72 : vector<32x32xf32> to vector<4x8x32xf32>
    %74 = vector.extract_strided_slice %8 {offsets = [0, 224], sizes = [32, 32], strides = [1, 1]} : vector<32x384xf32> to vector<32x32xf32>
    %75 = vector.shape_cast %74 : vector<32x32xf32> to vector<4x8x32xf32>
    %76 = vector.extract_strided_slice %8 {offsets = [0, 352], sizes = [32, 32], strides = [1, 1]} : vector<32x384xf32> to vector<32x32xf32>
    %77 = vector.shape_cast %76 : vector<32x32xf32> to vector<4x8x32xf32>
    "tpu.trace_start"() <{level = 10 : i32, message = "bqd,bkd->bqk"}> : () -> ()
    %cst_21 = arith.constant dense<0.000000e+00> : vector<4x8x8xf32>
    %78 = tpu.matmul %73, %75, %cst_21 {dimension_numbers = #tpu.dot_dimension_numbers<[2], [2], [1], [1], [0, 0, 0, 1, 1, 1], [0], [0]>} : vector<4x8x32xf32>, vector<4x8x32xf32>, vector<4x8x8xf32> -> vector<4x8x8xf32>
    "tpu.trace_stop"() : () -> ()
    %79 = vector.broadcast %2 : vector<4x1x8xf32> to vector<4x8x8xf32>
    %80 = arith.addf %78, %79 : vector<4x8x8xf32>
    %cst_22 = arith.constant dense<0xFF800000> : vector<4x8xf32>
    %81 = vector.multi_reduction <maximumf>, %80, %cst_22 [2] : vector<4x8x8xf32> to vector<4x8xf32>
    %82 = vector.shape_cast %81 : vector<4x8xf32> to vector<4x8x1xf32>
    %83 = vector.broadcast %82 : vector<4x8x1xf32> to vector<4x8x8xf32>
    %84 = arith.subf %80, %83 : vector<4x8x8xf32>
    %85 = math.exp %84 : vector<4x8x8xf32>
    %cst_23 = arith.constant dense<0.000000e+00> : vector<4x8xf32>
    %86 = vector.multi_reduction <add>, %85, %cst_23 [2] : vector<4x8x8xf32> to vector<4x8xf32>
    %87 = vector.shape_cast %86 : vector<4x8xf32> to vector<4x8x1xf32>
    %88 = tpu.reciprocal %87 {approx = true} : vector<4x8x1xf32> -> vector<4x8x1xf32>
    %89 = vector.broadcast %88 : vector<4x8x1xf32> to vector<4x8x8xf32>
    %90 = arith.mulf %85, %89 : vector<4x8x8xf32>
    "tpu.trace_start"() <{level = 10 : i32, message = "bqk,bkd->bqd"}> : () -> ()
    %cst_24 = arith.constant dense<0.000000e+00> : vector<4x8x32xf32>
    %91 = tpu.matmul %90, %77, %cst_24 {dimension_numbers = #tpu.dot_dimension_numbers<[2], [1], [1], [2], [0, 0, 0, 1, 1, 2], [0], [0]>} : vector<4x8x8xf32>, vector<4x8x32xf32>, vector<4x8x32xf32> -> vector<4x8x32xf32>
    "tpu.trace_stop"() : () -> ()
    %92 = vector.shape_cast %91 : vector<4x8x32xf32> to vector<32x32xf32>
    %93 = tpu.concatenate %29, %50, %71, %92 in 1 : vector<32x32xf32>, vector<32x32xf32>, vector<32x32xf32>, vector<32x32xf32> -> vector<32x128xf32>
    %c0_25 = arith.constant 0 : index
    %c0_26 = arith.constant 0 : index
    %94 = vector.load %arg5[%c0_25, %c0_26] : memref<128x128xbf16, #tpu.memory_space<vmem>>, vector<128x128xbf16>
    %95 = arith.extf %94 : vector<128x128xbf16> to vector<128x128xf32>
    %cst_27 = arith.constant dense<0.000000e+00> : vector<32x128xf32>
    %96 = tpu.matmul %93, %95, %cst_27 {dimension_numbers = #tpu.dot_dimension_numbers<[1], [0], [0], [1], [0, 0, 1, 1], [], []>} : vector<32x128xf32>, vector<128x128xf32>, vector<32x128xf32> -> vector<32x128xf32>
    %c0_28 = arith.constant 0 : index
    %c0_29 = arith.constant 0 : index
    %97 = vector.load %arg6[%c0_28, %c0_29] : memref<1x128xf32, #tpu.memory_space<vmem>>, vector<1x128xf32>
    %98 = vector.broadcast %97 : vector<1x128xf32> to vector<32x128xf32>
    %99 = arith.addf %96, %98 : vector<32x128xf32>
    %100 = arith.addf %1, %99 : vector<32x128xf32>
    %c0_30 = arith.constant 0 : index
    %c0_31 = arith.constant 0 : index
    %101 = vector.load %arg13[%c0_30, %c0_31] : memref<1x128xf32, #tpu.memory_space<vmem>>, vector<1x128xf32>
    %c0_32 = arith.constant 0 : index
    %c0_33 = arith.constant 0 : index
    %102 = vector.load %arg14[%c0_32, %c0_33] : memref<1x128xf32, #tpu.memory_space<vmem>>, vector<1x128xf32>
    %cst_34 = arith.constant dense<0.000000e+00> : vector<32xf32>
    %103 = vector.multi_reduction <add>, %100, %cst_34 [1] : vector<32x128xf32> to vector<32xf32>
    %104 = vector.shape_cast %103 : vector<32xf32> to vector<32x1xf32>
    %cst_35 = arith.constant 1.280000e+02 : f32
    %105 = vector.broadcast %cst_35 : f32 to vector<32x1xf32>
    %106 = arith.divf %104, %105 : vector<32x1xf32>
    %107 = vector.broadcast %106 : vector<32x1xf32> to vector<32x128xf32>
    %108 = arith.subf %100, %107 : vector<32x128xf32>
    %109 = arith.mulf %108, %108 : vector<32x128xf32>
    %cst_36 = arith.constant dense<0.000000e+00> : vector<32xf32>
    %110 = vector.multi_reduction <add>, %109, %cst_36 [1] : vector<32x128xf32> to vector<32xf32>
    %111 = vector.shape_cast %110 : vector<32xf32> to vector<32x1xf32>
    %cst_37 = arith.constant 1.280000e+02 : f32
    %112 = vector.broadcast %cst_37 : f32 to vector<32x1xf32>
    %113 = arith.divf %111, %112 : vector<32x1xf32>
    %cst_38 = arith.constant 9.99999974E-6 : f32
    %114 = vector.broadcast %cst_38 : f32 to vector<32x1xf32>
    %115 = arith.addf %113, %114 : vector<32x1xf32>
    %116 = math.rsqrt %115 : vector<32x1xf32>
    %117 = vector.broadcast %116 : vector<32x1xf32> to vector<32x128xf32>
    %118 = arith.mulf %108, %117 : vector<32x128xf32>
    %119 = vector.broadcast %101 : vector<1x128xf32> to vector<32x128xf32>
    %120 = arith.mulf %118, %119 : vector<32x128xf32>
    %121 = vector.broadcast %102 : vector<1x128xf32> to vector<32x128xf32>
    %122 = arith.addf %120, %121 : vector<32x128xf32>
    %c0_39 = arith.constant 0 : index
    %c0_40 = arith.constant 0 : index
    %123 = vector.load %arg7[%c0_39, %c0_40] : memref<128x256xbf16, #tpu.memory_space<vmem>>, vector<128x256xbf16>
    %124 = arith.extf %123 : vector<128x256xbf16> to vector<128x256xf32>
    %cst_41 = arith.constant dense<0.000000e+00> : vector<32x256xf32>
    %125 = tpu.matmul %122, %124, %cst_41 {dimension_numbers = #tpu.dot_dimension_numbers<[1], [0], [0], [1], [0, 0, 1, 1], [], []>} : vector<32x128xf32>, vector<128x256xf32>, vector<32x256xf32> -> vector<32x256xf32>
    %c0_42 = arith.constant 0 : index
    %c0_43 = arith.constant 0 : index
    %126 = vector.load %arg8[%c0_42, %c0_43] : memref<1x256xf32, #tpu.memory_space<vmem>>, vector<1x256xf32>
    %127 = vector.broadcast %126 : vector<1x256xf32> to vector<32x256xf32>
    %128 = arith.addf %125, %127 : vector<32x256xf32>
    %cst_44 = arith.constant 0.000000e+00 : f32
    %129 = vector.broadcast %cst_44 : f32 to vector<32x256xf32>
    %130 = arith.maximumf %128, %129 : vector<32x256xf32>
    %c0_45 = arith.constant 0 : index
    %c0_46 = arith.constant 0 : index
    %131 = vector.load %arg9[%c0_45, %c0_46] : memref<256x256xbf16, #tpu.memory_space<vmem>>, vector<256x256xbf16>
    %132 = arith.extf %131 : vector<256x256xbf16> to vector<256x256xf32>
    %cst_47 = arith.constant dense<0.000000e+00> : vector<32x256xf32>
    %133 = tpu.matmul %130, %132, %cst_47 {dimension_numbers = #tpu.dot_dimension_numbers<[1], [0], [0], [1], [0, 0, 1, 1], [], []>} : vector<32x256xf32>, vector<256x256xf32>, vector<32x256xf32> -> vector<32x256xf32>
    %c0_48 = arith.constant 0 : index
    %c0_49 = arith.constant 0 : index
    %134 = vector.load %arg10[%c0_48, %c0_49] : memref<1x256xf32, #tpu.memory_space<vmem>>, vector<1x256xf32>
    %135 = vector.broadcast %134 : vector<1x256xf32> to vector<32x256xf32>
    %136 = arith.addf %133, %135 : vector<32x256xf32>
    %cst_50 = arith.constant 0.000000e+00 : f32
    %137 = vector.broadcast %cst_50 : f32 to vector<32x256xf32>
    %138 = arith.maximumf %136, %137 : vector<32x256xf32>
    %c0_51 = arith.constant 0 : index
    %c0_52 = arith.constant 0 : index
    %139 = vector.load %arg11[%c0_51, %c0_52] : memref<256x128xbf16, #tpu.memory_space<vmem>>, vector<256x128xbf16>
    %140 = arith.extf %139 : vector<256x128xbf16> to vector<256x128xf32>
    %cst_53 = arith.constant dense<0.000000e+00> : vector<32x128xf32>
    %141 = tpu.matmul %138, %140, %cst_53 {dimension_numbers = #tpu.dot_dimension_numbers<[1], [0], [0], [1], [0, 0, 1, 1], [], []>} : vector<32x256xf32>, vector<256x128xf32>, vector<32x128xf32> -> vector<32x128xf32>
    %c0_54 = arith.constant 0 : index
    %c0_55 = arith.constant 0 : index
    %142 = vector.load %arg12[%c0_54, %c0_55] : memref<1x128xf32, #tpu.memory_space<vmem>>, vector<1x128xf32>
    %143 = vector.broadcast %142 : vector<1x128xf32> to vector<32x128xf32>
    %144 = arith.addf %141, %143 : vector<32x128xf32>
    %145 = arith.addf %122, %144 : vector<32x128xf32>
    %c0_56 = arith.constant 0 : index
    %c0_57 = arith.constant 0 : index
    %146 = vector.load %arg15[%c0_56, %c0_57] : memref<1x128xf32, #tpu.memory_space<vmem>>, vector<1x128xf32>
    %c0_58 = arith.constant 0 : index
    %c0_59 = arith.constant 0 : index
    %147 = vector.load %arg16[%c0_58, %c0_59] : memref<1x128xf32, #tpu.memory_space<vmem>>, vector<1x128xf32>
    %cst_60 = arith.constant dense<0.000000e+00> : vector<32xf32>
    %148 = vector.multi_reduction <add>, %145, %cst_60 [1] : vector<32x128xf32> to vector<32xf32>
    %149 = vector.shape_cast %148 : vector<32xf32> to vector<32x1xf32>
    %cst_61 = arith.constant 1.280000e+02 : f32
    %150 = vector.broadcast %cst_61 : f32 to vector<32x1xf32>
    %151 = arith.divf %149, %150 : vector<32x1xf32>
    %152 = vector.broadcast %151 : vector<32x1xf32> to vector<32x128xf32>
    %153 = arith.subf %145, %152 : vector<32x128xf32>
    %154 = arith.mulf %153, %153 : vector<32x128xf32>
    %cst_62 = arith.constant dense<0.000000e+00> : vector<32xf32>
    %155 = vector.multi_reduction <add>, %154, %cst_62 [1] : vector<32x128xf32> to vector<32xf32>
    %156 = vector.shape_cast %155 : vector<32xf32> to vector<32x1xf32>
    %cst_63 = arith.constant 1.280000e+02 : f32
    %157 = vector.broadcast %cst_63 : f32 to vector<32x1xf32>
    %158 = arith.divf %156, %157 : vector<32x1xf32>
    %cst_64 = arith.constant 9.99999974E-6 : f32
    %159 = vector.broadcast %cst_64 : f32 to vector<32x1xf32>
    %160 = arith.addf %158, %159 : vector<32x1xf32>
    %161 = math.rsqrt %160 : vector<32x1xf32>
    %162 = vector.broadcast %161 : vector<32x1xf32> to vector<32x128xf32>
    %163 = arith.mulf %153, %162 : vector<32x128xf32>
    %164 = vector.broadcast %146 : vector<1x128xf32> to vector<32x128xf32>
    %165 = arith.mulf %163, %164 : vector<32x128xf32>
    %166 = vector.broadcast %147 : vector<1x128xf32> to vector<32x128xf32>
    %167 = arith.addf %165, %166 : vector<32x128xf32>
    %168 = vector.shape_cast %167 : vector<32x128xf32> to vector<4x8x128xf32>
    %c0_65 = arith.constant 0 : index
    %c0_66 = arith.constant 0 : index
    %c0_67 = arith.constant 0 : index
    %169 = vector.load %arg17[%c0_65, %c0_66, %c0_67] : memref<4x8x128xf32, #tpu.memory_space<vmem>>, vector<4x8x128xf32>
    tpu.vector_store %arg17[%c0_65, %c0_66, %c0_67], %168 {strides = array<i32>} : memref<4x8x128xf32, #tpu.memory_space<vmem>>, vector<4x8x128xf32>,
    return
  }
  func.func @transform_0(%arg0: i32) -> (i32, i32, i32) {
    %c0_i32 = arith.constant 0 : i32
    %c0_i32_0 = arith.constant 0 : i32
    %c0_i32_1 = arith.constant 0 : i32
    return %arg0, %c0_i32, %c0_i32_0 : i32, i32, i32
  }
  func.func @transform_1(%arg0: i32) -> (i32, i32, i32) {
    %c0_i32 = arith.constant 0 : i32
    %c0_i32_0 = arith.constant 0 : i32
    %c0_i32_1 = arith.constant 0 : i32
    return %arg0, %c0_i32, %c0_i32_0 : i32, i32, i32
  }
  func.func @transform_2(%arg0: i32) -> (i32, i32) {
    %c0_i32 = arith.constant 0 : i32
    %c0_i32_0 = arith.constant 0 : i32
    %c0_i32_1 = arith.constant 0 : i32
    return %c0_i32, %c0_i32_0 : i32, i32
  }
  func.func @transform_3(%arg0: i32) -> (i32, i32) {
    %c0_i32 = arith.constant 0 : i32
    %c0_i32_0 = arith.constant 0 : i32
    %c0_i32_1 = arith.constant 0 : i32
    return %c0_i32, %c0_i32_0 : i32, i32
  }
  func.func @transform_4(%arg0: i32) -> (i32, i32) {
    %c0_i32 = arith.constant 0 : i32
    %c0_i32_0 = arith.constant 0 : i32
    %c0_i32_1 = arith.constant 0 : i32
    return %c0_i32, %c0_i32_0 : i32, i32
  }
  func.func @transform_5(%arg0: i32) -> (i32, i32) {
    %c0_i32 = arith.constant 0 : i32
    %c0_i32_0 = arith.constant 0 : i32
    %c0_i32_1 = arith.constant 0 : i32
    return %c0_i32, %c0_i32_0 : i32, i32
  }
  func.func @transform_6(%arg0: i32) -> (i32, i32) {
    %c0_i32 = arith.constant 0 : i32
    %c0_i32_0 = arith.constant 0 : i32
    %c0_i32_1 = arith.constant 0 : i32
    return %c0_i32, %c0_i32_0 : i32, i32
  }
  func.func @transform_7(%arg0: i32) -> (i32, i32) {
    %c0_i32 = arith.constant 0 : i32
    %c0_i32_0 = arith.constant 0 : i32
    %c0_i32_1 = arith.constant 0 : i32
    return %c0_i32, %c0_i32_0 : i32, i32
  }
  func.func @transform_8(%arg0: i32) -> (i32, i32) {
    %c0_i32 = arith.constant 0 : i32
    %c0_i32_0 = arith.constant 0 : i32
    %c0_i32_1 = arith.constant 0 : i32
    return %c0_i32, %c0_i32_0 : i32, i32
  }
  func.func @transform_9(%arg0: i32) -> (i32, i32) {
    %c0_i32 = arith.constant 0 : i32
    %c0_i32_0 = arith.constant 0 : i32
    %c0_i32_1 = arith.constant 0 : i32
    return %c0_i32, %c0_i32_0 : i32, i32
  }
  func.func @transform_10(%arg0: i32) -> (i32, i32) {
    %c0_i32 = arith.constant 0 : i32
    %c0_i32_0 = arith.constant 0 : i32
    %c0_i32_1 = arith.constant 0 : i32
    return %c0_i32, %c0_i32_0 : i32, i32
  }
  func.func @transform_11(%arg0: i32) -> (i32, i32) {
    %c0_i32 = arith.constant 0 : i32
    %c0_i32_0 = arith.constant 0 : i32
    %c0_i32_1 = arith.constant 0 : i32
    return %c0_i32, %c0_i32_0 : i32, i32
  }
  func.func @transform_12(%arg0: i32) -> (i32, i32) {
    %c0_i32 = arith.constant 0 : i32
    %c0_i32_0 = arith.constant 0 : i32
    %c0_i32_1 = arith.constant 0 : i32
    return %c0_i32, %c0_i32_0 : i32, i32
  }
  func.func @transform_13(%arg0: i32) -> (i32, i32) {
    %c0_i32 = arith.constant 0 : i32
    %c0_i32_0 = arith.constant 0 : i32
    %c0_i32_1 = arith.constant 0 : i32
    return %c0_i32, %c0_i32_0 : i32, i32
  }
  func.func @transform_14(%arg0: i32) -> (i32, i32) {
    %c0_i32 = arith.constant 0 : i32
    %c0_i32_0 = arith.constant 0 : i32
    %c0_i32_1 = arith.constant 0 : i32
    return %c0_i32, %c0_i32_0 : i32, i32
  }
  func.func @transform_15(%arg0: i32) -> (i32, i32) {
    %c0_i32 = arith.constant 0 : i32
    %c0_i32_0 = arith.constant 0 : i32
    %c0_i32_1 = arith.constant 0 : i32
    return %c0_i32, %c0_i32_0 : i32, i32
  }
  func.func @transform_16(%arg0: i32) -> (i32, i32, i32) {
    %c0_i32 = arith.constant 0 : i32
    %c0_i32_0 = arith.constant 0 : i32
    %c0_i32_1 = arith.constant 0 : i32
    return %arg0, %c0_i32, %c0_i32_0 : i32, i32, i32
  }
}

</mosaic_0001>

<llo_original>
// kernel: tpu_custom_call.1
$region0: #{tpu_custom_call.1}
  #allocation0 [shape = 'u32[]', space=smem, size = 0x4, offset = 0x4, fixed_abs, tag = 'smem constant byte address 0x4 - core index']
  #allocation1 [shape = 'u32[144,128]{1,0:T(1,128)}', space=vmem, size = 0x12000, scoped, tag = 'internal scratch']
  %s0 = inlined_call_operand.hbm [shape: f32[8,8,128], index: 0, kind: input, shape index: {}]
  %s1 = inlined_call_operand.hbm [shape: f32[8,1,8], index: 1, kind: input, shape index: {}]
  %s2 = inlined_call_operand.hbm [shape: bf16[128,384], index: 2, kind: input, shape index: {}]
  %s3 = inlined_call_operand.vmem [shape: f32[1,384], index: 3, kind: input, shape index: {}]
  %s4 = inlined_call_operand.hbm [shape: bf16[128,128], index: 4, kind: input, shape index: {}]
  %s5 = inlined_call_operand.vmem [shape: f32[1,128], index: 5, kind: input, shape index: {}]
  %s6 = inlined_call_operand.hbm [shape: bf16[128,256], index: 6, kind: input, shape index: {}]
  %s7 = inlined_call_operand.vmem [shape: f32[1,256], index: 7, kind: input, shape index: {}]
  %s8 = inlined_call_operand.hbm [shape: bf16[256,256], index: 8, kind: input, shape index: {}]
  %s9 = inlined_call_operand.vmem [shape: f32[1,256], index: 9, kind: input, shape index: {}]
  %s10 = inlined_call_operand.hbm [shape: bf16[256,128], index: 10, kind: input, shape index: {}]
  %s11 = inlined_call_operand.vmem [shape: f32[1,128], index: 11, kind: input, shape index: {}]
  %s12 = inlined_call_operand.vmem [shape: f32[1,128], index: 12, kind: input, shape index: {}]
  %s13 = inlined_call_operand.vmem [shape: f32[1,128], index: 13, kind: input, shape index: {}]
  %s14 = inlined_call_operand.vmem [shape: f32[1,128], index: 14, kind: input, shape index: {}]
  %s15 = inlined_call_operand.vmem [shape: f32[1,128], index: 15, kind: input, shape index: {}]
  %s16 = inlined_call_operand.hbm [shape: f32[8,8,128], index: 16, kind: output, shape index: {}]
  %s17 = sld [smem:[#allocation0]]
  $region125: #{tpu_custom_call.1} parent=0
    _
  %s19 = ssub.s32 1, %s17
  %s20 = scalar_select 0, %s19, %s17
  $region1: #{tpu_custom_call.1} parent=0
    #allocation2 [shape = 'u8[32768]{0}', space=vmem, size = 0x8000, scoped, tag = 'input window, operand 0']
    #allocation3 [shape = 's32[2]{0}', space=sflag, size = 0x8, scoped, tag = 'scoped memory for tpu_custom_call.1']
    #allocation4 [shape = 's32[2]{0}', space=sflag, size = 0x8, scoped, tag = 'scoped memory for tpu_custom_call.1']
    #allocation5 [shape = 'u8[4096]{0}', space=vmem, size = 0x1000, scoped, tag = 'input window, operand 1']
    #allocation6 [shape = 's32[2]{0}', space=sflag, size = 0x8, scoped, tag = 'scoped memory for tpu_custom_call.1']
    #allocation7 [shape = 'u8[98304]{0}', space=vmem, size = 0x18000, scoped, tag = 'input window, operand 2, single buffered']
    #allocation8 [shape = 'u8[32768]{0}', space=vmem, size = 0x8000, scoped, tag = 'input window, operand 4, single buffered']
    #allocation9 [shape = 's32[1]{0}', space=sflag, size = 0x4, scoped, tag = 'scoped memory for tpu_custom_call.1']
    #allocation10 [shape = 'u8[65536]{0}', space=vmem, size = 0x10000, scoped, tag = 'input window, operand 6, single buffered']
    #allocation11 [shape = 'u8[131072]{0}', space=vmem, size = 0x20000, scoped, tag = 'input window, operand 8, single buffered']
    #allocation12 [shape = 's32[1]{0}', space=sflag, size = 0x4, scoped, tag = 'scoped memory for tpu_custom_call.1']
    #allocation13 [shape = 'u8[65536]{0}', space=vmem, size = 0x10000, scoped, tag = 'input window, operand 10, single buffered']
    #allocation14 [shape = 'u8[32768]{0}', space=vmem, size = 0x8000, scoped, tag = 'output window, operand 0']
    %21 = vsyncpa [#allocation3], 0
    %s22 = scalar_lea.sflag [#allocation3], 1
    %23 = vsyncpa %s22, 0
    %24 = vsyncpa [#allocation6], 0
    %s25 = scalar_lea.sflag [#allocation6], 1
    %26 = vsyncpa %s25, 0
    %27 = vsyncpa [#allocation9], 0
    %28 = vsyncpa [#allocation12], 0
    %29 = vsyncpa [#allocation4], 0
    %s30 = scalar_lea.sflag [#allocation4], 1
    %31 = vsyncpa %s30, 0
    loop: start=0, step=1, limit=4
    $region2: #{tpu_custom_call.1} parent=1 // loop_pre_header
      _
    $region3: #{tpu_custom_call.1} parent=1 // loop_header
      %s33 = sphi 0, %s37
      %p34 = scmp.ge.s32.totalorder %s33, 4
      %s43 = sphi 0, %s45
      %s46 = sphi 0, %s43
      %s47 = sphi 0, %s46
      %s63 = sphi 0, %s47
      %s69 = sphi 0, %s71
      %s72 = sphi 0, %s69
      %s73 = sphi 0, %s72
      %s89 = sphi 0, %s73
      %s93 = sphi 0, %s93
      %s95 = sphi 0, %s93
      %s96 = sphi 0, %s95
      %s110 = sphi 0, %s96
      %s114 = sphi 0, %s114
      %s116 = sphi 0, %s114
      %s117 = sphi 0, %s116
      %s131 = sphi 0, %s117
      %s135 = sphi 0, %s135
      %s137 = sphi 0, %s135
      %s138 = sphi 0, %s137
      %s152 = sphi 0, %s138
      %s156 = sphi 0, %s156
      %s158 = sphi 0, %s156
      %s159 = sphi 0, %s158
      %s173 = sphi 0, %s159
      %s177 = sphi 0, %s177
      %s179 = sphi 0, %s177
      %s180 = sphi 0, %s179
      %s194 = sphi 0, %s180
      %s198 = sphi 0, %s198
      %s200 = sphi 0, %s198
      %s201 = sphi 0, %s200
      %s215 = sphi 0, %s201
      %s219 = sphi 0, %s219
      %s221 = sphi 0, %s219
      %s222 = sphi 0, %s221
      %s236 = sphi 0, %s222
      %s240 = sphi 0, %s240
      %s242 = sphi 0, %s240
      %s243 = sphi 0, %s242
      %s257 = sphi 0, %s243
      %s261 = sphi 0, %s261
      %s263 = sphi 0, %s261
      %s264 = sphi 0, %s263
      %s278 = sphi 0, %s264
      %s282 = sphi 0, %s282
      %s284 = sphi 0, %s282
      %s285 = sphi 0, %s284
      %s299 = sphi 0, %s285
      %s303 = sphi 0, %s303
      %s305 = sphi 0, %s303
      %s306 = sphi 0, %s305
      %s320 = sphi 0, %s306
      %s324 = sphi 0, %s324
      %s326 = sphi 0, %s324
      %s327 = sphi 0, %s326
      %s341 = sphi 0, %s327
      %s345 = sphi 0, %s345
      %s347 = sphi 0, %s345
      %s348 = sphi 0, %s347
      %s362 = sphi 0, %s348
      %s366 = sphi 0, %s366
      %s368 = sphi 0, %s366
      %s369 = sphi 0, %s368
      %s383 = sphi 0, %s369
      %s389 = sphi 0, %s391
      %s392 = sphi 0, %s389
      %s393 = sphi 0, %s392
      %s409 = sphi 0, %s393
    $region4: #{tpu_custom_call.1} parent=1 // loop_header_branch
      %36 = sbr.rel (%p34) target = $region8
    $region5: #{tpu_custom_call.1} parent=1 // loop_body
      %s38 = ssub.s32 %s33, 1
      %s39 = ssub.s32 %s33, 2
      %s40 = sadd.s32 %s33, 1
      %s41 = ssub.s32 %s33, %s40
      %p42 = scmp.eq.s32.totalorder %s41, 0
      %s44 = sadd.s32 %s43, 1
      %s45 = scalar_select %p42, %s43, %s44
      %p48 = pneg %p42
      %p49 = scmp.eq.s32.totalorder %s33, 1
      %p50 = por %p48, %p49
      %p51 = scmp.ne.s32.totalorder %s43, %s46
      %p52 = scmp.eq.s32.totalorder %s33, 0
      %p53 = por %p51, %p52
      %p54 = scmp.ne.s32.totalorder %s43, %s46
      %p55 = scmp.eq.s32.totalorder %s38, 1
      %p56 = por %p54, %p55
      %p57 = scmp.ne.s32.totalorder %s46, %s47
      %p58 = scmp.eq.s32.totalorder %s38, 0
      %p59 = por %p57, %p58
      %p60 = scmp.ne.s32.totalorder %s46, %s47
      %p61 = scmp.eq.s32.totalorder %s39, 1
      %p62 = por %p60, %p61
      %p64 = scmp.ne.s32.totalorder %s47, %s63
      %p65 = scmp.eq.s32.totalorder %s39, 0
      %p66 = por %p64, %p65
      %s67 = ssub.s32 %s33, %s40
      %p68 = scmp.eq.s32.totalorder %s67, 0
      %s70 = sadd.s32 %s69, 1
      %s71 = scalar_select %p68, %s69, %s70
      %p74 = pneg %p68
      %p75 = scmp.eq.s32.totalorder %s33, 1
      %p76 = por %p74, %p75
      %p77 = scmp.ne.s32.totalorder %s69, %s72
      %p78 = scmp.eq.s32.totalorder %s33, 0
      %p79 = por %p77, %p78
      %p80 = scmp.ne.s32.totalorder %s69, %s72
      %p81 = scmp.eq.s32.totalorder %s38, 1
      %p82 = por %p80, %p81
      %p83 = scmp.ne.s32.totalorder %s72, %s73
      %p84 = scmp.eq.s32.totalorder %s38, 0
      %p85 = por %p83, %p84
      %p86 = scmp.ne.s32.totalorder %s72, %s73
      %p87 = scmp.eq.s32.totalorder %s39, 1
      %p88 = por %p86, %p87
      %p90 = scmp.ne.s32.totalorder %s73, %s89
      %p91 = scmp.eq.s32.totalorder %s39, 0
      %p92 = por %p90, %p91
      %s94 = sadd.s32 %s93, 1
      %p97 = scmp.eq.s32.totalorder %s33, 1
      %p98 = scmp.ne.s32.totalorder %s93, %s95
      %p99 = scmp.eq.s32.totalorder %s33, 0
      %p100 = por %p98, %p99
      %p101 = scmp.ne.s32.totalorder %s93, %s95
      %p102 = scmp.eq.s32.totalorder %s38, 1
      %p103 = por %p101, %p102
      %p104 = scmp.ne.s32.totalorder %s95, %s96
      %p105 = scmp.eq.s32.totalorder %s38, 0
      %p106 = por %p104, %p105
      %p107 = scmp.ne.s32.totalorder %s95, %s96
      %p108 = scmp.eq.s32.totalorder %s39, 1
      %p109 = por %p107, %p108
      %p111 = scmp.ne.s32.totalorder %s96, %s110
      %p112 = scmp.eq.s32.totalorder %s39, 0
      %p113 = por %p111, %p112
      %s115 = sadd.s32 %s114, 1
      %p118 = scmp.eq.s32.totalorder %s33, 1
      %p119 = scmp.ne.s32.totalorder %s114, %s116
      %p120 = scmp.eq.s32.totalorder %s33, 0
      %p121 = por %p119, %p120
      %p122 = scmp.ne.s32.totalorder %s114, %s116
      %p123 = scmp.eq.s32.totalorder %s38, 1
      %p124 = por %p122, %p123
      %p125 = scmp.ne.s32.totalorder %s116, %s117
      %p126 = scmp.eq.s32.totalorder %s38, 0
      %p127 = por %p125, %p126
      %p128 = scmp.ne.s32.totalorder %s116, %s117
      %p129 = scmp.eq.s32.totalorder %s39, 1
      %p130 = por %p128, %p129
      %p132 = scmp.ne.s32.totalorder %s117, %s131
      %p133 = scmp.eq.s32.totalorder %s39, 0
      %p134 = por %p132, %p133
      %s136 = sadd.s32 %s135, 1
      %p139 = scmp.eq.s32.totalorder %s33, 1
      %p140 = scmp.ne.s32.totalorder %s135, %s137
      %p141 = scmp.eq.s32.totalorder %s33, 0
      %p142 = por %p140, %p141
      %p143 = scmp.ne.s32.totalorder %s135, %s137
      %p144 = scmp.eq.s32.totalorder %s38, 1
      %p145 = por %p143, %p144
      %p146 = scmp.ne.s32.totalorder %s137, %s138
      %p147 = scmp.eq.s32.totalorder %s38, 0
      %p148 = por %p146, %p147
      %p149 = scmp.ne.s32.totalorder %s137, %s138
      %p150 = scmp.eq.s32.totalorder %s39, 1
      %p151 = por %p149, %p150
      %p153 = scmp.ne.s32.totalorder %s138, %s152
      %p154 = scmp.eq.s32.totalorder %s39, 0
      %p155 = por %p153, %p154
      %s157 = sadd.s32 %s156, 1
      %p160 = scmp.eq.s32.totalorder %s33, 1
      %p161 = scmp.ne.s32.totalorder %s156, %s158
      %p162 = scmp.eq.s32.totalorder %s33, 0
      %p163 = por %p161, %p162
      %p164 = scmp.ne.s32.totalorder %s156, %s158
      %p165 = scmp.eq.s32.totalorder %s38, 1
      %p166 = por %p164, %p165
      %p167 = scmp.ne.s32.totalorder %s158, %s159
      %p168 = scmp.eq.s32.totalorder %s38, 0
      %p169 = por %p167, %p168
      %p170 = scmp.ne.s32.totalorder %s158, %s159
      %p171 = scmp.eq.s32.totalorder %s39, 1
      %p172 = por %p170, %p171
      %p174 = scmp.ne.s32.totalorder %s159, %s173
      %p175 = scmp.eq.s32.totalorder %s39, 0
      %p176 = por %p174, %p175
      %s178 = sadd.s32 %s177, 1
      %p181 = scmp.eq.s32.totalorder %s33, 1
      %p182 = scmp.ne.s32.totalorder %s177, %s179
      %p183 = scmp.eq.s32.totalorder %s33, 0
      %p184 = por %p182, %p183
      %p185 = scmp.ne.s32.totalorder %s177, %s179
      %p186 = scmp.eq.s32.totalorder %s38, 1
      %p187 = por %p185, %p186
      %p188 = scmp.ne.s32.totalorder %s179, %s180
      %p189 = scmp.eq.s32.totalorder %s38, 0
      %p190 = por %p188, %p189
      %p191 = scmp.ne.s32.totalorder %s179, %s180
      %p192 = scmp.eq.s32.totalorder %s39, 1
      %p193 = por %p191, %p192
      %p195 = scmp.ne.s32.totalorder %s180, %s194
      %p196 = scmp.eq.s32.totalorder %s39, 0
      %p197 = por %p195, %p196
      %s199 = sadd.s32 %s198, 1
      %p202 = scmp.eq.s32.totalorder %s33, 1
      %p203 = scmp.ne.s32.totalorder %s198, %s200
      %p204 = scmp.eq.s32.totalorder %s33, 0
      %p205 = por %p203, %p204
      %p206 = scmp.ne.s32.totalorder %s198, %s200
      %p207 = scmp.eq.s32.totalorder %s38, 1
      %p208 = por %p206, %p207
      %p209 = scmp.ne.s32.totalorder %s200, %s201
      %p210 = scmp.eq.s32.totalorder %s38, 0
      %p211 = por %p209, %p210
      %p212 = scmp.ne.s32.totalorder %s200, %s201
      %p213 = scmp.eq.s32.totalorder %s39, 1
      %p214 = por %p212, %p213
      %p216 = scmp.ne.s32.totalorder %s201, %s215
      %p217 = scmp.eq.s32.totalorder %s39, 0
      %p218 = por %p216, %p217
      %s220 = sadd.s32 %s219, 1
      %p223 = scmp.eq.s32.totalorder %s33, 1
      %p224 = scmp.ne.s32.totalorder %s219, %s221
      %p225 = scmp.eq.s32.totalorder %s33, 0
      %p226 = por %p224, %p225
      %p227 = scmp.ne.s32.totalorder %s219, %s221
      %p228 = scmp.eq.s32.totalorder %s38, 1
      %p229 = por %p227, %p228
      %p230 = scmp.ne.s32.totalorder %s221, %s222
      %p231 = scmp.eq.s32.totalorder %s38, 0
      %p232 = por %p230, %p231
      %p233 = scmp.ne.s32.totalorder %s221, %s222
      %p234 = scmp.eq.s32.totalorder %s39, 1
      %p235 = por %p233, %p234
      %p237 = scmp.ne.s32.totalorder %s222, %s236
      %p238 = scmp.eq.s32.totalorder %s39, 0
      %p239 = por %p237, %p238
      %s241 = sadd.s32 %s240, 1
      %p244 = scmp.eq.s32.totalorder %s33, 1
      %p245 = scmp.ne.s32.totalorder %s240, %s242
      %p246 = scmp.eq.s32.totalorder %s33, 0
      %p247 = por %p245, %p246
      %p248 = scmp.ne.s32.totalorder %s240, %s242
      %p249 = scmp.eq.s32.totalorder %s38, 1
      %p250 = por %p248, %p249
      %p251 = scmp.ne.s32.totalorder %s242, %s243
      %p252 = scmp.eq.s32.totalorder %s38, 0
      %p253 = por %p251, %p252
      %p254 = scmp.ne.s32.totalorder %s242, %s243
      %p255 = scmp.eq.s32.totalorder %s39, 1
      %p256 = por %p254, %p255
      %p258 = scmp.ne.s32.totalorder %s243, %s257
      %p259 = scmp.eq.s32.totalorder %s39, 0
      %p260 = por %p258, %p259
      %s262 = sadd.s32 %s261, 1
      %p265 = scmp.eq.s32.totalorder %s33, 1
      %p266 = scmp.ne.s32.totalorder %s261, %s263
      %p267 = scmp.eq.s32.totalorder %s33, 0
      %p268 = por %p266, %p267
      %p269 = scmp.ne.s32.totalorder %s261, %s263
      %p270 = scmp.eq.s32.totalorder %s38, 1
      %p271 = por %p269, %p270
      %p272 = scmp.ne.s32.totalorder %s263, %s264
      %p273 = scmp.eq.s32.totalorder %s38, 0
      %p274 = por %p272, %p273
      %p275 = scmp.ne.s32.totalorder %s263, %s264
      %p276 = scmp.eq.s32.totalorder %s39, 1
      %p277 = por %p275, %p276
      %p279 = scmp.ne.s32.totalorder %s264, %s278
      %p280 = scmp.eq.s32.totalorder %s39, 0
      %p281 = por %p279, %p280
      %s283 = sadd.s32 %s282, 1
      %p286 = scmp.eq.s32.totalorder %s33, 1
      %p287 = scmp.ne.s32.totalorder %s282, %s284
      %p288 = scmp.eq.s32.totalorder %s33, 0
      %p289 = por %p287, %p288
      %p290 = scmp.ne.s32.totalorder %s282, %s284
      %p291 = scmp.eq.s32.totalorder %s38, 1
      %p292 = por %p290, %p291
      %p293 = scmp.ne.s32.totalorder %s284, %s285
      %p294 = scmp.eq.s32.totalorder %s38, 0
      %p295 = por %p293, %p294
      %p296 = scmp.ne.s32.totalorder %s284, %s285
      %p297 = scmp.eq.s32.totalorder %s39, 1
      %p298 = por %p296, %p297
      %p300 = scmp.ne.s32.totalorder %s285, %s299
      %p301 = scmp.eq.s32.totalorder %s39, 0
      %p302 = por %p300, %p301
      %s304 = sadd.s32 %s303, 1
      %p307 = scmp.eq.s32.totalorder %s33, 1
      %p308 = scmp.ne.s32.totalorder %s303, %s305
      %p309 = scmp.eq.s32.totalorder %s33, 0
      %p310 = por %p308, %p309
      %p311 = scmp.ne.s32.totalorder %s303, %s305
      %p312 = scmp.eq.s32.totalorder %s38, 1
      %p313 = por %p311, %p312
      %p314 = scmp.ne.s32.totalorder %s305, %s306
      %p315 = scmp.eq.s32.totalorder %s38, 0
      %p316 = por %p314, %p315
      %p317 = scmp.ne.s32.totalorder %s305, %s306
      %p318 = scmp.eq.s32.totalorder %s39, 1
      %p319 = por %p317, %p318
      %p321 = scmp.ne.s32.totalorder %s306, %s320
      %p322 = scmp.eq.s32.totalorder %s39, 0
      %p323 = por %p321, %p322
      %s325 = sadd.s32 %s324, 1
      %p328 = scmp.eq.s32.totalorder %s33, 1
      %p329 = scmp.ne.s32.totalorder %s324, %s326
      %p330 = scmp.eq.s32.totalorder %s33, 0
      %p331 = por %p329, %p330
      %p332 = scmp.ne.s32.totalorder %s324, %s326
      %p333 = scmp.eq.s32.totalorder %s38, 1
      %p334 = por %p332, %p333
      %p335 = scmp.ne.s32.totalorder %s326, %s327
      %p336 = scmp.eq.s32.totalorder %s38, 0
      %p337 = por %p335, %p336
      %p338 = scmp.ne.s32.totalorder %s326, %s327
      %p339 = scmp.eq.s32.totalorder %s39, 1
      %p340 = por %p338, %p339
      %p342 = scmp.ne.s32.totalorder %s327, %s341
      %p343 = scmp.eq.s32.totalorder %s39, 0
      %p344 = por %p342, %p343
      %s346 = sadd.s32 %s345, 1
      %p349 = scmp.eq.s32.totalorder %s33, 1
      %p350 = scmp.ne.s32.totalorder %s345, %s347
      %p351 = scmp.eq.s32.totalorder %s33, 0
      %p352 = por %p350, %p351
      %p353 = scmp.ne.s32.totalorder %s345, %s347
      %p354 = scmp.eq.s32.totalorder %s38, 1
      %p355 = por %p353, %p354
      %p356 = scmp.ne.s32.totalorder %s347, %s348
      %p357 = scmp.eq.s32.totalorder %s38, 0
      %p358 = por %p356, %p357
      %p359 = scmp.ne.s32.totalorder %s347, %s348
      %p360 = scmp.eq.s32.totalorder %s39, 1
      %p361 = por %p359, %p360
      %p363 = scmp.ne.s32.totalorder %s348, %s362
      %p364 = scmp.eq.s32.totalorder %s39, 0
      %p365 = por %p363, %p364
      %s367 = sadd.s32 %s366, 1
      %p370 = scmp.eq.s32.totalorder %s33, 1
      %p371 = scmp.ne.s32.totalorder %s366, %s368
      %p372 = scmp.eq.s32.totalorder %s33, 0
      %p373 = por %p371, %p372
      %p374 = scmp.ne.s32.totalorder %s366, %s368
      %p375 = scmp.eq.s32.totalorder %s38, 1
      %p376 = por %p374, %p375
      %p377 = scmp.ne.s32.totalorder %s368, %s369
      %p378 = scmp.eq.s32.totalorder %s38, 0
      %p379 = por %p377, %p378
      %p380 = scmp.ne.s32.totalorder %s368, %s369
      %p381 = scmp.eq.s32.totalorder %s39, 1
      %p382 = por %p380, %p381
      %p384 = scmp.ne.s32.totalorder %s369, %s383
      %p385 = scmp.eq.s32.totalorder %s39, 0
      %p386 = por %p384, %p385
      %s387 = ssub.s32 %s33, %s40
      %p388 = scmp.eq.s32.totalorder %s387, 0
      %s390 = sadd.s32 %s389, 1
      %s391 = scalar_select %p388, %s389, %s390
      %p394 = pneg %p388
      %p395 = scmp.eq.s32.totalorder %s33, 1
      %p396 = por %p394, %p395
      %p397 = scmp.ne.s32.totalorder %s389, %s392
      %p398 = scmp.eq.s32.totalorder %s33, 0
      %p399 = por %p397, %p398
      %p400 = scmp.ne.s32.totalorder %s389, %s392
      %p401 = scmp.eq.s32.totalorder %s38, 1
      %p402 = por %p400, %p401
      %p403 = scmp.ne.s32.totalorder %s392, %s393
      %p404 = scmp.eq.s32.totalorder %s38, 0
      %p405 = por %p403, %p404
      %p406 = scmp.ne.s32.totalorder %s392, %s393
      %p407 = scmp.eq.s32.totalorder %s39, 1
      %p408 = por %p406, %p407
      %p410 = scmp.ne.s32.totalorder %s393, %s409
      %p411 = scmp.eq.s32.totalorder %s39, 0
      %p412 = por %p410, %p411
      %p413 = scmp.le.s32.totalorder 1, %s33
      %p414 = scmp.lt.s32.totalorder %s33, 3
      %p415 = pnand %p413, %p414
      %p416 = pneg %p415
      // Predicated region
      $region9: #{tpu_custom_call.1} parent=5 // pred_check
        _
      $region10: #{tpu_custom_call.1} parent=5 // pred_check_branch
        %418 = sbr.rel (%p415) target = $region12
      $region11: #{tpu_custom_call.1} parent=5 // pred_region
        %s419 = ssub.s32 %s33, 1
        // Predicated region
        $region13: #{tpu_custom_call.1} parent=11 // pred_check
          %p420 = pneg %p106
        $region14: #{tpu_custom_call.1} parent=11 // pred_check_branch
          %422 = sbr.rel (%p420) target = $region16
        $region15: #{tpu_custom_call.1} parent=11 // pred_region
          %s424 = ssub.s32 3072, 3072
          %425 = vsyncadd [#allocation6], %s424
          %s426 = sshll.u32 [#allocation7], 4
          %s427 = int_to_ptr.vmem [resolvable:$true] %s426
          %432 = dma.hbm_to_vmem [thread:$0]  %s2, 3072, %s427, [#allocation6], 192, 192, 12
        $region16: #{tpu_custom_call.1} parent=11 // pred_fallthru
          _
        // Predicated region
        $region17: #{tpu_custom_call.1} parent=11 // pred_check
          %p433 = pneg %p127
        $region18: #{tpu_custom_call.1} parent=11 // pred_check_branch
          %435 = sbr.rel (%p433) target = $region20
        $region19: #{tpu_custom_call.1} parent=11 // pred_region
          _
        $region20: #{tpu_custom_call.1} parent=11 // pred_fallthru
          _
        // Predicated region
        $region21: #{tpu_custom_call.1} parent=11 // pred_check
          %p436 = pneg %p148
        $region22: #{tpu_custom_call.1} parent=11 // pred_check_branch
          %438 = sbr.rel (%p436) target = $region24
        $region23: #{tpu_custom_call.1} parent=11 // pred_region
          %s440 = ssub.s32 1024, 1024
          %441 = vsyncadd [#allocation9], %s440
          %s442 = sshll.u32 [#allocation8], 4
          %s443 = int_to_ptr.vmem [resolvable:$true] %s442
          %448 = dma.hbm_to_vmem [thread:$0]  %s4, 1024, %s443, [#allocation9], 64, 64, 4
        $region24: #{tpu_custom_call.1} parent=11 // pred_fallthru
          _
        // Predicated region
        $region25: #{tpu_custom_call.1} parent=11 // pred_check
          %p449 = pneg %p169
        $region26: #{tpu_custom_call.1} parent=11 // pred_check_branch
          %451 = sbr.rel (%p449) target = $region28
        $region27: #{tpu_custom_call.1} parent=11 // pred_region
          _
        $region28: #{tpu_custom_call.1} parent=11 // pred_fallthru
          _
        // Predicated region
        $region29: #{tpu_custom_call.1} parent=11 // pred_check
          %p452 = pneg %p190
        $region30: #{tpu_custom_call.1} parent=11 // pred_check_branch
          %454 = sbr.rel (%p452) target = $region32
        $region31: #{tpu_custom_call.1} parent=11 // pred_region
          %s456 = ssub.s32 2048, 2048
          %457 = vsyncadd [#allocation9], %s456
          %s458 = sshll.u32 [#allocation10], 4
          %s459 = int_to_ptr.vmem [resolvable:$true] %s458
          %464 = dma.hbm_to_vmem [thread:$0]  %s6, 2048, %s459, [#allocation9], 128, 128, 8
        $region32: #{tpu_custom_call.1} parent=11 // pred_fallthru
          _
        // Predicated region
        $region33: #{tpu_custom_call.1} parent=11 // pred_check
          %p465 = pneg %p211
        $region34: #{tpu_custom_call.1} parent=11 // pred_check_branch
          %467 = sbr.rel (%p465) target = $region36
        $region35: #{tpu_custom_call.1} parent=11 // pred_region
          _
        $region36: #{tpu_custom_call.1} parent=11 // pred_fallthru
          _
        // Predicated region
        $region37: #{tpu_custom_call.1} parent=11 // pred_check
          %p468 = pneg %p232
        $region38: #{tpu_custom_call.1} parent=11 // pred_check_branch
          %470 = sbr.rel (%p468) target = $region40
        $region39: #{tpu_custom_call.1} parent=11 // pred_region
          %s472 = ssub.s32 4096, 4096
          %473 = vsyncadd [#allocation12], %s472
          %s474 = sshll.u32 [#allocation11], 4
          %s475 = int_to_ptr.vmem [resolvable:$true] %s474
          %480 = dma.hbm_to_vmem [thread:$0]  %s8, 4096, %s475, [#allocation12], 128, 128, 8
        $region40: #{tpu_custom_call.1} parent=11 // pred_fallthru
          _
        // Predicated region
        $region41: #{tpu_custom_call.1} parent=11 // pred_check
          %p481 = pneg %p253
        $region42: #{tpu_custom_call.1} parent=11 // pred_check_branch
          %483 = sbr.rel (%p481) target = $region44
        $region43: #{tpu_custom_call.1} parent=11 // pred_region
          _
        $region44: #{tpu_custom_call.1} parent=11 // pred_fallthru
          _
        // Predicated region
        $region45: #{tpu_custom_call.1} parent=11 // pred_check
          %p484 = pneg %p274
        $region46: #{tpu_custom_call.1} parent=11 // pred_check_branch
          %486 = sbr.rel (%p484) target = $region48
        $region47: #{tpu_custom_call.1} parent=11 // pred_region
          %s488 = ssub.s32 2048, 2048
          %489 = vsyncadd [#allocation12], %s488
          %s490 = sshll.u32 [#allocation13], 4
          %s491 = int_to_ptr.vmem [resolvable:$true] %s490
          %496 = dma.hbm_to_vmem [thread:$0]  %s10, 2048, %s491, [#allocation12], 64, 64, 4
        $region48: #{tpu_custom_call.1} parent=11 // pred_fallthru
          _
        // Predicated region
        $region49: #{tpu_custom_call.1} parent=11 // pred_check
          %p497 = pneg %p295
        $region50: #{tpu_custom_call.1} parent=11 // pred_check_branch
          %499 = sbr.rel (%p497) target = $region52
        $region51: #{tpu_custom_call.1} parent=11 // pred_region
          _
        $region52: #{tpu_custom_call.1} parent=11 // pred_fallthru
          _
        // Predicated region
        $region53: #{tpu_custom_call.1} parent=11 // pred_check
          %p500 = pneg %p316
        $region54: #{tpu_custom_call.1} parent=11 // pred_check_branch
          %502 = sbr.rel (%p500) target = $region56
        $region55: #{tpu_custom_call.1} parent=11 // pred_region
          _
        $region56: #{tpu_custom_call.1} parent=11 // pred_fallthru
          _
        // Predicated region
        $region57: #{tpu_custom_call.1} parent=11 // pred_check
          %p503 = pneg %p337
        $region58: #{tpu_custom_call.1} parent=11 // pred_check_branch
          %505 = sbr.rel (%p503) target = $region60
        $region59: #{tpu_custom_call.1} parent=11 // pred_region
          _
        $region60: #{tpu_custom_call.1} parent=11 // pred_fallthru
          _
        // Predicated region
        $region61: #{tpu_custom_call.1} parent=11 // pred_check
          %p506 = pneg %p358
        $region62: #{tpu_custom_call.1} parent=11 // pred_check_branch
          %508 = sbr.rel (%p506) target = $region64
        $region63: #{tpu_custom_call.1} parent=11 // pred_region
          _
        $region64: #{tpu_custom_call.1} parent=11 // pred_fallthru
          _
        // Predicated region
        $region65: #{tpu_custom_call.1} parent=11 // pred_check
          %p509 = pneg %p379
        $region66: #{tpu_custom_call.1} parent=11 // pred_check_branch
          %511 = sbr.rel (%p509) target = $region68
        $region67: #{tpu_custom_call.1} parent=11 // pred_region
          _
        $region68: #{tpu_custom_call.1} parent=11 // pred_fallthru
          _
      $region12: #{tpu_custom_call.1} parent=5 // pred_fallthru
        _
      %p512 = scmp.lt.s32.totalorder %s33, 2
      // Predicated region
      $region69: #{tpu_custom_call.1} parent=5 // pred_check
        %p513 = pneg %p512
      $region70: #{tpu_custom_call.1} parent=5 // pred_check_branch
        %515 = sbr.rel (%p513) target = $region72
      $region71: #{tpu_custom_call.1} parent=5 // pred_region
        // Predicated region
        $region73: #{tpu_custom_call.1} parent=71 // pred_check
          %p516 = pneg %p53
        $region74: #{tpu_custom_call.1} parent=71 // pred_check_branch
          %518 = sbr.rel (%p516) target = $region76
        $region75: #{tpu_custom_call.1} parent=71 // pred_region
          %s519 = sand.u32 %s43, 1
          %s520 = scalar_lea.sflag [#allocation3], %s519
          %s521 = sand.u32 %s43, 1
          %s522 = smul.addr %s521, 32
          %s523 = scalar_lea.vmem [#allocation2], %s522
          %s524 = smul.u32 4, %s33
          %s526 = ssub.s32 512, 512
          %527 = vsyncadd %s520, %s526
          %s528 = smul.addr %s524, 128
          %s529 = scalar_lea.hbm %s0, %s528
          %s530 = sshll.u32 %s523, 4
          %s531 = int_to_ptr.vmem [resolvable:$true] %s530
          %536 = dma.hbm_to_vmem [thread:$0]  %s529, 512, %s531, %s520, 128, 128, 8
        $region76: #{tpu_custom_call.1} parent=71 // pred_fallthru
          _
        // Predicated region
        $region77: #{tpu_custom_call.1} parent=71 // pred_check
          %p537 = pneg %p79
        $region78: #{tpu_custom_call.1} parent=71 // pred_check_branch
          %539 = sbr.rel (%p537) target = $region80
        $region79: #{tpu_custom_call.1} parent=71 // pred_region
          %s540 = sand.u32 %s33, 1
          %s541 = scalar_lea.sflag [#allocation6], %s540
          %s542 = sand.u32 %s69, 1
          %s543 = smul.addr %s542, 4
          %s544 = scalar_lea.vmem [#allocation5], %s543
          %s545 = smul.u32 4, %s33
          %s547 = ssub.s32 64, 64
          %548 = vsyncadd %s541, %s547
          %s549 = smul.addr %s545, 16
          %s550 = scalar_lea.hbm %s1, %s549
          %s551 = sshll.u32 %s544, 4
          %s552 = int_to_ptr.vmem [resolvable:$true] %s551
          %557 = dma.hbm_to_vmem [thread:$0]  %s550, 64, %s552, %s541, 16, 16, 1
        $region80: #{tpu_custom_call.1} parent=71 // pred_fallthru
          _
      $region72: #{tpu_custom_call.1} parent=5 // pred_fallthru
        _
      %p558 = scmp.le.s32.totalorder 1, %s33
      %p559 = scmp.lt.s32.totalorder %s33, 3
      %p560 = pnand %p558, %p559
      %p561 = pneg %p560
      // Predicated region
      $region81: #{tpu_custom_call.1} parent=5 // pred_check
        _
      $region82: #{tpu_custom_call.1} parent=5 // pred_check_branch
        %563 = sbr.rel (%p560) target = $region84
      $region83: #{tpu_custom_call.1} parent=5 // pred_region
        %s564 = ssub.s32 %s33, 1
        %s565 = sand.u32 %s46, 1
        %s566 = scalar_lea.sflag [#allocation3], %s565
        %s567 = sand.u32 %s46, 1
        %s568 = smul.addr %s567, 32
        %s569 = scalar_lea.vmem [#allocation2], %s568
        // Predicated region
        $region85: #{tpu_custom_call.1} parent=83 // pred_check
          %p570 = pneg %p59
        $region86: #{tpu_custom_call.1} parent=83 // pred_check_branch
          %572 = sbr.rel (%p570) target = $region88
        $region87: #{tpu_custom_call.1} parent=83 // pred_region
          %573 = dma.done %s566, 512
        $region88: #{tpu_custom_call.1} parent=83 // pred_fallthru
          _
        %s574 = sand.u32 %s38, 1
        %s575 = scalar_lea.sflag [#allocation6], %s574
        %s576 = sand.u32 %s72, 1
        %s577 = smul.addr %s576, 4
        %s578 = scalar_lea.vmem [#allocation5], %s577
        // Predicated region
        $region89: #{tpu_custom_call.1} parent=83 // pred_check
          %p579 = pneg %p85
        $region90: #{tpu_custom_call.1} parent=83 // pred_check_branch
          %581 = sbr.rel (%p579) target = $region92
        $region91: #{tpu_custom_call.1} parent=83 // pred_region
          %582 = dma.done %s575, 64
        $region92: #{tpu_custom_call.1} parent=83 // pred_fallthru
          _
        // Predicated region
        $region93: #{tpu_custom_call.1} parent=83 // pred_check
          %p583 = pneg %p106
        $region94: #{tpu_custom_call.1} parent=83 // pred_check_branch
          %585 = sbr.rel (%p583) target = $region96
        $region95: #{tpu_custom_call.1} parent=83 // pred_region
          %586 = dma.done [#allocation6], 3072
        $region96: #{tpu_custom_call.1} parent=83 // pred_fallthru
          _
        // Predicated region
        $region97: #{tpu_custom_call.1} parent=83 // pred_check
          %p587 = pneg %p148
        $region98: #{tpu_custom_call.1} parent=83 // pred_check_branch
          %589 = sbr.rel (%p587) target = $region100
        $region99: #{tpu_custom_call.1} parent=83 // pred_region
          %590 = dma.done [#allocation9], 1024
        $region100: #{tpu_custom_call.1} parent=83 // pred_fallthru
          _
        // Predicated region
        $region101: #{tpu_custom_call.1} parent=83 // pred_check
          %p591 = pneg %p190
        $region102: #{tpu_custom_call.1} parent=83 // pred_check_branch
          %593 = sbr.rel (%p591) target = $region104
        $region103: #{tpu_custom_call.1} parent=83 // pred_region
          %594 = dma.done [#allocation9], 2048
        $region104: #{tpu_custom_call.1} parent=83 // pred_fallthru
          _
        // Predicated region
        $region105: #{tpu_custom_call.1} parent=83 // pred_check
          %p595 = pneg %p232
        $region106: #{tpu_custom_call.1} parent=83 // pred_check_branch
          %597 = sbr.rel (%p595) target = $region108
        $region107: #{tpu_custom_call.1} parent=83 // pred_region
          %598 = dma.done [#allocation12], 4096
        $region108: #{tpu_custom_call.1} parent=83 // pred_fallthru
          _
        // Predicated region
        $region109: #{tpu_custom_call.1} parent=83 // pred_check
          %p599 = pneg %p274
        $region110: #{tpu_custom_call.1} parent=83 // pred_check_branch
          %601 = sbr.rel (%p599) target = $region112
        $region111: #{tpu_custom_call.1} parent=83 // pred_region
          %602 = dma.done [#allocation12], 2048
        $region112: #{tpu_custom_call.1} parent=83 // pred_fallthru
          _
        %s603 = sand.u32 %s46, 1
        %s604 = scalar_lea.sflag [#allocation3], %s603
        %s605 = sand.u32 %s46, 1
        %s606 = smul.addr %s605, 32
        %s607 = scalar_lea.vmem [#allocation2], %s606
        %p608 = pneg %p59
        %p609 = pneg %p56
        %s610 = sand.u32 %s38, 1
        %s611 = scalar_lea.sflag [#allocation6], %s610
        %s612 = sand.u32 %s72, 1
        %s613 = smul.addr %s612, 4
        %s614 = scalar_lea.vmem [#allocation5], %s613
        %p615 = pneg %p85
        %p616 = pneg %p82
        %p617 = pneg %p106
        %p618 = pneg %p103
        %p619 = pneg %p127
        %p620 = pneg %p124
        %p621 = pneg %p148
        %p622 = pneg %p145
        %p623 = pneg %p169
        %p624 = pneg %p166
        %p625 = pneg %p190
        %p626 = pneg %p187
        %p627 = pneg %p211
        %p628 = pneg %p208
        %p629 = pneg %p232
        %p630 = pneg %p229
        %p631 = pneg %p253
        %p632 = pneg %p250
        %p633 = pneg %p274
        %p634 = pneg %p271
        %p635 = pneg %p295
        %p636 = pneg %p292
        %p637 = pneg %p316
        %p638 = pneg %p313
        %p639 = pneg %p337
        %p640 = pneg %p334
        %p641 = pneg %p358
        %p642 = pneg %p355
        %p643 = pneg %p379
        %p644 = pneg %p376
        %p645 = pneg %p405
        %p646 = pneg %p402
        %s647 = sand.u32 %s392, 1
        %s648 = scalar_lea.sflag [#allocation4], %s647
        %s649 = sand.u32 %s392, 1
        %s650 = smul.addr %s649, 32
        %s651 = scalar_lea.vmem [#allocation14], %s650
        %s652 = smul.u32 4, %s38
        %s653 = smul.u32 4, %s38
        %s654 = smul.u32 4, %s38
        %v655 = vld [vmem:[%s569] sm:$0xff]
        %v656 = vld [vmem:[%s569 + $0x8] sm:$0xff]
        %v657 = vld [vmem:[%s569 + $0x10] sm:$0xff]
        %v658 = vld [vmem:[%s569 + $0x18] sm:$0xff]
        %v659 = vld [vmem:[%s578] sm:$0x1]
        %v660 = vld [vmem:[%s578 + $0x1] sm:$0x1]
        %v661 = vld [vmem:[%s578 + $0x2] sm:$0x1]
        %v662 = vld [vmem:[%s578 + $0x3] sm:$0x1]
        %v663 = vld [vmem:[#allocation7] sm:$0xff]
        %v664 = vld [vmem:[#allocation7 + $0x8] sm:$0xf]
        %v665 = vld [vmem:[#allocation7 + $0xc] sm:$0xff]
        %v666 = vld [vmem:[#allocation7 + $0x14] sm:$0xf]
        %v667 = vld [vmem:[#allocation7 + $0x18] sm:$0xff]
        %v668 = vld [vmem:[#allocation7 + $0x20] sm:$0xf]
        %v669 = vld [vmem:[#allocation7 + $0x24] sm:$0xff]
        %v670 = vld [vmem:[#allocation7 + $0x2c] sm:$0xf]
        %v671 = vld [vmem:[#allocation7 + $0x30] sm:$0xff]
        %v672 = vld [vmem:[#allocation7 + $0x38] sm:$0xf]
        %v673 = vld [vmem:[#allocation7 + $0x3c] sm:$0xff]
        %v674 = vld [vmem:[#allocation7 + $0x44] sm:$0xf]
        %v675 = vld [vmem:[#allocation7 + $0x48] sm:$0xff]
        %v676 = vld [vmem:[#allocation7 + $0x50] sm:$0xf]
        %v677 = vld [vmem:[#allocation7 + $0x54] sm:$0xff]
        %v678 = vld [vmem:[#allocation7 + $0x5c] sm:$0xf]
        %v679 = vld [vmem:[#allocation7 + $0x60] sm:$0xff]
        %v680 = vld [vmem:[#allocation7 + $0x68] sm:$0xf]
        %v681 = vld [vmem:[#allocation7 + $0x6c] sm:$0xff]
        %v682 = vld [vmem:[#allocation7 + $0x74] sm:$0xf]
        %v683 = vld [vmem:[#allocation7 + $0x78] sm:$0xff]
        %v684 = vld [vmem:[#allocation7 + $0x80] sm:$0xf]
        %v685 = vld [vmem:[#allocation7 + $0x84] sm:$0xff]
        %v686 = vld [vmem:[#allocation7 + $0x8c] sm:$0xf]
        %v687 = vld [vmem:[#allocation7 + $0x90] sm:$0xff]
        %v688 = vld [vmem:[#allocation7 + $0x98] sm:$0xf]
        %v689 = vld [vmem:[#allocation7 + $0x9c] sm:$0xff]
        %v690 = vld [vmem:[#allocation7 + $0xa4] sm:$0xf]
        %v691 = vld [vmem:[#allocation7 + $0xa8] sm:$0xff]
        %v692 = vld [vmem:[#allocation7 + $0xb0] sm:$0xf]
        %v693 = vld [vmem:[#allocation7 + $0xb4] sm:$0xff]
        %v694 = vld [vmem:[#allocation7 + $0xbc] sm:$0xf]
        %v695 = vunpack.c.l.bf16 %v663
        %v696 = vunpack.c.h.bf16 %v663
        %v697 = vunpack.c.l.bf16 %v664
        %v698 = vunpack.c.l.bf16 %v665
        %v699 = vunpack.c.h.bf16 %v665
        %v700 = vunpack.c.l.bf16 %v666
        %v701 = vunpack.c.l.bf16 %v667
        %v702 = vunpack.c.h.bf16 %v667
        %v703 = vunpack.c.l.bf16 %v668
        %v704 = vunpack.c.l.bf16 %v669
        %v705 = vunpack.c.h.bf16 %v669
        %v706 = vunpack.c.l.bf16 %v670
        %v707 = vunpack.c.l.bf16 %v671
        %v708 = vunpack.c.h.bf16 %v671
        %v709 = vunpack.c.l.bf16 %v672
        %v710 = vunpack.c.l.bf16 %v673
        %v711 = vunpack.c.h.bf16 %v673
        %v712 = vunpack.c.l.bf16 %v674
        %v713 = vunpack.c.l.bf16 %v675
        %v714 = vunpack.c.h.bf16 %v675
        %v715 = vunpack.c.l.bf16 %v676
        %v716 = vunpack.c.l.bf16 %v677
        %v717 = vunpack.c.h.bf16 %v677
        %v718 = vunpack.c.l.bf16 %v678
        %v719 = vunpack.c.l.bf16 %v679
        %v720 = vunpack.c.h.bf16 %v679
        %v721 = vunpack.c.l.bf16 %v680
        %v722 = vunpack.c.l.bf16 %v681
        %v723 = vunpack.c.h.bf16 %v681
        %v724 = vunpack.c.l.bf16 %v682
        %v725 = vunpack.c.l.bf16 %v683
        %v726 = vunpack.c.h.bf16 %v683
        %v727 = vunpack.c.l.bf16 %v684
        %v728 = vunpack.c.l.bf16 %v685
        %v729 = vunpack.c.h.bf16 %v685
        %v730 = vunpack.c.l.bf16 %v686
        %v731 = vunpack.c.l.bf16 %v687
        %v732 = vunpack.c.h.bf16 %v687
        %v733 = vunpack.c.l.bf16 %v688
        %v734 = vunpack.c.l.bf16 %v689
        %v735 = vunpack.c.h.bf16 %v689
        %v736 = vunpack.c.l.bf16 %v690
        %v737 = vunpack.c.l.bf16 %v691
        %v738 = vunpack.c.h.bf16 %v691
        %v739 = vunpack.c.l.bf16 %v692
        %v740 = vunpack.c.l.bf16 %v693
        %v741 = vunpack.c.h.bf16 %v693
        %v742 = vunpack.c.l.bf16 %v694
        %v743 = vld [vmem:[%s3] sm:$0x7]
        %v745 = vlaneseq
        %v746 = vshrl.u32 %v745, 7
        %v747 = vsub.s32 0, %v746
        %v748 = vrot.slane %v743, %v747
        %v749 = vlaneseq
        %v750 = vshrl.u32 %v749, 7
        %v751 = vsub.s32 1, %v750
        %v752 = vrot.slane %v743, %v751
        %v753 = vlaneseq
        %v754 = vshrl.u32 %v753, 7
        %v755 = vsub.s32 2, %v754
        %v756 = vrot.slane %v743, %v755
        %760 = vmatprep.subr.mxu0 %v696
        %761 = vmatpush1.msra.mxu0 %v695
        %762 = vmatprep.subr.mxu0 %v699
        %763 = vmatpush1.msra.mxu0 %v698
        %764 = vmatprep.subr.mxu0 %v702
        %765 = vmatpush1.msra.mxu0 %v701
        %766 = vmatprep.subr.mxu0 %v705
        %767 = vmatpush1.msra.mxu0 %v704
        %768 = vmatprep.subr.mxu0 %v708
        %769 = vmatpush1.msra.mxu0 %v707
        %770 = vmatprep.subr.mxu0 %v711
        %771 = vmatpush1.msra.mxu0 %v710
        %772 = vmatprep.subr.mxu0 %v714
        %773 = vmatpush1.msra.mxu0 %v713
        %774 = vmatprep.subr.mxu0 %v717
        %775 = vmatpush1.msra.mxu0 %v716
        %776 = vmatprep.subr.mxu0 %v720
        %777 = vmatpush1.msra.mxu0 %v719
        %778 = vmatprep.subr.mxu0 %v723
        %779 = vmatpush1.msra.mxu0 %v722
        %780 = vmatprep.subr.mxu0 %v726
        %781 = vmatpush1.msra.mxu0 %v725
        %782 = vmatprep.subr.mxu0 %v729
        %783 = vmatpush1.msra.mxu0 %v728
        %784 = vmatprep.subr.mxu0 %v732
        %785 = vmatpush1.msra.mxu0 %v731
        %786 = vmatprep.subr.mxu0 %v735
        %787 = vmatpush1.msra.mxu0 %v734
        %788 = vmatprep.subr.mxu0 %v738
        %789 = vmatpush1.msra.mxu0 %v737
        %790 = vmatprep.subr.mxu0 %v741
        %791 = vmatpush1.msra.mxu0 %v740
        %792 = vmatprep.subr.mxu0 0.0
        %793 = vmatpush1.msra.mxu0 0.0
        %794 = vmatprep.subr.mxu0 0.0
        %795 = vmatpush1.msra.mxu0 0.0
        %796 = vmatprep.subr.mxu0 0.0
        %797 = vmatpush1.msra.mxu0 0.0
        %798 = vmatprep.subr.mxu0 0.0
        %799 = vmatpush1.msra.mxu0 0.0
        %800 = vmatprep.subr.mxu0 0.0
        %801 = vmatpush1.msra.mxu0 0.0
        %802 = vmatprep.subr.mxu0 0.0
        %803 = vmatpush1.msra.mxu0 0.0
        %804 = vmatprep.subr.mxu0 0.0
        %805 = vmatpush1.msra.mxu0 0.0
        %806 = vmatprep.subr.mxu0 0.0
        %807 = vmatpush1.msra.mxu0 0.0
        %808 = vmatprep.subr.mxu0 0.0
        %809 = vmatpush1.msra.mxu0 0.0
        %810 = vmatprep.subr.mxu0 0.0
        %811 = vmatpush1.msra.mxu0 0.0
        %812 = vmatprep.subr.mxu0 0.0
        %813 = vmatpush1.msra.mxu0 0.0
        %814 = vmatprep.subr.mxu0 0.0
        %815 = vmatpush1.msra.mxu0 0.0
        %816 = vmatprep.subr.mxu0 0.0
        %817 = vmatpush1.msra.mxu0 0.0
        %818 = vmatprep.subr.mxu0 0.0
        %819 = vmatpush1.msra.mxu0 0.0
        %820 = vmatprep.subr.mxu0 0.0
        %821 = vmatpush1.msra.mxu0 0.0
        %822 = vmatprep.subr.mxu0 0.0
        %823 = vmatpush1.msra.mxu0 0.0
        %824 = vmatprep.mubr.f32.mxu0 0.0
        %825 = vmatmul.mubr.f32.gmra.mrb[0].mxu0 %v655
        %v826 = vpop.f32.mrb[0].mxu0
        %v827 = vadd.f32 %v748, %v826
        %v828 = vpop.f32.mrb[0].mxu0
        %v829 = vadd.f32 %v752, %v828
        %830 = vmatprep.mubr.f32.mxu0 0.0
        %831 = vmatmul.mubr.f32.gmra.mrb[0].mxu0 %v656
        %v832 = vpop.f32.mrb[0].mxu0
        %v833 = vadd.f32 %v748, %v832
        %v834 = vpop.f32.mrb[0].mxu0
        %v835 = vadd.f32 %v752, %v834
        %836 = vmatprep.mubr.f32.mxu0 0.0
        %837 = vmatmul.mubr.f32.gmra.mrb[0].mxu0 %v657
        %v838 = vpop.f32.mrb[0].mxu0
        %v839 = vadd.f32 %v748, %v838
        %v840 = vpop.f32.mrb[0].mxu0
        %v841 = vadd.f32 %v752, %v840
        %842 = vmatprep.mubr.f32.mxu0 0.0
        %843 = vmatmul.mubr.f32.gmra.mrb[0].mxu0 %v658
        %v844 = vpop.f32.mrb[0].mxu0
        %v845 = vadd.f32 %v748, %v844
        %v846 = vpop.f32.mrb[0].mxu0
        %v847 = vadd.f32 %v752, %v846
        %848 = vdwg.mxu0
        %849 = vmatprep.subr.mxu0 0.0
        %850 = vmatpush1.msra.mxu0 %v697
        %851 = vmatprep.subr.mxu0 0.0
        %852 = vmatpush1.msra.mxu0 %v700
        %853 = vmatprep.subr.mxu0 0.0
        %854 = vmatpush1.msra.mxu0 %v703
        %855 = vmatprep.subr.mxu0 0.0
        %856 = vmatpush1.msra.mxu0 %v706
        %857 = vmatprep.subr.mxu0 0.0
        %858 = vmatpush1.msra.mxu0 %v709
        %859 = vmatprep.subr.mxu0 0.0
        %860 = vmatpush1.msra.mxu0 %v712
        %861 = vmatprep.subr.mxu0 0.0
        %862 = vmatpush1.msra.mxu0 %v715
        %863 = vmatprep.subr.mxu0 0.0
        %864 = vmatpush1.msra.mxu0 %v718
        %865 = vmatprep.subr.mxu0 0.0
        %866 = vmatpush1.msra.mxu0 %v721
        %867 = vmatprep.subr.mxu0 0.0
        %868 = vmatpush1.msra.mxu0 %v724
        %869 = vmatprep.subr.mxu0 0.0
        %870 = vmatpush1.msra.mxu0 %v727
        %871 = vmatprep.subr.mxu0 0.0
        %872 = vmatpush1.msra.mxu0 %v730
        %873 = vmatprep.subr.mxu0 0.0
        %874 = vmatpush1.msra.mxu0 %v733
        %875 = vmatprep.subr.mxu0 0.0
        %876 = vmatpush1.msra.mxu0 %v736
        %877 = vmatprep.subr.mxu0 0.0
        %878 = vmatpush1.msra.mxu0 %v739
        %879 = vmatprep.subr.mxu0 0.0
        %880 = vmatpush1.msra.mxu0 %v742
        %881 = vmatprep.subr.mxu0 0.0
        %882 = vmatpush1.msra.mxu0 0.0
        %883 = vmatprep.subr.mxu0 0.0
        %884 = vmatpush1.msra.mxu0 0.0
        %885 = vmatprep.subr.mxu0 0.0
        %886 = vmatpush1.msra.mxu0 0.0
        %887 = vmatprep.subr.mxu0 0.0
        %888 = vmatpush1.msra.mxu0 0.0
        %889 = vmatprep.subr.mxu0 0.0
        %890 = vmatpush1.msra.mxu0 0.0
        %891 = vmatprep.subr.mxu0 0.0
        %892 = vmatpush1.msra.mxu0 0.0
        %893 = vmatprep.subr.mxu0 0.0
        %894 = vmatpush1.msra.mxu0 0.0
        %895 = vmatprep.subr.mxu0 0.0
        %896 = vmatpush1.msra.mxu0 0.0
        %897 = vmatprep.subr.mxu0 0.0
        %898 = vmatpush1.msra.mxu0 0.0
        %899 = vmatprep.subr.mxu0 0.0
        %900 = vmatpush1.msra.mxu0 0.0
        %901 = vmatprep.subr.mxu0 0.0
        %902 = vmatpush1.msra.mxu0 0.0
        %903 = vmatprep.subr.mxu0 0.0
        %904 = vmatpush1.msra.mxu0 0.0
        %905 = vmatprep.subr.mxu0 0.0
        %906 = vmatpush1.msra.mxu0 0.0
        %907 = vmatprep.subr.mxu0 0.0
        %908 = vmatpush1.msra.mxu0 0.0
        %909 = vmatprep.subr.mxu0 0.0
        %910 = vmatpush1.msra.mxu0 0.0
        %911 = vmatprep.subr.mxu0 0.0
        %912 = vmatpush1.msra.mxu0 0.0
        %913 = vmatprep.mubr.f32.mxu0 0.0
        %914 = vmatmul.mubr.f32.gmra.mrb[0].mxu0 %v655
        %v915 = vpop.f32.mrb[0].mxu0
        %v916 = vadd.f32 %v756, %v915
        %v917 = vpop.f32.mrb[0].mxu0
        %918 = vmatprep.mubr.f32.mxu0 0.0
        %919 = vmatmul.mubr.f32.gmra.mrb[0].mxu0 %v656
        %v920 = vpop.f32.mrb[0].mxu0
        %v921 = vadd.f32 %v756, %v920
        %v922 = vpop.f32.mrb[0].mxu0
        %923 = vmatprep.mubr.f32.mxu0 0.0
        %924 = vmatmul.mubr.f32.gmra.mrb[0].mxu0 %v657
        %v925 = vpop.f32.mrb[0].mxu0
        %v926 = vadd.f32 %v756, %v925
        %v927 = vpop.f32.mrb[0].mxu0
        %928 = vmatprep.mubr.f32.mxu0 0.0
        %929 = vmatmul.mubr.f32.gmra.mrb[0].mxu0 %v658
        %v930 = vpop.f32.mrb[0].mxu0
        %v931 = vadd.f32 %v756, %v930
        %v932 = vpop.f32.mrb[0].mxu0
        %933 = vdwg.mxu0
        %v938 = vlaneseq
        %v939 = vshrl.u32 %v938, 7
        %v940 = vsub.s32 0, %v939
        %v941 = vrot.slane %v659, %v940
        %v942 = vlaneseq
        %v943 = vshrl.u32 %v942, 7
        %v944 = vsub.s32 0, %v943
        %v945 = vrot.slane %v660, %v944
        %v946 = vlaneseq
        %v947 = vshrl.u32 %v946, 7
        %v948 = vsub.s32 0, %v947
        %v949 = vrot.slane %v661, %v948
        %v950 = vlaneseq
        %v951 = vshrl.u32 %v950, 7
        %v952 = vsub.s32 0, %v951
        %v953 = vrot.slane %v662, %v952
        %vm958 = vcmask 261120
        %v960 = vsel %vm958, %v827, 0
        %v963 = vsel %vm958, %v829, 0
        %965 = vmatprep.subr.mxu0 0.0
        %966 = vmatpush1.xpose.msra.mxu0 %v963
        %967 = vmatprep.subr.mxu0 0.0
        %968 = vmatpush1.xpose.msra.mxu0 0.0
        %969 = vmatprep.subr.mxu0 0.0
        %970 = vmatpush1.xpose.msra.mxu0 0.0
        %971 = vmatprep.subr.mxu0 0.0
        %972 = vmatpush1.xpose.msra.mxu0 0.0
        %973 = vmatprep.subr.mxu0 0.0
        %974 = vmatpush1.xpose.msra.mxu0 0.0
        %975 = vmatprep.subr.mxu0 0.0
        %976 = vmatpush1.xpose.msra.mxu0 0.0
        %977 = vmatprep.subr.mxu0 0.0
        %978 = vmatpush1.xpose.msra.mxu0 0.0
        %979 = vmatprep.subr.mxu0 0.0
        %980 = vmatpush1.xpose.msra.mxu0 0.0
        %981 = vmatprep.subr.mxu0 0.0
        %982 = vmatpush1.xpose.msra.mxu0 0.0
        %983 = vmatprep.subr.mxu0 0.0
        %984 = vmatpush1.xpose.msra.mxu0 0.0
        %985 = vmatprep.subr.mxu0 0.0
        %986 = vmatpush1.xpose.msra.mxu0 0.0
        %987 = vmatprep.subr.mxu0 0.0
        %988 = vmatpush1.xpose.msra.mxu0 0.0
        %989 = vmatprep.subr.mxu0 0.0
        %990 = vmatpush1.xpose.msra.mxu0 0.0
        %991 = vmatprep.subr.mxu0 0.0
        %992 = vmatpush1.xpose.msra.mxu0 0.0
        %993 = vmatprep.subr.mxu0 0.0
        %994 = vmatpush1.xpose.msra.mxu0 0.0
        %995 = vmatprep.subr.mxu0 0.0
        %996 = vmatpush1.xpose.msra.mxu0 0.0
        %997 = vmatprep.subr.mxu0 0.0
        %998 = vmatpush1.xpose.msra.mxu0 0.0
        %999 = vmatprep.subr.mxu0 0.0
        %1000 = vmatpush1.xpose.msra.mxu0 0.0
        %1001 = vmatprep.subr.mxu0 0.0
        %1002 = vmatpush1.xpose.msra.mxu0 0.0
        %1003 = vmatprep.subr.mxu0 0.0
        %1004 = vmatpush1.xpose.msra.mxu0 0.0
        %1005 = vmatprep.subr.mxu0 0.0
        %1006 = vmatpush1.xpose.msra.mxu0 0.0
        %1007 = vmatprep.subr.mxu0 0.0
        %1008 = vmatpush1.xpose.msra.mxu0 0.0
        %1009 = vmatprep.subr.mxu0 0.0
        %1010 = vmatpush1.xpose.msra.mxu0 0.0
        %1011 = vmatprep.subr.mxu0 0.0
        %1012 = vmatpush1.xpose.msra.mxu0 0.0
        %1013 = vmatprep.subr.mxu0 0.0
        %1014 = vmatpush1.xpose.msra.mxu0 0.0
        %1015 = vmatprep.subr.mxu0 0.0
        %1016 = vmatpush1.xpose.msra.mxu0 0.0
        %1017 = vmatprep.subr.mxu0 0.0
        %1018 = vmatpush1.xpose.msra.mxu0 0.0
        %1019 = vmatprep.subr.mxu0 0.0
        %1020 = vmatpush1.xpose.msra.mxu0 0.0
        %1021 = vmatprep.subr.mxu0 0.0
        %1022 = vmatpush1.xpose.msra.mxu0 0.0
        %1023 = vmatprep.subr.mxu0 0.0
        %1024 = vmatpush1.xpose.msra.mxu0 0.0
        %1025 = vmatprep.subr.mxu0 0.0
        %1026 = vmatpush1.xpose.msra.mxu0 0.0
        %1027 = vmatprep.subr.mxu0 0.0
        %1028 = vmatpush1.xpose.msra.mxu0 0.0
        %1029 = vmatprep.mubr.f32.mxu0 0.0
        %1030 = vmatmul.mubr.f32.gmra.mrb[0].mxu0 %v960
        %v1031 = vpop.f32.mrb[0].mxu0
        %v1032 = vadd.f32 %v941, %v1031
        %v1033 = vpop.f32.mrb[0].mxu0
        %1034 = vdwg.mxu0
        %v1036 = vsel %vm958, %v833, 0
        %v1039 = vsel %vm958, %v835, 0
        %1041 = vmatprep.subr.mxu0 0.0
        %1042 = vmatpush1.xpose.msra.mxu0 %v1039
        %1043 = vmatprep.subr.mxu0 0.0
        %1044 = vmatpush1.xpose.msra.mxu0 0.0
        %1045 = vmatprep.subr.mxu0 0.0
        %1046 = vmatpush1.xpose.msra.mxu0 0.0
        %1047 = vmatprep.subr.mxu0 0.0
        %1048 = vmatpush1.xpose.msra.mxu0 0.0
        %1049 = vmatprep.subr.mxu0 0.0
        %1050 = vmatpush1.xpose.msra.mxu0 0.0
        %1051 = vmatprep.subr.mxu0 0.0
        %1052 = vmatpush1.xpose.msra.mxu0 0.0
        %1053 = vmatprep.subr.mxu0 0.0
        %1054 = vmatpush1.xpose.msra.mxu0 0.0
        %1055 = vmatprep.subr.mxu0 0.0
        %1056 = vmatpush1.xpose.msra.mxu0 0.0
        %1057 = vmatprep.subr.mxu0 0.0
        %1058 = vmatpush1.xpose.msra.mxu0 0.0
        %1059 = vmatprep.subr.mxu0 0.0
        %1060 = vmatpush1.xpose.msra.mxu0 0.0
        %1061 = vmatprep.subr.mxu0 0.0
        %1062 = vmatpush1.xpose.msra.mxu0 0.0
        %1063 = vmatprep.subr.mxu0 0.0
        %1064 = vmatpush1.xpose.msra.mxu0 0.0
        %1065 = vmatprep.subr.mxu0 0.0
        %1066 = vmatpush1.xpose.msra.mxu0 0.0
        %1067 = vmatprep.subr.mxu0 0.0
        %1068 = vmatpush1.xpose.msra.mxu0 0.0
        %1069 = vmatprep.subr.mxu0 0.0
        %1070 = vmatpush1.xpose.msra.mxu0 0.0
        %1071 = vmatprep.subr.mxu0 0.0
        %1072 = vmatpush1.xpose.msra.mxu0 0.0
        %1073 = vmatprep.subr.mxu0 0.0
        %1074 = vmatpush1.xpose.msra.mxu0 0.0
        %1075 = vmatprep.subr.mxu0 0.0
        %1076 = vmatpush1.xpose.msra.mxu0 0.0
        %1077 = vmatprep.subr.mxu0 0.0
        %1078 = vmatpush1.xpose.msra.mxu0 0.0
        %1079 = vmatprep.subr.mxu0 0.0
        %1080 = vmatpush1.xpose.msra.mxu0 0.0
        %1081 = vmatprep.subr.mxu0 0.0
        %1082 = vmatpush1.xpose.msra.mxu0 0.0
        %1083 = vmatprep.subr.mxu0 0.0
        %1084 = vmatpush1.xpose.msra.mxu0 0.0
        %1085 = vmatprep.subr.mxu0 0.0
        %1086 = vmatpush1.xpose.msra.mxu0 0.0
        %1087 = vmatprep.subr.mxu0 0.0
        %1088 = vmatpush1.xpose.msra.mxu0 0.0
        %1089 = vmatprep.subr.mxu0 0.0
        %1090 = vmatpush1.xpose.msra.mxu0 0.0
        %1091 = vmatprep.subr.mxu0 0.0
        %1092 = vmatpush1.xpose.msra.mxu0 0.0
        %1093 = vmatprep.subr.mxu0 0.0
        %1094 = vmatpush1.xpose.msra.mxu0 0.0
        %1095 = vmatprep.subr.mxu0 0.0
        %1096 = vmatpush1.xpose.msra.mxu0 0.0
        %1097 = vmatprep.subr.mxu0 0.0
        %1098 = vmatpush1.xpose.msra.mxu0 0.0
        %1099 = vmatprep.subr.mxu0 0.0
        %1100 = vmatpush1.xpose.msra.mxu0 0.0
        %1101 = vmatprep.subr.mxu0 0.0
        %1102 = vmatpush1.xpose.msra.mxu0 0.0
        %1103 = vmatprep.subr.mxu0 0.0
        %1104 = vmatpush1.xpose.msra.mxu0 0.0
        %1105 = vmatprep.mubr.f32.mxu0 0.0
        %1106 = vmatmul.mubr.f32.gmra.mrb[0].mxu0 %v1036
        %v1107 = vpop.f32.mrb[0].mxu0
        %v1108 = vadd.f32 %v945, %v1107
        %v1109 = vpop.f32.mrb[0].mxu0
        %1110 = vdwg.mxu0
        %v1112 = vsel %vm958, %v839, 0
        %v1115 = vsel %vm958, %v841, 0
        %1117 = vmatprep.subr.mxu0 0.0
        %1118 = vmatpush1.xpose.msra.mxu0 %v1115
        %1119 = vmatprep.subr.mxu0 0.0
        %1120 = vmatpush1.xpose.msra.mxu0 0.0
        %1121 = vmatprep.subr.mxu0 0.0
        %1122 = vmatpush1.xpose.msra.mxu0 0.0
        %1123 = vmatprep.subr.mxu0 0.0
        %1124 = vmatpush1.xpose.msra.mxu0 0.0
        %1125 = vmatprep.subr.mxu0 0.0
        %1126 = vmatpush1.xpose.msra.mxu0 0.0
        %1127 = vmatprep.subr.mxu0 0.0
        %1128 = vmatpush1.xpose.msra.mxu0 0.0
        %1129 = vmatprep.subr.mxu0 0.0
        %1130 = vmatpush1.xpose.msra.mxu0 0.0
        %1131 = vmatprep.subr.mxu0 0.0
        %1132 = vmatpush1.xpose.msra.mxu0 0.0
        %1133 = vmatprep.subr.mxu0 0.0
        %1134 = vmatpush1.xpose.msra.mxu0 0.0
        %1135 = vmatprep.subr.mxu0 0.0
        %1136 = vmatpush1.xpose.msra.mxu0 0.0
        %1137 = vmatprep.subr.mxu0 0.0
        %1138 = vmatpush1.xpose.msra.mxu0 0.0
        %1139 = vmatprep.subr.mxu0 0.0
        %1140 = vmatpush1.xpose.msra.mxu0 0.0
        %1141 = vmatprep.subr.mxu0 0.0
        %1142 = vmatpush1.xpose.msra.mxu0 0.0
        %1143 = vmatprep.subr.mxu0 0.0
        %1144 = vmatpush1.xpose.msra.mxu0 0.0
        %1145 = vmatprep.subr.mxu0 0.0
        %1146 = vmatpush1.xpose.msra.mxu0 0.0
        %1147 = vmatprep.subr.mxu0 0.0
        %1148 = vmatpush1.xpose.msra.mxu0 0.0
        %1149 = vmatprep.subr.mxu0 0.0
        %1150 = vmatpush1.xpose.msra.mxu0 0.0
        %1151 = vmatprep.subr.mxu0 0.0
        %1152 = vmatpush1.xpose.msra.mxu0 0.0
        %1153 = vmatprep.subr.mxu0 0.0
        %1154 = vmatpush1.xpose.msra.mxu0 0.0
        %1155 = vmatprep.subr.mxu0 0.0
        %1156 = vmatpush1.xpose.msra.mxu0 0.0
        %1157 = vmatprep.subr.mxu0 0.0
        %1158 = vmatpush1.xpose.msra.mxu0 0.0
        %1159 = vmatprep.subr.mxu0 0.0
        %1160 = vmatpush1.xpose.msra.mxu0 0.0
        %1161 = vmatprep.subr.mxu0 0.0
        %1162 = vmatpush1.xpose.msra.mxu0 0.0
        %1163 = vmatprep.subr.mxu0 0.0
        %1164 = vmatpush1.xpose.msra.mxu0 0.0
        %1165 = vmatprep.subr.mxu0 0.0
        %1166 = vmatpush1.xpose.msra.mxu0 0.0
        %1167 = vmatprep.subr.mxu0 0.0
        %1168 = vmatpush1.xpose.msra.mxu0 0.0
        %1169 = vmatprep.subr.mxu0 0.0
        %1170 = vmatpush1.xpose.msra.mxu0 0.0
        %1171 = vmatprep.subr.mxu0 0.0
        %1172 = vmatpush1.xpose.msra.mxu0 0.0
        %1173 = vmatprep.subr.mxu0 0.0
        %1174 = vmatpush1.xpose.msra.mxu0 0.0
        %1175 = vmatprep.subr.mxu0 0.0
        %1176 = vmatpush1.xpose.msra.mxu0 0.0
        %1177 = vmatprep.subr.mxu0 0.0
        %1178 = vmatpush1.xpose.msra.mxu0 0.0
        %1179 = vmatprep.subr.mxu0 0.0
        %1180 = vmatpush1.xpose.msra.mxu0 0.0
        %1181 = vmatprep.mubr.f32.mxu0 0.0
        %1182 = vmatmul.mubr.f32.gmra.mrb[0].mxu0 %v1112
        %v1183 = vpop.f32.mrb[0].mxu0
        %v1184 = vadd.f32 %v949, %v1183
        %v1185 = vpop.f32.mrb[0].mxu0
        %1186 = vdwg.mxu0
        %v1188 = vsel %vm958, %v845, 0
        %v1191 = vsel %vm958, %v847, 0
        %1193 = vmatprep.subr.mxu0 0.0
        %1194 = vmatpush1.xpose.msra.mxu0 %v1191
        %1195 = vmatprep.subr.mxu0 0.0
        %1196 = vmatpush1.xpose.msra.mxu0 0.0
        %1197 = vmatprep.subr.mxu0 0.0
        %1198 = vmatpush1.xpose.msra.mxu0 0.0
        %1199 = vmatprep.subr.mxu0 0.0
        %1200 = vmatpush1.xpose.msra.mxu0 0.0
        %1201 = vmatprep.subr.mxu0 0.0
        %1202 = vmatpush1.xpose.msra.mxu0 0.0
        %1203 = vmatprep.subr.mxu0 0.0
        %1204 = vmatpush1.xpose.msra.mxu0 0.0
        %1205 = vmatprep.subr.mxu0 0.0
        %1206 = vmatpush1.xpose.msra.mxu0 0.0
        %1207 = vmatprep.subr.mxu0 0.0
        %1208 = vmatpush1.xpose.msra.mxu0 0.0
        %1209 = vmatprep.subr.mxu0 0.0
        %1210 = vmatpush1.xpose.msra.mxu0 0.0
        %1211 = vmatprep.subr.mxu0 0.0
        %1212 = vmatpush1.xpose.msra.mxu0 0.0
        %1213 = vmatprep.subr.mxu0 0.0
        %1214 = vmatpush1.xpose.msra.mxu0 0.0
        %1215 = vmatprep.subr.mxu0 0.0
        %1216 = vmatpush1.xpose.msra.mxu0 0.0
        %1217 = vmatprep.subr.mxu0 0.0
        %1218 = vmatpush1.xpose.msra.mxu0 0.0
        %1219 = vmatprep.subr.mxu0 0.0
        %1220 = vmatpush1.xpose.msra.mxu0 0.0
        %1221 = vmatprep.subr.mxu0 0.0
        %1222 = vmatpush1.xpose.msra.mxu0 0.0
        %1223 = vmatprep.subr.mxu0 0.0
        %1224 = vmatpush1.xpose.msra.mxu0 0.0
        %1225 = vmatprep.subr.mxu0 0.0
        %1226 = vmatpush1.xpose.msra.mxu0 0.0
        %1227 = vmatprep.subr.mxu0 0.0
        %1228 = vmatpush1.xpose.msra.mxu0 0.0
        %1229 = vmatprep.subr.mxu0 0.0
        %1230 = vmatpush1.xpose.msra.mxu0 0.0
        %1231 = vmatprep.subr.mxu0 0.0
        %1232 = vmatpush1.xpose.msra.mxu0 0.0
        %1233 = vmatprep.subr.mxu0 0.0
        %1234 = vmatpush1.xpose.msra.mxu0 0.0
        %1235 = vmatprep.subr.mxu0 0.0
        %1236 = vmatpush1.xpose.msra.mxu0 0.0
        %1237 = vmatprep.subr.mxu0 0.0
        %1238 = vmatpush1.xpose.msra.mxu0 0.0
        %1239 = vmatprep.subr.mxu0 0.0
        %1240 = vmatpush1.xpose.msra.mxu0 0.0
        %1241 = vmatprep.subr.mxu0 0.0
        %1242 = vmatpush1.xpose.msra.mxu0 0.0
        %1243 = vmatprep.subr.mxu0 0.0
        %1244 = vmatpush1.xpose.msra.mxu0 0.0
        %1245 = vmatprep.subr.mxu0 0.0
        %1246 = vmatpush1.xpose.msra.mxu0 0.0
        %1247 = vmatprep.subr.mxu0 0.0
        %1248 = vmatpush1.xpose.msra.mxu0 0.0
        %1249 = vmatprep.subr.mxu0 0.0
        %1250 = vmatpush1.xpose.msra.mxu0 0.0
        %1251 = vmatprep.subr.mxu0 0.0
        %1252 = vmatpush1.xpose.msra.mxu0 0.0
        %1253 = vmatprep.subr.mxu0 0.0
        %1254 = vmatpush1.xpose.msra.mxu0 0.0
        %1255 = vmatprep.subr.mxu0 0.0
        %1256 = vmatpush1.xpose.msra.mxu0 0.0
        %1257 = vmatprep.mubr.f32.mxu0 0.0
        %1258 = vmatmul.mubr.f32.gmra.mrb[0].mxu0 %v1188
        %v1259 = vpop.f32.mrb[0].mxu0
        %v1260 = vadd.f32 %v953, %v1259
        %v1261 = vpop.f32.mrb[0].mxu0
        %1262 = vdwg.mxu0
        %vm1263 = vcmask 64512
        %v1264 = vsel %vm1263, %v1032, -inf
        %1265 = vmax.xlane.f32.xlu0 %v1264
        %v1266 = vpop.xlane.xlu0 %1265
        %v1267 = vsel %vm1263, %v1108, -inf
        %1268 = vmax.xlane.f32.xlu0 %v1267
        %v1269 = vpop.xlane.xlu0 %1268
        %v1270 = vsel %vm1263, %v1184, -inf
        %1271 = vmax.xlane.f32.xlu0 %v1270
        %v1272 = vpop.xlane.xlu0 %1271
        %v1273 = vsel %vm1263, %v1260, -inf
        %1274 = vmax.xlane.f32.xlu0 %v1273
        %v1275 = vpop.xlane.xlu0 %1274
        %v1276 = vsub.f32 %v1032, %v1266
        %v1277 = vsub.f32 %v1108, %v1269
        %v1278 = vsub.f32 %v1184, %v1272
        %v1279 = vsub.f32 %v1260, %v1275
        %v1280 = vmul.f32 %v1276, 1.442695
        %v1281 = vpow.pop %v1280
        %v1282 = vmul.f32 %v1277, 1.442695
        %v1283 = vpow.pop %v1282
        %v1284 = vmul.f32 %v1278, 1.442695
        %v1285 = vpow.pop %v1284
        %v1286 = vmul.f32 %v1279, 1.442695
        %v1287 = vpow.pop %v1286
        %v1288 = vsel %vm1263, %v1281, 0.0
        %1289 = vadd.xlane.f32.xlu0 %v1288
        %v1290 = vpop.xlane.xlu0 %1289
        %v1291 = vsel %vm1263, %v1283, 0.0
        %1292 = vadd.xlane.f32.xlu0 %v1291
        %v1293 = vpop.xlane.xlu0 %1292
        %v1294 = vsel %vm1263, %v1285, 0.0
        %1295 = vadd.xlane.f32.xlu0 %v1294
        %v1296 = vpop.xlane.xlu0 %1295
        %v1297 = vsel %vm1263, %v1287, 0.0
        %1298 = vadd.xlane.f32.xlu0 %v1297
        %v1299 = vpop.xlane.xlu0 %1298
        %v1300 = vrcp.pop %v1290
        %v1301 = vrcp.pop %v1293
        %v1302 = vrcp.pop %v1296
        %v1303 = vrcp.pop %v1299
        %v1304 = vmul.f32 %v1281, %v1300
        %v1305 = vmul.f32 %v1283, %v1301
        %v1306 = vmul.f32 %v1285, %v1302
        %v1307 = vmul.f32 %v1287, %v1303
        %v1309 = vsel %vm1263, %v1304, 0
        %1311 = vmatprep.subr.mxu0 0.0
        %1312 = vmatpush1.msra.mxu0 %v916
        %1313 = vmatprep.subr.mxu0 0.0
        %1314 = vmatpush1.msra.mxu0 0.0
        %1315 = vmatprep.subr.mxu0 0.0
        %1316 = vmatpush1.msra.mxu0 0.0
        %1317 = vmatprep.subr.mxu0 0.0
        %1318 = vmatpush1.msra.mxu0 0.0
        %1319 = vmatprep.subr.mxu0 0.0
        %1320 = vmatpush1.msra.mxu0 0.0
        %1321 = vmatprep.subr.mxu0 0.0
        %1322 = vmatpush1.msra.mxu0 0.0
        %1323 = vmatprep.subr.mxu0 0.0
        %1324 = vmatpush1.msra.mxu0 0.0
        %1325 = vmatprep.subr.mxu0 0.0
        %1326 = vmatpush1.msra.mxu0 0.0
        %1327 = vmatprep.subr.mxu0 0.0
        %1328 = vmatpush1.msra.mxu0 0.0
        %1329 = vmatprep.subr.mxu0 0.0
        %1330 = vmatpush1.msra.mxu0 0.0
        %1331 = vmatprep.subr.mxu0 0.0
        %1332 = vmatpush1.msra.mxu0 0.0
        %1333 = vmatprep.subr.mxu0 0.0
        %1334 = vmatpush1.msra.mxu0 0.0
        %1335 = vmatprep.subr.mxu0 0.0
        %1336 = vmatpush1.msra.mxu0 0.0
        %1337 = vmatprep.subr.mxu0 0.0
        %1338 = vmatpush1.msra.mxu0 0.0
        %1339 = vmatprep.subr.mxu0 0.0
        %1340 = vmatpush1.msra.mxu0 0.0
        %1341 = vmatprep.subr.mxu0 0.0
        %1342 = vmatpush1.msra.mxu0 0.0
        %1343 = vmatprep.subr.mxu0 0.0
        %1344 = vmatpush1.msra.mxu0 0.0
        %1345 = vmatprep.subr.mxu0 0.0
        %1346 = vmatpush1.msra.mxu0 0.0
        %1347 = vmatprep.subr.mxu0 0.0
        %1348 = vmatpush1.msra.mxu0 0.0
        %1349 = vmatprep.subr.mxu0 0.0
        %1350 = vmatpush1.msra.mxu0 0.0
        %1351 = vmatprep.subr.mxu0 0.0
        %1352 = vmatpush1.msra.mxu0 0.0
        %1353 = vmatprep.subr.mxu0 0.0
        %1354 = vmatpush1.msra.mxu0 0.0
        %1355 = vmatprep.subr.mxu0 0.0
        %1356 = vmatpush1.msra.mxu0 0.0
        %1357 = vmatprep.subr.mxu0 0.0
        %1358 = vmatpush1.msra.mxu0 0.0
        %1359 = vmatprep.subr.mxu0 0.0
        %1360 = vmatpush1.msra.mxu0 0.0
        %1361 = vmatprep.subr.mxu0 0.0
        %1362 = vmatpush1.msra.mxu0 0.0
        %1363 = vmatprep.subr.mxu0 0.0
        %1364 = vmatpush1.msra.mxu0 0.0
        %1365 = vmatprep.subr.mxu0 0.0
        %1366 = vmatpush1.msra.mxu0 0.0
        %1367 = vmatprep.subr.mxu0 0.0
        %1368 = vmatpush1.msra.mxu0 0.0
        %1369 = vmatprep.subr.mxu0 0.0
        %1370 = vmatpush1.msra.mxu0 0.0
        %1371 = vmatprep.subr.mxu0 0.0
        %1372 = vmatpush1.msra.mxu0 0.0
        %1373 = vmatprep.subr.mxu0 0.0
        %1374 = vmatpush1.msra.mxu0 0.0
        %1375 = vmatprep.mubr.f32.mxu0 0.0
        %1376 = vmatmul.mubr.f32.gmra.mrb[0].mxu0 %v1309
        %v1377 = vpop.f32.mrb[0].mxu0
        %v1378 = vadd.f32 0.0, %v1377
        %v1379 = vpop.f32.mrb[0].mxu0
        %1380 = vdwg.mxu0
        %v1382 = vsel %vm1263, %v1305, 0
        %1384 = vmatprep.subr.mxu0 0.0
        %1385 = vmatpush1.msra.mxu0 %v921
        %1386 = vmatprep.subr.mxu0 0.0
        %1387 = vmatpush1.msra.mxu0 0.0
        %1388 = vmatprep.subr.mxu0 0.0
        %1389 = vmatpush1.msra.mxu0 0.0
        %1390 = vmatprep.subr.mxu0 0.0
        %1391 = vmatpush1.msra.mxu0 0.0
        %1392 = vmatprep.subr.mxu0 0.0
        %1393 = vmatpush1.msra.mxu0 0.0
        %1394 = vmatprep.subr.mxu0 0.0
        %1395 = vmatpush1.msra.mxu0 0.0
        %1396 = vmatprep.subr.mxu0 0.0
        %1397 = vmatpush1.msra.mxu0 0.0
        %1398 = vmatprep.subr.mxu0 0.0
        %1399 = vmatpush1.msra.mxu0 0.0
        %1400 = vmatprep.subr.mxu0 0.0
        %1401 = vmatpush1.msra.mxu0 0.0
        %1402 = vmatprep.subr.mxu0 0.0
        %1403 = vmatpush1.msra.mxu0 0.0
        %1404 = vmatprep.subr.mxu0 0.0
        %1405 = vmatpush1.msra.mxu0 0.0
        %1406 = vmatprep.subr.mxu0 0.0
        %1407 = vmatpush1.msra.mxu0 0.0
        %1408 = vmatprep.subr.mxu0 0.0
        %1409 = vmatpush1.msra.mxu0 0.0
        %1410 = vmatprep.subr.mxu0 0.0
        %1411 = vmatpush1.msra.mxu0 0.0
        %1412 = vmatprep.subr.mxu0 0.0
        %1413 = vmatpush1.msra.mxu0 0.0
        %1414 = vmatprep.subr.mxu0 0.0
        %1415 = vmatpush1.msra.mxu0 0.0
        %1416 = vmatprep.subr.mxu0 0.0
        %1417 = vmatpush1.msra.mxu0 0.0
        %1418 = vmatprep.subr.mxu0 0.0
        %1419 = vmatpush1.msra.mxu0 0.0
        %1420 = vmatprep.subr.mxu0 0.0
        %1421 = vmatpush1.msra.mxu0 0.0
        %1422 = vmatprep.subr.mxu0 0.0
        %1423 = vmatpush1.msra.mxu0 0.0
        %1424 = vmatprep.subr.mxu0 0.0
        %1425 = vmatpush1.msra.mxu0 0.0
        %1426 = vmatprep.subr.mxu0 0.0
        %1427 = vmatpush1.msra.mxu0 0.0
        %1428 = vmatprep.subr.mxu0 0.0
        %1429 = vmatpush1.msra.mxu0 0.0
        %1430 = vmatprep.subr.mxu0 0.0
        %1431 = vmatpush1.msra.mxu0 0.0
        %1432 = vmatprep.subr.mxu0 0.0
        %1433 = vmatpush1.msra.mxu0 0.0
        %1434 = vmatprep.subr.mxu0 0.0
        %1435 = vmatpush1.msra.mxu0 0.0
        %1436 = vmatprep.subr.mxu0 0.0
        %1437 = vmatpush1.msra.mxu0 0.0
        %1438 = vmatprep.subr.mxu0 0.0
        %1439 = vmatpush1.msra.mxu0 0.0
        %1440 = vmatprep.subr.mxu0 0.0
        %1441 = vmatpush1.msra.mxu0 0.0
        %1442 = vmatprep.subr.mxu0 0.0
        %1443 = vmatpush1.msra.mxu0 0.0
        %1444 = vmatprep.subr.mxu0 0.0
        %1445 = vmatpush1.msra.mxu0 0.0
        %1446 = vmatprep.subr.mxu0 0.0
        %1447 = vmatpush1.msra.mxu0 0.0
        %1448 = vmatprep.mubr.f32.mxu0 0.0
        %1449 = vmatmul.mubr.f32.gmra.mrb[0].mxu0 %v1382
        %v1450 = vpop.f32.mrb[0].mxu0
        %v1451 = vadd.f32 0.0, %v1450
        %v1452 = vpop.f32.mrb[0].mxu0
        %1453 = vdwg.mxu0
        %v1455 = vsel %vm1263, %v1306, 0
        %1457 = vmatprep.subr.mxu0 0.0
        %1458 = vmatpush1.msra.mxu0 %v926
        %1459 = vmatprep.subr.mxu0 0.0
        %1460 = vmatpush1.msra.mxu0 0.0
        %1461 = vmatprep.subr.mxu0 0.0
        %1462 = vmatpush1.msra.mxu0 0.0
        %1463 = vmatprep.subr.mxu0 0.0
        %1464 = vmatpush1.msra.mxu0 0.0
        %1465 = vmatprep.subr.mxu0 0.0
        %1466 = vmatpush1.msra.mxu0 0.0
        %1467 = vmatprep.subr.mxu0 0.0
        %1468 = vmatpush1.msra.mxu0 0.0
        %1469 = vmatprep.subr.mxu0 0.0
        %1470 = vmatpush1.msra.mxu0 0.0
        %1471 = vmatprep.subr.mxu0 0.0
        %1472 = vmatpush1.msra.mxu0 0.0
        %1473 = vmatprep.subr.mxu0 0.0
        %1474 = vmatpush1.msra.mxu0 0.0
        %1475 = vmatprep.subr.mxu0 0.0
        %1476 = vmatpush1.msra.mxu0 0.0
        %1477 = vmatprep.subr.mxu0 0.0
        %1478 = vmatpush1.msra.mxu0 0.0
        %1479 = vmatprep.subr.mxu0 0.0
        %1480 = vmatpush1.msra.mxu0 0.0
        %1481 = vmatprep.subr.mxu0 0.0
        %1482 = vmatpush1.msra.mxu0 0.0
        %1483 = vmatprep.subr.mxu0 0.0
        %1484 = vmatpush1.msra.mxu0 0.0
        %1485 = vmatprep.subr.mxu0 0.0
        %1486 = vmatpush1.msra.mxu0 0.0
        %1487 = vmatprep.subr.mxu0 0.0
        %1488 = vmatpush1.msra.mxu0 0.0
        %1489 = vmatprep.subr.mxu0 0.0
        %1490 = vmatpush1.msra.mxu0 0.0
        %1491 = vmatprep.subr.mxu0 0.0
        %1492 = vmatpush1.msra.mxu0 0.0
        %1493 = vmatprep.subr.mxu0 0.0
        %1494 = vmatpush1.msra.mxu0 0.0
        %1495 = vmatprep.subr.mxu0 0.0
        %1496 = vmatpush1.msra.mxu0 0.0
        %1497 = vmatprep.subr.mxu0 0.0
        %1498 = vmatpush1.msra.mxu0 0.0
        %1499 = vmatprep.subr.mxu0 0.0
        %1500 = vmatpush1.msra.mxu0 0.0
        %1501 = vmatprep.subr.mxu0 0.0
        %1502 = vmatpush1.msra.mxu0 0.0
        %1503 = vmatprep.subr.mxu0 0.0
        %1504 = vmatpush1.msra.mxu0 0.0
        %1505 = vmatprep.subr.mxu0 0.0
        %1506 = vmatpush1.msra.mxu0 0.0
        %1507 = vmatprep.subr.mxu0 0.0
        %1508 = vmatpush1.msra.mxu0 0.0
        %1509 = vmatprep.subr.mxu0 0.0
        %1510 = vmatpush1.msra.mxu0 0.0
        %1511 = vmatprep.subr.mxu0 0.0
        %1512 = vmatpush1.msra.mxu0 0.0
        %1513 = vmatprep.subr.mxu0 0.0
        %1514 = vmatpush1.msra.mxu0 0.0
        %1515 = vmatprep.subr.mxu0 0.0
        %1516 = vmatpush1.msra.mxu0 0.0
        %1517 = vmatprep.subr.mxu0 0.0
        %1518 = vmatpush1.msra.mxu0 0.0
        %1519 = vmatprep.subr.mxu0 0.0
        %1520 = vmatpush1.msra.mxu0 0.0
        %1521 = vmatprep.mubr.f32.mxu0 0.0
        %1522 = vmatmul.mubr.f32.gmra.mrb[0].mxu0 %v1455
        %v1523 = vpop.f32.mrb[0].mxu0
        %v1524 = vadd.f32 0.0, %v1523
        %v1525 = vpop.f32.mrb[0].mxu0
        %1526 = vdwg.mxu0
        %v1528 = vsel %vm1263, %v1307, 0
        %1530 = vmatprep.subr.mxu0 0.0
        %1531 = vmatpush1.msra.mxu0 %v931
        %1532 = vmatprep.subr.mxu0 0.0
        %1533 = vmatpush1.msra.mxu0 0.0
        %1534 = vmatprep.subr.mxu0 0.0
        %1535 = vmatpush1.msra.mxu0 0.0
        %1536 = vmatprep.subr.mxu0 0.0
        %1537 = vmatpush1.msra.mxu0 0.0
        %1538 = vmatprep.subr.mxu0 0.0
        %1539 = vmatpush1.msra.mxu0 0.0
        %1540 = vmatprep.subr.mxu0 0.0
        %1541 = vmatpush1.msra.mxu0 0.0
        %1542 = vmatprep.subr.mxu0 0.0
        %1543 = vmatpush1.msra.mxu0 0.0
        %1544 = vmatprep.subr.mxu0 0.0
        %1545 = vmatpush1.msra.mxu0 0.0
        %1546 = vmatprep.subr.mxu0 0.0
        %1547 = vmatpush1.msra.mxu0 0.0
        %1548 = vmatprep.subr.mxu0 0.0
        %1549 = vmatpush1.msra.mxu0 0.0
        %1550 = vmatprep.subr.mxu0 0.0
        %1551 = vmatpush1.msra.mxu0 0.0
        %1552 = vmatprep.subr.mxu0 0.0
        %1553 = vmatpush1.msra.mxu0 0.0
        %1554 = vmatprep.subr.mxu0 0.0
        %1555 = vmatpush1.msra.mxu0 0.0
        %1556 = vmatprep.subr.mxu0 0.0
        %1557 = vmatpush1.msra.mxu0 0.0
        %1558 = vmatprep.subr.mxu0 0.0
        %1559 = vmatpush1.msra.mxu0 0.0
        %1560 = vmatprep.subr.mxu0 0.0
        %1561 = vmatpush1.msra.mxu0 0.0
        %1562 = vmatprep.subr.mxu0 0.0
        %1563 = vmatpush1.msra.mxu0 0.0
        %1564 = vmatprep.subr.mxu0 0.0
        %1565 = vmatpush1.msra.mxu0 0.0
        %1566 = vmatprep.subr.mxu0 0.0
        %1567 = vmatpush1.msra.mxu0 0.0
        %1568 = vmatprep.subr.mxu0 0.0
        %1569 = vmatpush1.msra.mxu0 0.0
        %1570 = vmatprep.subr.mxu0 0.0
        %1571 = vmatpush1.msra.mxu0 0.0
        %1572 = vmatprep.subr.mxu0 0.0
        %1573 = vmatpush1.msra.mxu0 0.0
        %1574 = vmatprep.subr.mxu0 0.0
        %1575 = vmatpush1.msra.mxu0 0.0
        %1576 = vmatprep.subr.mxu0 0.0
        %1577 = vmatpush1.msra.mxu0 0.0
        %1578 = vmatprep.subr.mxu0 0.0
        %1579 = vmatpush1.msra.mxu0 0.0
        %1580 = vmatprep.subr.mxu0 0.0
        %1581 = vmatpush1.msra.mxu0 0.0
        %1582 = vmatprep.subr.mxu0 0.0
        %1583 = vmatpush1.msra.mxu0 0.0
        %1584 = vmatprep.subr.mxu0 0.0
        %1585 = vmatpush1.msra.mxu0 0.0
        %1586 = vmatprep.subr.mxu0 0.0
        %1587 = vmatpush1.msra.mxu0 0.0
        %1588 = vmatprep.subr.mxu0 0.0
        %1589 = vmatpush1.msra.mxu0 0.0
        %1590 = vmatprep.subr.mxu0 0.0
        %1591 = vmatpush1.msra.mxu0 0.0
        %1592 = vmatprep.subr.mxu0 0.0
        %1593 = vmatpush1.msra.mxu0 0.0
        %1594 = vmatprep.mubr.f32.mxu0 0.0
        %1595 = vmatmul.mubr.f32.gmra.mrb[0].mxu0 %v1528
        %v1596 = vpop.f32.mrb[0].mxu0
        %v1597 = vadd.f32 0.0, %v1596
        %v1598 = vpop.f32.mrb[0].mxu0
        %1599 = vdwg.mxu0
        %1600 = vrot.lane.b32.xlu0 %v827, 96
        %v1601 = vpop.permute.xlu0 %1600
        %1602 = vrot.lane.b32.xlu0 %v829, 96
        %v1603 = vpop.permute.xlu0 %1602
        %v1604 = vsel %vm958, %v1601, 0
        %v1606 = vsel %vm958, %v1603, 0
        %1608 = vmatprep.subr.mxu0 0.0
        %1609 = vmatpush1.xpose.msra.mxu0 %v1606
        %1610 = vmatprep.subr.mxu0 0.0
        %1611 = vmatpush1.xpose.msra.mxu0 0.0
        %1612 = vmatprep.subr.mxu0 0.0
        %1613 = vmatpush1.xpose.msra.mxu0 0.0
        %1614 = vmatprep.subr.mxu0 0.0
        %1615 = vmatpush1.xpose.msra.mxu0 0.0
        %1616 = vmatprep.subr.mxu0 0.0
        %1617 = vmatpush1.xpose.msra.mxu0 0.0
        %1618 = vmatprep.subr.mxu0 0.0
        %1619 = vmatpush1.xpose.msra.mxu0 0.0
        %1620 = vmatprep.subr.mxu0 0.0
        %1621 = vmatpush1.xpose.msra.mxu0 0.0
        %1622 = vmatprep.subr.mxu0 0.0
        %1623 = vmatpush1.xpose.msra.mxu0 0.0
        %1624 = vmatprep.subr.mxu0 0.0
        %1625 = vmatpush1.xpose.msra.mxu0 0.0
        %1626 = vmatprep.subr.mxu0 0.0
        %1627 = vmatpush1.xpose.msra.mxu0 0.0
        %1628 = vmatprep.subr.mxu0 0.0
        %1629 = vmatpush1.xpose.msra.mxu0 0.0
        %1630 = vmatprep.subr.mxu0 0.0
        %1631 = vmatpush1.xpose.msra.mxu0 0.0
        %1632 = vmatprep.subr.mxu0 0.0
        %1633 = vmatpush1.xpose.msra.mxu0 0.0
        %1634 = vmatprep.subr.mxu0 0.0
        %1635 = vmatpush1.xpose.msra.mxu0 0.0
        %1636 = vmatprep.subr.mxu0 0.0
        %1637 = vmatpush1.xpose.msra.mxu0 0.0
        %1638 = vmatprep.subr.mxu0 0.0
        %1639 = vmatpush1.xpose.msra.mxu0 0.0
        %1640 = vmatprep.subr.mxu0 0.0
        %1641 = vmatpush1.xpose.msra.mxu0 0.0
        %1642 = vmatprep.subr.mxu0 0.0
        %1643 = vmatpush1.xpose.msra.mxu0 0.0
        %1644 = vmatprep.subr.mxu0 0.0
        %1645 = vmatpush1.xpose.msra.mxu0 0.0
        %1646 = vmatprep.subr.mxu0 0.0
        %1647 = vmatpush1.xpose.msra.mxu0 0.0
        %1648 = vmatprep.subr.mxu0 0.0
        %1649 = vmatpush1.xpose.msra.mxu0 0.0
        %1650 = vmatprep.subr.mxu0 0.0
        %1651 = vmatpush1.xpose.msra.mxu0 0.0
        %1652 = vmatprep.subr.mxu0 0.0
        %1653 = vmatpush1.xpose.msra.mxu0 0.0
        %1654 = vmatprep.subr.mxu0 0.0
        %1655 = vmatpush1.xpose.msra.mxu0 0.0
        %1656 = vmatprep.subr.mxu0 0.0
        %1657 = vmatpush1.xpose.msra.mxu0 0.0
        %1658 = vmatprep.subr.mxu0 0.0
        %1659 = vmatpush1.xpose.msra.mxu0 0.0
        %1660 = vmatprep.subr.mxu0 0.0
        %1661 = vmatpush1.xpose.msra.mxu0 0.0
        %1662 = vmatprep.subr.mxu0 0.0
        %1663 = vmatpush1.xpose.msra.mxu0 0.0
        %1664 = vmatprep.subr.mxu0 0.0
        %1665 = vmatpush1.xpose.msra.mxu0 0.0
        %1666 = vmatprep.subr.mxu0 0.0
        %1667 = vmatpush1.xpose.msra.mxu0 0.0
        %1668 = vmatprep.subr.mxu0 0.0
        %1669 = vmatpush1.xpose.msra.mxu0 0.0
        %1670 = vmatprep.subr.mxu0 0.0
        %1671 = vmatpush1.xpose.msra.mxu0 0.0
        %1672 = vmatprep.mubr.f32.mxu0 0.0
        %1673 = vmatmul.mubr.f32.gmra.mrb[0].mxu0 %v1604
        %v1674 = vpop.f32.mrb[0].mxu0
        %v1675 = vadd.f32 %v941, %v1674
        %v1676 = vpop.f32.mrb[0].mxu0
        %1677 = vdwg.mxu0
        %1678 = vrot.lane.b32.xlu0 %v833, 96
        %v1679 = vpop.permute.xlu0 %1678
        %1680 = vrot.lane.b32.xlu0 %v835, 96
        %v1681 = vpop.permute.xlu0 %1680
        %v1682 = vsel %vm958, %v1679, 0
        %v1684 = vsel %vm958, %v1681, 0
        %1686 = vmatprep.subr.mxu0 0.0
        %1687 = vmatpush1.xpose.msra.mxu0 %v1684
        %1688 = vmatprep.subr.mxu0 0.0
        %1689 = vmatpush1.xpose.msra.mxu0 0.0
        %1690 = vmatprep.subr.mxu0 0.0
        %1691 = vmatpush1.xpose.msra.mxu0 0.0
        %1692 = vmatprep.subr.mxu0 0.0
        %1693 = vmatpush1.xpose.msra.mxu0 0.0
        %1694 = vmatprep.subr.mxu0 0.0
        %1695 = vmatpush1.xpose.msra.mxu0 0.0
        %1696 = vmatprep.subr.mxu0 0.0
        %1697 = vmatpush1.xpose.msra.mxu0 0.0
        %1698 = vmatprep.subr.mxu0 0.0
        %1699 = vmatpush1.xpose.msra.mxu0 0.0
        %1700 = vmatprep.subr.mxu0 0.0
        %1701 = vmatpush1.xpose.msra.mxu0 0.0
        %1702 = vmatprep.subr.mxu0 0.0
        %1703 = vmatpush1.xpose.msra.mxu0 0.0
        %1704 = vmatprep.subr.mxu0 0.0
        %1705 = vmatpush1.xpose.msra.mxu0 0.0
        %1706 = vmatprep.subr.mxu0 0.0
        %1707 = vmatpush1.xpose.msra.mxu0 0.0
        %1708 = vmatprep.subr.mxu0 0.0
        %1709 = vmatpush1.xpose.msra.mxu0 0.0
        %1710 = vmatprep.subr.mxu0 0.0
        %1711 = vmatpush1.xpose.msra.mxu0 0.0
        %1712 = vmatprep.subr.mxu0 0.0
        %1713 = vmatpush1.xpose.msra.mxu0 0.0
        %1714 = vmatprep.subr.mxu0 0.0
        %1715 = vmatpush1.xpose.msra.mxu0 0.0
        %1716 = vmatprep.subr.mxu0 0.0
        %1717 = vmatpush1.xpose.msra.mxu0 0.0
        %1718 = vmatprep.subr.mxu0 0.0
        %1719 = vmatpush1.xpose.msra.mxu0 0.0
        %1720 = vmatprep.subr.mxu0 0.0
        %1721 = vmatpush1.xpose.msra.mxu0 0.0
        %1722 = vmatprep.subr.mxu0 0.0
        %1723 = vmatpush1.xpose.msra.mxu0 0.0
        %1724 = vmatprep.subr.mxu0 0.0
        %1725 = vmatpush1.xpose.msra.mxu0 0.0
        %1726 = vmatprep.subr.mxu0 0.0
        %1727 = vmatpush1.xpose.msra.mxu0 0.0
        %1728 = vmatprep.subr.mxu0 0.0
        %1729 = vmatpush1.xpose.msra.mxu0 0.0
        %1730 = vmatprep.subr.mxu0 0.0
        %1731 = vmatpush1.xpose.msra.mxu0 0.0
        %1732 = vmatprep.subr.mxu0 0.0
        %1733 = vmatpush1.xpose.msra.mxu0 0.0
        %1734 = vmatprep.subr.mxu0 0.0
        %1735 = vmatpush1.xpose.msra.mxu0 0.0
        %1736 = vmatprep.subr.mxu0 0.0
        %1737 = vmatpush1.xpose.msra.mxu0 0.0
        %1738 = vmatprep.subr.mxu0 0.0
        %1739 = vmatpush1.xpose.msra.mxu0 0.0
        %1740 = vmatprep.subr.mxu0 0.0
        %1741 = vmatpush1.xpose.msra.mxu0 0.0
        %1742 = vmatprep.subr.mxu0 0.0
        %1743 = vmatpush1.xpose.msra.mxu0 0.0
        %1744 = vmatprep.subr.mxu0 0.0
        %1745 = vmatpush1.xpose.msra.mxu0 0.0
        %1746 = vmatprep.subr.mxu0 0.0
        %1747 = vmatpush1.xpose.msra.mxu0 0.0
        %1748 = vmatprep.subr.mxu0 0.0
        %1749 = vmatpush1.xpose.msra.mxu0 0.0
        %1750 = vmatprep.mubr.f32.mxu0 0.0
        %1751 = vmatmul.mubr.f32.gmra.mrb[0].mxu0 %v1682
        %v1752 = vpop.f32.mrb[0].mxu0
        %v1753 = vadd.f32 %v945, %v1752
        %v1754 = vpop.f32.mrb[0].mxu0
        %1755 = vdwg.mxu0
        %1756 = vrot.lane.b32.xlu0 %v839, 96
        %v1757 = vpop.permute.xlu0 %1756
        %1758 = vrot.lane.b32.xlu0 %v841, 96
        %v1759 = vpop.permute.xlu0 %1758
        %v1760 = vsel %vm958, %v1757, 0
        %v1762 = vsel %vm958, %v1759, 0
        %1764 = vmatprep.subr.mxu0 0.0
        %1765 = vmatpush1.xpose.msra.mxu0 %v1762
        %1766 = vmatprep.subr.mxu0 0.0
        %1767 = vmatpush1.xpose.msra.mxu0 0.0
        %1768 = vmatprep.subr.mxu0 0.0
        %1769 = vmatpush1.xpose.msra.mxu0 0.0
        %1770 = vmatprep.subr.mxu0 0.0
        %1771 = vmatpush1.xpose.msra.mxu0 0.0
        %1772 = vmatprep.subr.mxu0 0.0
        %1773 = vmatpush1.xpose.msra.mxu0 0.0
        %1774 = vmatprep.subr.mxu0 0.0
        %1775 = vmatpush1.xpose.msra.mxu0 0.0
        %1776 = vmatprep.subr.mxu0 0.0
        %1777 = vmatpush1.xpose.msra.mxu0 0.0
        %1778 = vmatprep.subr.mxu0 0.0
        %1779 = vmatpush1.xpose.msra.mxu0 0.0
        %1780 = vmatprep.subr.mxu0 0.0
        %1781 = vmatpush1.xpose.msra.mxu0 0.0
        %1782 = vmatprep.subr.mxu0 0.0
        %1783 = vmatpush1.xpose.msra.mxu0 0.0
        %1784 = vmatprep.subr.mxu0 0.0
        %1785 = vmatpush1.xpose.msra.mxu0 0.0
        %1786 = vmatprep.subr.mxu0 0.0
        %1787 = vmatpush1.xpose.msra.mxu0 0.0
        %1788 = vmatprep.subr.mxu0 0.0
        %1789 = vmatpush1.xpose.msra.mxu0 0.0
        %1790 = vmatprep.subr.mxu0 0.0
        %1791 = vmatpush1.xpose.msra.mxu0 0.0
        %1792 = vmatprep.subr.mxu0 0.0
        %1793 = vmatpush1.xpose.msra.mxu0 0.0
        %1794 = vmatprep.subr.mxu0 0.0
        %1795 = vmatpush1.xpose.msra.mxu0 0.0
        %1796 = vmatprep.subr.mxu0 0.0
        %1797 = vmatpush1.xpose.msra.mxu0 0.0
        %1798 = vmatprep.subr.mxu0 0.0
        %1799 = vmatpush1.xpose.msra.mxu0 0.0
        %1800 = vmatprep.subr.mxu0 0.0
        %1801 = vmatpush1.xpose.msra.mxu0 0.0
        %1802 = vmatprep.subr.mxu0 0.0
        %1803 = vmatpush1.xpose.msra.mxu0 0.0
        %1804 = vmatprep.subr.mxu0 0.0
        %1805 = vmatpush1.xpose.msra.mxu0 0.0
        %1806 = vmatprep.subr.mxu0 0.0
        %1807 = vmatpush1.xpose.msra.mxu0 0.0
        %1808 = vmatprep.subr.mxu0 0.0
        %1809 = vmatpush1.xpose.msra.mxu0 0.0
        %1810 = vmatprep.subr.mxu0 0.0
        %1811 = vmatpush1.xpose.msra.mxu0 0.0
        %1812 = vmatprep.subr.mxu0 0.0
        %1813 = vmatpush1.xpose.msra.mxu0 0.0
        %1814 = vmatprep.subr.mxu0 0.0
        %1815 = vmatpush1.xpose.msra.mxu0 0.0
        %1816 = vmatprep.subr.mxu0 0.0
        %1817 = vmatpush1.xpose.msra.mxu0 0.0
        %1818 = vmatprep.subr.mxu0 0.0
        %1819 = vmatpush1.xpose.msra.mxu0 0.0
        %1820 = vmatprep.subr.mxu0 0.0
        %1821 = vmatpush1.xpose.msra.mxu0 0.0
        %1822 = vmatprep.subr.mxu0 0.0
        %1823 = vmatpush1.xpose.msra.mxu0 0.0
        %1824 = vmatprep.subr.mxu0 0.0
        %1825 = vmatpush1.xpose.msra.mxu0 0.0
        %1826 = vmatprep.subr.mxu0 0.0
        %1827 = vmatpush1.xpose.msra.mxu0 0.0
        %1828 = vmatprep.mubr.f32.mxu0 0.0
        %1829 = vmatmul.mubr.f32.gmra.mrb[0].mxu0 %v1760
        %v1830 = vpop.f32.mrb[0].mxu0
        %v1831 = vadd.f32 %v949, %v1830
        %v1832 = vpop.f32.mrb[0].mxu0
        %1833 = vdwg.mxu0
        %1834 = vrot.lane.b32.xlu0 %v845, 96
        %v1835 = vpop.permute.xlu0 %1834
        %1836 = vrot.lane.b32.xlu0 %v847, 96
        %v1837 = vpop.permute.xlu0 %1836
        %v1838 = vsel %vm958, %v1835, 0
        %v1840 = vsel %vm958, %v1837, 0
        %1842 = vmatprep.subr.mxu0 0.0
        %1843 = vmatpush1.xpose.msra.mxu0 %v1840
        %1844 = vmatprep.subr.mxu0 0.0
        %1845 = vmatpush1.xpose.msra.mxu0 0.0
        %1846 = vmatprep.subr.mxu0 0.0
        %1847 = vmatpush1.xpose.msra.mxu0 0.0
        %1848 = vmatprep.subr.mxu0 0.0
        %1849 = vmatpush1.xpose.msra.mxu0 0.0
        %1850 = vmatprep.subr.mxu0 0.0
        %1851 = vmatpush1.xpose.msra.mxu0 0.0
        %1852 = vmatprep.subr.mxu0 0.0
        %1853 = vmatpush1.xpose.msra.mxu0 0.0
        %1854 = vmatprep.subr.mxu0 0.0
        %1855 = vmatpush1.xpose.msra.mxu0 0.0
        %1856 = vmatprep.subr.mxu0 0.0
        %1857 = vmatpush1.xpose.msra.mxu0 0.0
        %1858 = vmatprep.subr.mxu0 0.0
        %1859 = vmatpush1.xpose.msra.mxu0 0.0
        %1860 = vmatprep.subr.mxu0 0.0
        %1861 = vmatpush1.xpose.msra.mxu0 0.0
        %1862 = vmatprep.subr.mxu0 0.0
        %1863 = vmatpush1.xpose.msra.mxu0 0.0
        %1864 = vmatprep.subr.mxu0 0.0
        %1865 = vmatpush1.xpose.msra.mxu0 0.0
        %1866 = vmatprep.subr.mxu0 0.0
        %1867 = vmatpush1.xpose.msra.mxu0 0.0
        %1868 = vmatprep.subr.mxu0 0.0
        %1869 = vmatpush1.xpose.msra.mxu0 0.0
        %1870 = vmatprep.subr.mxu0 0.0
        %1871 = vmatpush1.xpose.msra.mxu0 0.0
        %1872 = vmatprep.subr.mxu0 0.0
        %1873 = vmatpush1.xpose.msra.mxu0 0.0
        %1874 = vmatprep.subr.mxu0 0.0
        %1875 = vmatpush1.xpose.msra.mxu0 0.0
        %1876 = vmatprep.subr.mxu0 0.0
        %1877 = vmatpush1.xpose.msra.mxu0 0.0
        %1878 = vmatprep.subr.mxu0 0.0
        %1879 = vmatpush1.xpose.msra.mxu0 0.0
        %1880 = vmatprep.subr.mxu0 0.0
        %1881 = vmatpush1.xpose.msra.mxu0 0.0
        %1882 = vmatprep.subr.mxu0 0.0
        %1883 = vmatpush1.xpose.msra.mxu0 0.0
        %1884 = vmatprep.subr.mxu0 0.0
        %1885 = vmatpush1.xpose.msra.mxu0 0.0
        %1886 = vmatprep.subr.mxu0 0.0
        %1887 = vmatpush1.xpose.msra.mxu0 0.0
        %1888 = vmatprep.subr.mxu0 0.0
        %1889 = vmatpush1.xpose.msra.mxu0 0.0
        %1890 = vmatprep.subr.mxu0 0.0
        %1891 = vmatpush1.xpose.msra.mxu0 0.0
        %1892 = vmatprep.subr.mxu0 0.0
        %1893 = vmatpush1.xpose.msra.mxu0 0.0
        %1894 = vmatprep.subr.mxu0 0.0
        %1895 = vmatpush1.xpose.msra.mxu0 0.0
        %1896 = vmatprep.subr.mxu0 0.0
        %1897 = vmatpush1.xpose.msra.mxu0 0.0
        %1898 = vmatprep.subr.mxu0 0.0
        %1899 = vmatpush1.xpose.msra.mxu0 0.0
        %1900 = vmatprep.subr.mxu0 0.0
        %1901 = vmatpush1.xpose.msra.mxu0 0.0
        %1902 = vmatprep.subr.mxu0 0.0
        %1903 = vmatpush1.xpose.msra.mxu0 0.0
        %1904 = vmatprep.subr.mxu0 0.0
        %1905 = vmatpush1.xpose.msra.mxu0 0.0
        %1906 = vmatprep.mubr.f32.mxu0 0.0
        %1907 = vmatmul.mubr.f32.gmra.mrb[0].mxu0 %v1838
        %v1908 = vpop.f32.mrb[0].mxu0
        %v1909 = vadd.f32 %v953, %v1908
        %v1910 = vpop.f32.mrb[0].mxu0
        %1911 = vdwg.mxu0
        %v1912 = vsel %vm1263, %v1675, -inf
        %1913 = vmax.xlane.f32.xlu0 %v1912
        %v1914 = vpop.xlane.xlu0 %1913
        %v1915 = vsel %vm1263, %v1753, -inf
        %1916 = vmax.xlane.f32.xlu0 %v1915
        %v1917 = vpop.xlane.xlu0 %1916
        %v1918 = vsel %vm1263, %v1831, -inf
        %1919 = vmax.xlane.f32.xlu0 %v1918
        %v1920 = vpop.xlane.xlu0 %1919
        %v1921 = vsel %vm1263, %v1909, -inf
        %1922 = vmax.xlane.f32.xlu0 %v1921
        %v1923 = vpop.xlane.xlu0 %1922
        %v1924 = vsub.f32 %v1675, %v1914
        %v1925 = vsub.f32 %v1753, %v1917
        %v1926 = vsub.f32 %v1831, %v1920
        %v1927 = vsub.f32 %v1909, %v1923
        %v1928 = vmul.f32 %v1924, 1.442695
        %v1929 = vpow.pop %v1928
        %v1930 = vmul.f32 %v1925, 1.442695
        %v1931 = vpow.pop %v1930
        %v1932 = vmul.f32 %v1926, 1.442695
        %v1933 = vpow.pop %v1932
        %v1934 = vmul.f32 %v1927, 1.442695
        %v1935 = vpow.pop %v1934
        %v1936 = vsel %vm1263, %v1929, 0.0
        %1937 = vadd.xlane.f32.xlu0 %v1936
        %v1938 = vpop.xlane.xlu0 %1937
        %v1939 = vsel %vm1263, %v1931, 0.0
        %1940 = vadd.xlane.f32.xlu0 %v1939
        %v1941 = vpop.xlane.xlu0 %1940
        %v1942 = vsel %vm1263, %v1933, 0.0
        %1943 = vadd.xlane.f32.xlu0 %v1942
        %v1944 = vpop.xlane.xlu0 %1943
        %v1945 = vsel %vm1263, %v1935, 0.0
        %1946 = vadd.xlane.f32.xlu0 %v1945
        %v1947 = vpop.xlane.xlu0 %1946
        %v1948 = vrcp.pop %v1938
        %v1949 = vrcp.pop %v1941
        %v1950 = vrcp.pop %v1944
        %v1951 = vrcp.pop %v1947
        %v1952 = vmul.f32 %v1929, %v1948
        %v1953 = vmul.f32 %v1931, %v1949
        %v1954 = vmul.f32 %v1933, %v1950
        %v1955 = vmul.f32 %v1935, %v1951
        %1957 = vrot.lane.b32.xlu0 %v916, 96
        %v1958 = vpop.permute.xlu0 %1957
        %v1961 = vsel %vm1263, %v1952, 0
        %1963 = vmatprep.subr.mxu0 0.0
        %1964 = vmatpush1.msra.mxu0 %v1958
        %1965 = vmatprep.subr.mxu0 0.0
        %1966 = vmatpush1.msra.mxu0 0.0
        %1967 = vmatprep.subr.mxu0 0.0
        %1968 = vmatpush1.msra.mxu0 0.0
        %1969 = vmatprep.subr.mxu0 0.0
        %1970 = vmatpush1.msra.mxu0 0.0
        %1971 = vmatprep.subr.mxu0 0.0
        %1972 = vmatpush1.msra.mxu0 0.0
        %1973 = vmatprep.subr.mxu0 0.0
        %1974 = vmatpush1.msra.mxu0 0.0
        %1975 = vmatprep.subr.mxu0 0.0
        %1976 = vmatpush1.msra.mxu0 0.0
        %1977 = vmatprep.subr.mxu0 0.0
        %1978 = vmatpush1.msra.mxu0 0.0
        %1979 = vmatprep.subr.mxu0 0.0
        %1980 = vmatpush1.msra.mxu0 0.0
        %1981 = vmatprep.subr.mxu0 0.0
        %1982 = vmatpush1.msra.mxu0 0.0
        %1983 = vmatprep.subr.mxu0 0.0
        %1984 = vmatpush1.msra.mxu0 0.0
        %1985 = vmatprep.subr.mxu0 0.0
        %1986 = vmatpush1.msra.mxu0 0.0
        %1987 = vmatprep.subr.mxu0 0.0
        %1988 = vmatpush1.msra.mxu0 0.0
        %1989 = vmatprep.subr.mxu0 0.0
        %1990 = vmatpush1.msra.mxu0 0.0
        %1991 = vmatprep.subr.mxu0 0.0
        %1992 = vmatpush1.msra.mxu0 0.0
        %1993 = vmatprep.subr.mxu0 0.0
        %1994 = vmatpush1.msra.mxu0 0.0
        %1995 = vmatprep.subr.mxu0 0.0
        %1996 = vmatpush1.msra.mxu0 0.0
        %1997 = vmatprep.subr.mxu0 0.0
        %1998 = vmatpush1.msra.mxu0 0.0
        %1999 = vmatprep.subr.mxu0 0.0
        %2000 = vmatpush1.msra.mxu0 0.0
        %2001 = vmatprep.subr.mxu0 0.0
        %2002 = vmatpush1.msra.mxu0 0.0
        %2003 = vmatprep.subr.mxu0 0.0
        %2004 = vmatpush1.msra.mxu0 0.0
        %2005 = vmatprep.subr.mxu0 0.0
        %2006 = vmatpush1.msra.mxu0 0.0
        %2007 = vmatprep.subr.mxu0 0.0
        %2008 = vmatpush1.msra.mxu0 0.0
        %2009 = vmatprep.subr.mxu0 0.0
        %2010 = vmatpush1.msra.mxu0 0.0
        %2011 = vmatprep.subr.mxu0 0.0
        %2012 = vmatpush1.msra.mxu0 0.0
        %2013 = vmatprep.subr.mxu0 0.0
        %2014 = vmatpush1.msra.mxu0 0.0
        %2015 = vmatprep.subr.mxu0 0.0
        %2016 = vmatpush1.msra.mxu0 0.0
        %2017 = vmatprep.subr.mxu0 0.0
        %2018 = vmatpush1.msra.mxu0 0.0
        %2019 = vmatprep.subr.mxu0 0.0
        %2020 = vmatpush1.msra.mxu0 0.0
        %2021 = vmatprep.subr.mxu0 0.0
        %2022 = vmatpush1.msra.mxu0 0.0
        %2023 = vmatprep.subr.mxu0 0.0
        %2024 = vmatpush1.msra.mxu0 0.0
        %2025 = vmatprep.subr.mxu0 0.0
        %2026 = vmatpush1.msra.mxu0 0.0
        %2027 = vmatprep.mubr.f32.mxu0 0.0
        %2028 = vmatmul.mubr.f32.gmra.mrb[0].mxu0 %v1961
        %v2029 = vpop.f32.mrb[0].mxu0
        %v2030 = vadd.f32 0.0, %v2029
        %v2031 = vpop.f32.mrb[0].mxu0
        %2032 = vdwg.mxu0
        %2034 = vrot.lane.b32.xlu0 %v921, 96
        %v2035 = vpop.permute.xlu0 %2034
        %v2038 = vsel %vm1263, %v1953, 0
        %2040 = vmatprep.subr.mxu0 0.0
        %2041 = vmatpush1.msra.mxu0 %v2035
        %2042 = vmatprep.subr.mxu0 0.0
        %2043 = vmatpush1.msra.mxu0 0.0
        %2044 = vmatprep.subr.mxu0 0.0
        %2045 = vmatpush1.msra.mxu0 0.0
        %2046 = vmatprep.subr.mxu0 0.0
        %2047 = vmatpush1.msra.mxu0 0.0
        %2048 = vmatprep.subr.mxu0 0.0
        %2049 = vmatpush1.msra.mxu0 0.0
        %2050 = vmatprep.subr.mxu0 0.0
        %2051 = vmatpush1.msra.mxu0 0.0
        %2052 = vmatprep.subr.mxu0 0.0
        %2053 = vmatpush1.msra.mxu0 0.0
        %2054 = vmatprep.subr.mxu0 0.0
        %2055 = vmatpush1.msra.mxu0 0.0
        %2056 = vmatprep.subr.mxu0 0.0
        %2057 = vmatpush1.msra.mxu0 0.0
        %2058 = vmatprep.subr.mxu0 0.0
        %2059 = vmatpush1.msra.mxu0 0.0
        %2060 = vmatprep.subr.mxu0 0.0
        %2061 = vmatpush1.msra.mxu0 0.0
        %2062 = vmatprep.subr.mxu0 0.0
        %2063 = vmatpush1.msra.mxu0 0.0
        %2064 = vmatprep.subr.mxu0 0.0
        %2065 = vmatpush1.msra.mxu0 0.0
        %2066 = vmatprep.subr.mxu0 0.0
        %2067 = vmatpush1.msra.mxu0 0.0
        %2068 = vmatprep.subr.mxu0 0.0
        %2069 = vmatpush1.msra.mxu0 0.0
        %2070 = vmatprep.subr.mxu0 0.0
        %2071 = vmatpush1.msra.mxu0 0.0
        %2072 = vmatprep.subr.mxu0 0.0
        %2073 = vmatpush1.msra.mxu0 0.0
        %2074 = vmatprep.subr.mxu0 0.0
        %2075 = vmatpush1.msra.mxu0 0.0
        %2076 = vmatprep.subr.mxu0 0.0
        %2077 = vmatpush1.msra.mxu0 0.0
        %2078 = vmatprep.subr.mxu0 0.0
        %2079 = vmatpush1.msra.mxu0 0.0
        %2080 = vmatprep.subr.mxu0 0.0
        %2081 = vmatpush1.msra.mxu0 0.0
        %2082 = vmatprep.subr.mxu0 0.0
        %2083 = vmatpush1.msra.mxu0 0.0
        %2084 = vmatprep.subr.mxu0 0.0
        %2085 = vmatpush1.msra.mxu0 0.0
        %2086 = vmatprep.subr.mxu0 0.0
        %2087 = vmatpush1.msra.mxu0 0.0
        %2088 = vmatprep.subr.mxu0 0.0
        %2089 = vmatpush1.msra.mxu0 0.0
        %2090 = vmatprep.subr.mxu0 0.0
        %2091 = vmatpush1.msra.mxu0 0.0
        %2092 = vmatprep.subr.mxu0 0.0
        %2093 = vmatpush1.msra.mxu0 0.0
        %2094 = vmatprep.subr.mxu0 0.0
        %2095 = vmatpush1.msra.mxu0 0.0
        %2096 = vmatprep.subr.mxu0 0.0
        %2097 = vmatpush1.msra.mxu0 0.0
        %2098 = vmatprep.subr.mxu0 0.0
        %2099 = vmatpush1.msra.mxu0 0.0
        %2100 = vmatprep.subr.mxu0 0.0
        %2101 = vmatpush1.msra.mxu0 0.0
        %2102 = vmatprep.subr.mxu0 0.0
        %2103 = vmatpush1.msra.mxu0 0.0
        %2104 = vmatprep.mubr.f32.mxu0 0.0
        %2105 = vmatmul.mubr.f32.gmra.mrb[0].mxu0 %v2038
        %v2106 = vpop.f32.mrb[0].mxu0
        %v2107 = vadd.f32 0.0, %v2106
        %v2108 = vpop.f32.mrb[0].mxu0
        %2109 = vdwg.mxu0
        %2111 = vrot.lane.b32.xlu0 %v926, 96
        %v2112 = vpop.permute.xlu0 %2111
        %v2115 = vsel %vm1263, %v1954, 0
        %2117 = vmatprep.subr.mxu0 0.0
        %2118 = vmatpush1.msra.mxu0 %v2112
        %2119 = vmatprep.subr.mxu0 0.0
        %2120 = vmatpush1.msra.mxu0 0.0
        %2121 = vmatprep.subr.mxu0 0.0
        %2122 = vmatpush1.msra.mxu0 0.0
        %2123 = vmatprep.subr.mxu0 0.0
        %2124 = vmatpush1.msra.mxu0 0.0
        %2125 = vmatprep.subr.mxu0 0.0
        %2126 = vmatpush1.msra.mxu0 0.0
        %2127 = vmatprep.subr.mxu0 0.0
        %2128 = vmatpush1.msra.mxu0 0.0
        %2129 = vmatprep.subr.mxu0 0.0
        %2130 = vmatpush1.msra.mxu0 0.0
        %2131 = vmatprep.subr.mxu0 0.0
        %2132 = vmatpush1.msra.mxu0 0.0
        %2133 = vmatprep.subr.mxu0 0.0
        %2134 = vmatpush1.msra.mxu0 0.0
        %2135 = vmatprep.subr.mxu0 0.0
        %2136 = vmatpush1.msra.mxu0 0.0
        %2137 = vmatprep.subr.mxu0 0.0
        %2138 = vmatpush1.msra.mxu0 0.0
        %2139 = vmatprep.subr.mxu0 0.0
        %2140 = vmatpush1.msra.mxu0 0.0
        %2141 = vmatprep.subr.mxu0 0.0
        %2142 = vmatpush1.msra.mxu0 0.0
        %2143 = vmatprep.subr.mxu0 0.0
        %2144 = vmatpush1.msra.mxu0 0.0
        %2145 = vmatprep.subr.mxu0 0.0
        %2146 = vmatpush1.msra.mxu0 0.0
        %2147 = vmatprep.subr.mxu0 0.0
        %2148 = vmatpush1.msra.mxu0 0.0
        %2149 = vmatprep.subr.mxu0 0.0
        %2150 = vmatpush1.msra.mxu0 0.0
        %2151 = vmatprep.subr.mxu0 0.0
        %2152 = vmatpush1.msra.mxu0 0.0
        %2153 = vmatprep.subr.mxu0 0.0
        %2154 = vmatpush1.msra.mxu0 0.0
        %2155 = vmatprep.subr.mxu0 0.0
        %2156 = vmatpush1.msra.mxu0 0.0
        %2157 = vmatprep.subr.mxu0 0.0
        %2158 = vmatpush1.msra.mxu0 0.0
        %2159 = vmatprep.subr.mxu0 0.0
        %2160 = vmatpush1.msra.mxu0 0.0
        %2161 = vmatprep.subr.mxu0 0.0
        %2162 = vmatpush1.msra.mxu0 0.0
        %2163 = vmatprep.subr.mxu0 0.0
        %2164 = vmatpush1.msra.mxu0 0.0
        %2165 = vmatprep.subr.mxu0 0.0
        %2166 = vmatpush1.msra.mxu0 0.0
        %2167 = vmatprep.subr.mxu0 0.0
        %2168 = vmatpush1.msra.mxu0 0.0
        %2169 = vmatprep.subr.mxu0 0.0
        %2170 = vmatpush1.msra.mxu0 0.0
        %2171 = vmatprep.subr.mxu0 0.0
        %2172 = vmatpush1.msra.mxu0 0.0
        %2173 = vmatprep.subr.mxu0 0.0
        %2174 = vmatpush1.msra.mxu0 0.0
        %2175 = vmatprep.subr.mxu0 0.0
        %2176 = vmatpush1.msra.mxu0 0.0
        %2177 = vmatprep.subr.mxu0 0.0
        %2178 = vmatpush1.msra.mxu0 0.0
        %2179 = vmatprep.subr.mxu0 0.0
        %2180 = vmatpush1.msra.mxu0 0.0
        %2181 = vmatprep.mubr.f32.mxu0 0.0
        %2182 = vmatmul.mubr.f32.gmra.mrb[0].mxu0 %v2115
        %v2183 = vpop.f32.mrb[0].mxu0
        %v2184 = vadd.f32 0.0, %v2183
        %v2185 = vpop.f32.mrb[0].mxu0
        %2186 = vdwg.mxu0
        %2188 = vrot.lane.b32.xlu0 %v931, 96
        %v2189 = vpop.permute.xlu0 %2188
        %v2192 = vsel %vm1263, %v1955, 0
        %2194 = vmatprep.subr.mxu0 0.0
        %2195 = vmatpush1.msra.mxu0 %v2189
        %2196 = vmatprep.subr.mxu0 0.0
        %2197 = vmatpush1.msra.mxu0 0.0
        %2198 = vmatprep.subr.mxu0 0.0
        %2199 = vmatpush1.msra.mxu0 0.0
        %2200 = vmatprep.subr.mxu0 0.0
        %2201 = vmatpush1.msra.mxu0 0.0
        %2202 = vmatprep.subr.mxu0 0.0
        %2203 = vmatpush1.msra.mxu0 0.0
        %2204 = vmatprep.subr.mxu0 0.0
        %2205 = vmatpush1.msra.mxu0 0.0
        %2206 = vmatprep.subr.mxu0 0.0
        %2207 = vmatpush1.msra.mxu0 0.0
        %2208 = vmatprep.subr.mxu0 0.0
        %2209 = vmatpush1.msra.mxu0 0.0
        %2210 = vmatprep.subr.mxu0 0.0
        %2211 = vmatpush1.msra.mxu0 0.0
        %2212 = vmatprep.subr.mxu0 0.0
        %2213 = vmatpush1.msra.mxu0 0.0
        %2214 = vmatprep.subr.mxu0 0.0
        %2215 = vmatpush1.msra.mxu0 0.0
        %2216 = vmatprep.subr.mxu0 0.0
        %2217 = vmatpush1.msra.mxu0 0.0
        %2218 = vmatprep.subr.mxu0 0.0
        %2219 = vmatpush1.msra.mxu0 0.0
        %2220 = vmatprep.subr.mxu0 0.0
        %2221 = vmatpush1.msra.mxu0 0.0
        %2222 = vmatprep.subr.mxu0 0.0
        %2223 = vmatpush1.msra.mxu0 0.0
        %2224 = vmatprep.subr.mxu0 0.0
        %2225 = vmatpush1.msra.mxu0 0.0
        %2226 = vmatprep.subr.mxu0 0.0
        %2227 = vmatpush1.msra.mxu0 0.0
        %2228 = vmatprep.subr.mxu0 0.0
        %2229 = vmatpush1.msra.mxu0 0.0
        %2230 = vmatprep.subr.mxu0 0.0
        %2231 = vmatpush1.msra.mxu0 0.0
        %2232 = vmatprep.subr.mxu0 0.0
        %2233 = vmatpush1.msra.mxu0 0.0
        %2234 = vmatprep.subr.mxu0 0.0
        %2235 = vmatpush1.msra.mxu0 0.0
        %2236 = vmatprep.subr.mxu0 0.0
        %2237 = vmatpush1.msra.mxu0 0.0
        %2238 = vmatprep.subr.mxu0 0.0
        %2239 = vmatpush1.msra.mxu0 0.0
        %2240 = vmatprep.subr.mxu0 0.0
        %2241 = vmatpush1.msra.mxu0 0.0
        %2242 = vmatprep.subr.mxu0 0.0
        %2243 = vmatpush1.msra.mxu0 0.0
        %2244 = vmatprep.subr.mxu0 0.0
        %2245 = vmatpush1.msra.mxu0 0.0
        %2246 = vmatprep.subr.mxu0 0.0
        %2247 = vmatpush1.msra.mxu0 0.0
        %2248 = vmatprep.subr.mxu0 0.0
        %2249 = vmatpush1.msra.mxu0 0.0
        %2250 = vmatprep.subr.mxu0 0.0
        %2251 = vmatpush1.msra.mxu0 0.0
        %2252 = vmatprep.subr.mxu0 0.0
        %2253 = vmatpush1.msra.mxu0 0.0
        %2254 = vmatprep.subr.mxu0 0.0
        %2255 = vmatpush1.msra.mxu0 0.0
        %2256 = vmatprep.subr.mxu0 0.0
        %2257 = vmatpush1.msra.mxu0 0.0
        %2258 = vmatprep.mubr.f32.mxu0 0.0
        %2259 = vmatmul.mubr.f32.gmra.mrb[0].mxu0 %v2192
        %v2260 = vpop.f32.mrb[0].mxu0
        %v2261 = vadd.f32 0.0, %v2260
        %v2262 = vpop.f32.mrb[0].mxu0
        %2263 = vdwg.mxu0
        %2264 = vrot.lane.b32.xlu0 %v827, 64
        %v2265 = vpop.permute.xlu0 %2264
        %2266 = vrot.lane.b32.xlu0 %v829, 64
        %v2267 = vpop.permute.xlu0 %2266
        %v2268 = vsel %vm958, %v2265, 0
        %v2270 = vsel %vm958, %v2267, 0
        %2272 = vmatprep.subr.mxu0 0.0
        %2273 = vmatpush1.xpose.msra.mxu0 %v2270
        %2274 = vmatprep.subr.mxu0 0.0
        %2275 = vmatpush1.xpose.msra.mxu0 0.0
        %2276 = vmatprep.subr.mxu0 0.0
        %2277 = vmatpush1.xpose.msra.mxu0 0.0
        %2278 = vmatprep.subr.mxu0 0.0
        %2279 = vmatpush1.xpose.msra.mxu0 0.0
        %2280 = vmatprep.subr.mxu0 0.0
        %2281 = vmatpush1.xpose.msra.mxu0 0.0
        %2282 = vmatprep.subr.mxu0 0.0
        %2283 = vmatpush1.xpose.msra.mxu0 0.0
        %2284 = vmatprep.subr.mxu0 0.0
        %2285 = vmatpush1.xpose.msra.mxu0 0.0
        %2286 = vmatprep.subr.mxu0 0.0
        %2287 = vmatpush1.xpose.msra.mxu0 0.0
        %2288 = vmatprep.subr.mxu0 0.0
        %2289 = vmatpush1.xpose.msra.mxu0 0.0
        %2290 = vmatprep.subr.mxu0 0.0
        %2291 = vmatpush1.xpose.msra.mxu0 0.0
        %2292 = vmatprep.subr.mxu0 0.0
        %2293 = vmatpush1.xpose.msra.mxu0 0.0
        %2294 = vmatprep.subr.mxu0 0.0
        %2295 = vmatpush1.xpose.msra.mxu0 0.0
        %2296 = vmatprep.subr.mxu0 0.0
        %2297 = vmatpush1.xpose.msra.mxu0 0.0
        %2298 = vmatprep.subr.mxu0 0.0
        %2299 = vmatpush1.xpose.msra.mxu0 0.0
        %2300 = vmatprep.subr.mxu0 0.0
        %2301 = vmatpush1.xpose.msra.mxu0 0.0
        %2302 = vmatprep.subr.mxu0 0.0
        %2303 = vmatpush1.xpose.msra.mxu0 0.0
        %2304 = vmatprep.subr.mxu0 0.0
        %2305 = vmatpush1.xpose.msra.mxu0 0.0
        %2306 = vmatprep.subr.mxu0 0.0
        %2307 = vmatpush1.xpose.msra.mxu0 0.0
        %2308 = vmatprep.subr.mxu0 0.0
        %2309 = vmatpush1.xpose.msra.mxu0 0.0
        %2310 = vmatprep.subr.mxu0 0.0
        %2311 = vmatpush1.xpose.msra.mxu0 0.0
        %2312 = vmatprep.subr.mxu0 0.0
        %2313 = vmatpush1.xpose.msra.mxu0 0.0
        %2314 = vmatprep.subr.mxu0 0.0
        %2315 = vmatpush1.xpose.msra.mxu0 0.0
        %2316 = vmatprep.subr.mxu0 0.0
        %2317 = vmatpush1.xpose.msra.mxu0 0.0
        %2318 = vmatprep.subr.mxu0 0.0
        %2319 = vmatpush1.xpose.msra.mxu0 0.0
        %2320 = vmatprep.subr.mxu0 0.0
        %2321 = vmatpush1.xpose.msra.mxu0 0.0
        %2322 = vmatprep.subr.mxu0 0.0
        %2323 = vmatpush1.xpose.msra.mxu0 0.0
        %2324 = vmatprep.subr.mxu0 0.0
        %2325 = vmatpush1.xpose.msra.mxu0 0.0
        %2326 = vmatprep.subr.mxu0 0.0
        %2327 = vmatpush1.xpose.msra.mxu0 0.0
        %2328 = vmatprep.subr.mxu0 0.0
        %2329 = vmatpush1.xpose.msra.mxu0 0.0
        %2330 = vmatprep.subr.mxu0 0.0
        %2331 = vmatpush1.xpose.msra.mxu0 0.0
        %2332 = vmatprep.subr.mxu0 0.0
        %2333 = vmatpush1.xpose.msra.mxu0 0.0
        %2334 = vmatprep.subr.mxu0 0.0
        %2335 = vmatpush1.xpose.msra.mxu0 0.0
        %2336 = vmatprep.mubr.f32.mxu0 0.0
        %2337 = vmatmul.mubr.f32.gmra.mrb[0].mxu0 %v2268
        %v2338 = vpop.f32.mrb[0].mxu0
        %v2339 = vadd.f32 %v941, %v2338
        %v2340 = vpop.f32.mrb[0].mxu0
        %2341 = vdwg.mxu0
        %2342 = vrot.lane.b32.xlu0 %v833, 64
        %v2343 = vpop.permute.xlu0 %2342
        %2344 = vrot.lane.b32.xlu0 %v835, 64
        %v2345 = vpop.permute.xlu0 %2344
        %v2346 = vsel %vm958, %v2343, 0
        %v2348 = vsel %vm958, %v2345, 0
        %2350 = vmatprep.subr.mxu0 0.0
        %2351 = vmatpush1.xpose.msra.mxu0 %v2348
        %2352 = vmatprep.subr.mxu0 0.0
        %2353 = vmatpush1.xpose.msra.mxu0 0.0
        %2354 = vmatprep.subr.mxu0 0.0
        %2355 = vmatpush1.xpose.msra.mxu0 0.0
        %2356 = vmatprep.subr.mxu0 0.0
        %2357 = vmatpush1.xpose.msra.mxu0 0.0
        %2358 = vmatprep.subr.mxu0 0.0
        %2359 = vmatpush1.xpose.msra.mxu0 0.0
        %2360 = vmatprep.subr.mxu0 0.0
        %2361 = vmatpush1.xpose.msra.mxu0 0.0
        %2362 = vmatprep.subr.mxu0 0.0
        %2363 = vmatpush1.xpose.msra.mxu0 0.0
        %2364 = vmatprep.subr.mxu0 0.0
        %2365 = vmatpush1.xpose.msra.mxu0 0.0
        %2366 = vmatprep.subr.mxu0 0.0
        %2367 = vmatpush1.xpose.msra.mxu0 0.0
        %2368 = vmatprep.subr.mxu0 0.0
        %2369 = vmatpush1.xpose.msra.mxu0 0.0
        %2370 = vmatprep.subr.mxu0 0.0
        %2371 = vmatpush1.xpose.msra.mxu0 0.0
        %2372 = vmatprep.subr.mxu0 0.0
        %2373 = vmatpush1.xpose.msra.mxu0 0.0
        %2374 = vmatprep.subr.mxu0 0.0
        %2375 = vmatpush1.xpose.msra.mxu0 0.0
        %2376 = vmatprep.subr.mxu0 0.0
        %2377 = vmatpush1.xpose.msra.mxu0 0.0
        %2378 = vmatprep.subr.mxu0 0.0
        %2379 = vmatpush1.xpose.msra.mxu0 0.0
        %2380 = vmatprep.subr.mxu0 0.0
        %2381 = vmatpush1.xpose.msra.mxu0 0.0
        %2382 = vmatprep.subr.mxu0 0.0
        %2383 = vmatpush1.xpose.msra.mxu0 0.0
        %2384 = vmatprep.subr.mxu0 0.0
        %2385 = vmatpush1.xpose.msra.mxu0 0.0
        %2386 = vmatprep.subr.mxu0 0.0
        %2387 = vmatpush1.xpose.msra.mxu0 0.0
        %2388 = vmatprep.subr.mxu0 0.0
        %2389 = vmatpush1.xpose.msra.mxu0 0.0
        %2390 = vmatprep.subr.mxu0 0.0
        %2391 = vmatpush1.xpose.msra.mxu0 0.0
        %2392 = vmatprep.subr.mxu0 0.0
        %2393 = vmatpush1.xpose.msra.mxu0 0.0
        %2394 = vmatprep.subr.mxu0 0.0
        %2395 = vmatpush1.xpose.msra.mxu0 0.0
        %2396 = vmatprep.subr.mxu0 0.0
        %2397 = vmatpush1.xpose.msra.mxu0 0.0
        %2398 = vmatprep.subr.mxu0 0.0
        %2399 = vmatpush1.xpose.msra.mxu0 0.0
        %2400 = vmatprep.subr.mxu0 0.0
        %2401 = vmatpush1.xpose.msra.mxu0 0.0
        %2402 = vmatprep.subr.mxu0 0.0
        %2403 = vmatpush1.xpose.msra.mxu0 0.0
        %2404 = vmatprep.subr.mxu0 0.0
        %2405 = vmatpush1.xpose.msra.mxu0 0.0
        %2406 = vmatprep.subr.mxu0 0.0
        %2407 = vmatpush1.xpose.msra.mxu0 0.0
        %2408 = vmatprep.subr.mxu0 0.0
        %2409 = vmatpush1.xpose.msra.mxu0 0.0
        %2410 = vmatprep.subr.mxu0 0.0
        %2411 = vmatpush1.xpose.msra.mxu0 0.0
        %2412 = vmatprep.subr.mxu0 0.0
        %2413 = vmatpush1.xpose.msra.mxu0 0.0
        %2414 = vmatprep.mubr.f32.mxu0 0.0
        %2415 = vmatmul.mubr.f32.gmra.mrb[0].mxu0 %v2346
        %v2416 = vpop.f32.mrb[0].mxu0
        %v2417 = vadd.f32 %v945, %v2416
        %v2418 = vpop.f32.mrb[0].mxu0
        %2419 = vdwg.mxu0
        %2420 = vrot.lane.b32.xlu0 %v839, 64
        %v2421 = vpop.permute.xlu0 %2420
        %2422 = vrot.lane.b32.xlu0 %v841, 64
        %v2423 = vpop.permute.xlu0 %2422
        %v2424 = vsel %vm958, %v2421, 0
        %v2426 = vsel %vm958, %v2423, 0
        %2428 = vmatprep.subr.mxu0 0.0
        %2429 = vmatpush1.xpose.msra.mxu0 %v2426
        %2430 = vmatprep.subr.mxu0 0.0
        %2431 = vmatpush1.xpose.msra.mxu0 0.0
        %2432 = vmatprep.subr.mxu0 0.0
        %2433 = vmatpush1.xpose.msra.mxu0 0.0
        %2434 = vmatprep.subr.mxu0 0.0
        %2435 = vmatpush1.xpose.msra.mxu0 0.0
        %2436 = vmatprep.subr.mxu0 0.0
        %2437 = vmatpush1.xpose.msra.mxu0 0.0
        %2438 = vmatprep.subr.mxu0 0.0
        %2439 = vmatpush1.xpose.msra.mxu0 0.0
        %2440 = vmatprep.subr.mxu0 0.0
        %2441 = vmatpush1.xpose.msra.mxu0 0.0
        %2442 = vmatprep.subr.mxu0 0.0
        %2443 = vmatpush1.xpose.msra.mxu0 0.0
        %2444 = vmatprep.subr.mxu0 0.0
        %2445 = vmatpush1.xpose.msra.mxu0 0.0
        %2446 = vmatprep.subr.mxu0 0.0
        %2447 = vmatpush1.xpose.msra.mxu0 0.0
        %2448 = vmatprep.subr.mxu0 0.0
        %2449 = vmatpush1.xpose.msra.mxu0 0.0
        %2450 = vmatprep.subr.mxu0 0.0
        %2451 = vmatpush1.xpose.msra.mxu0 0.0
        %2452 = vmatprep.subr.mxu0 0.0
        %2453 = vmatpush1.xpose.msra.mxu0 0.0
        %2454 = vmatprep.subr.mxu0 0.0
        %2455 = vmatpush1.xpose.msra.mxu0 0.0
        %2456 = vmatprep.subr.mxu0 0.0
        %2457 = vmatpush1.xpose.msra.mxu0 0.0
        %2458 = vmatprep.subr.mxu0 0.0
        %2459 = vmatpush1.xpose.msra.mxu0 0.0
        %2460 = vmatprep.subr.mxu0 0.0
        %2461 = vmatpush1.xpose.msra.mxu0 0.0
        %2462 = vmatprep.subr.mxu0 0.0
        %2463 = vmatpush1.xpose.msra.mxu0 0.0
        %2464 = vmatprep.subr.mxu0 0.0
        %2465 = vmatpush1.xpose.msra.mxu0 0.0
        %2466 = vmatprep.subr.mxu0 0.0
        %2467 = vmatpush1.xpose.msra.mxu0 0.0
        %2468 = vmatprep.subr.mxu0 0.0
        %2469 = vmatpush1.xpose.msra.mxu0 0.0
        %2470 = vmatprep.subr.mxu0 0.0
        %2471 = vmatpush1.xpose.msra.mxu0 0.0
        %2472 = vmatprep.subr.mxu0 0.0
        %2473 = vmatpush1.xpose.msra.mxu0 0.0
        %2474 = vmatprep.subr.mxu0 0.0
        %2475 = vmatpush1.xpose.msra.mxu0 0.0
        %2476 = vmatprep.subr.mxu0 0.0
        %2477 = vmatpush1.xpose.msra.mxu0 0.0
        %2478 = vmatprep.subr.mxu0 0.0
        %2479 = vmatpush1.xpose.msra.mxu0 0.0
        %2480 = vmatprep.subr.mxu0 0.0
        %2481 = vmatpush1.xpose.msra.mxu0 0.0
        %2482 = vmatprep.subr.mxu0 0.0
        %2483 = vmatpush1.xpose.msra.mxu0 0.0
        %2484 = vmatprep.subr.mxu0 0.0
        %2485 = vmatpush1.xpose.msra.mxu0 0.0
        %2486 = vmatprep.subr.mxu0 0.0
        %2487 = vmatpush1.xpose.msra.mxu0 0.0
        %2488 = vmatprep.subr.mxu0 0.0
        %2489 = vmatpush1.xpose.msra.mxu0 0.0
        %2490 = vmatprep.subr.mxu0 0.0
        %2491 = vmatpush1.xpose.msra.mxu0 0.0
        %2492 = vmatprep.mubr.f32.mxu0 0.0
        %2493 = vmatmul.mubr.f32.gmra.mrb[0].mxu0 %v2424
        %v2494 = vpop.f32.mrb[0].mxu0
        %v2495 = vadd.f32 %v949, %v2494
        %v2496 = vpop.f32.mrb[0].mxu0
        %2497 = vdwg.mxu0
        %2498 = vrot.lane.b32.xlu0 %v845, 64
        %v2499 = vpop.permute.xlu0 %2498
        %2500 = vrot.lane.b32.xlu0 %v847, 64
        %v2501 = vpop.permute.xlu0 %2500
        %v2502 = vsel %vm958, %v2499, 0
        %v2504 = vsel %vm958, %v2501, 0
        %2506 = vmatprep.subr.mxu0 0.0
        %2507 = vmatpush1.xpose.msra.mxu0 %v2504
        %2508 = vmatprep.subr.mxu0 0.0
        %2509 = vmatpush1.xpose.msra.mxu0 0.0
        %2510 = vmatprep.subr.mxu0 0.0
        %2511 = vmatpush1.xpose.msra.mxu0 0.0
        %2512 = vmatprep.subr.mxu0 0.0
        %2513 = vmatpush1.xpose.msra.mxu0 0.0
        %2514 = vmatprep.subr.mxu0 0.0
        %2515 = vmatpush1.xpose.msra.mxu0 0.0
        %2516 = vmatprep.subr.mxu0 0.0
        %2517 = vmatpush1.xpose.msra.mxu0 0.0
        %2518 = vmatprep.subr.mxu0 0.0
        %2519 = vmatpush1.xpose.msra.mxu0 0.0
        %2520 = vmatprep.subr.mxu0 0.0
        %2521 = vmatpush1.xpose.msra.mxu0 0.0
        %2522 = vmatprep.subr.mxu0 0.0
        %2523 = vmatpush1.xpose.msra.mxu0 0.0
        %2524 = vmatprep.subr.mxu0 0.0
        %2525 = vmatpush1.xpose.msra.mxu0 0.0
        %2526 = vmatprep.subr.mxu0 0.0
        %2527 = vmatpush1.xpose.msra.mxu0 0.0
        %2528 = vmatprep.subr.mxu0 0.0
        %2529 = vmatpush1.xpose.msra.mxu0 0.0
        %2530 = vmatprep.subr.mxu0 0.0
        %2531 = vmatpush1.xpose.msra.mxu0 0.0
        %2532 = vmatprep.subr.mxu0 0.0
        %2533 = vmatpush1.xpose.msra.mxu0 0.0
        %2534 = vmatprep.subr.mxu0 0.0
        %2535 = vmatpush1.xpose.msra.mxu0 0.0
        %2536 = vmatprep.subr.mxu0 0.0
        %2537 = vmatpush1.xpose.msra.mxu0 0.0
        %2538 = vmatprep.subr.mxu0 0.0
        %2539 = vmatpush1.xpose.msra.mxu0 0.0
        %2540 = vmatprep.subr.mxu0 0.0
        %2541 = vmatpush1.xpose.msra.mxu0 0.0
        %2542 = vmatprep.subr.mxu0 0.0
        %2543 = vmatpush1.xpose.msra.mxu0 0.0
        %2544 = vmatprep.subr.mxu0 0.0
        %2545 = vmatpush1.xpose.msra.mxu0 0.0
        %2546 = vmatprep.subr.mxu0 0.0
        %2547 = vmatpush1.xpose.msra.mxu0 0.0
        %2548 = vmatprep.subr.mxu0 0.0
        %2549 = vmatpush1.xpose.msra.mxu0 0.0
        %2550 = vmatprep.subr.mxu0 0.0
        %2551 = vmatpush1.xpose.msra.mxu0 0.0
        %2552 = vmatprep.subr.mxu0 0.0
        %2553 = vmatpush1.xpose.msra.mxu0 0.0
        %2554 = vmatprep.subr.mxu0 0.0
        %2555 = vmatpush1.xpose.msra.mxu0 0.0
        %2556 = vmatprep.subr.mxu0 0.0
        %2557 = vmatpush1.xpose.msra.mxu0 0.0
        %2558 = vmatprep.subr.mxu0 0.0
        %2559 = vmatpush1.xpose.msra.mxu0 0.0
        %2560 = vmatprep.subr.mxu0 0.0
        %2561 = vmatpush1.xpose.msra.mxu0 0.0
        %2562 = vmatprep.subr.mxu0 0.0
        %2563 = vmatpush1.xpose.msra.mxu0 0.0
        %2564 = vmatprep.subr.mxu0 0.0
        %2565 = vmatpush1.xpose.msra.mxu0 0.0
        %2566 = vmatprep.subr.mxu0 0.0
        %2567 = vmatpush1.xpose.msra.mxu0 0.0
        %2568 = vmatprep.subr.mxu0 0.0
        %2569 = vmatpush1.xpose.msra.mxu0 0.0
        %2570 = vmatprep.mubr.f32.mxu0 0.0
        %2571 = vmatmul.mubr.f32.gmra.mrb[0].mxu0 %v2502
        %v2572 = vpop.f32.mrb[0].mxu0
        %v2573 = vadd.f32 %v953, %v2572
        %v2574 = vpop.f32.mrb[0].mxu0
        %2575 = vdwg.mxu0
        %v2576 = vsel %vm1263, %v2339, -inf
        %2577 = vmax.xlane.f32.xlu0 %v2576
        %v2578 = vpop.xlane.xlu0 %2577
        %v2579 = vsel %vm1263, %v2417, -inf
        %2580 = vmax.xlane.f32.xlu0 %v2579
        %v2581 = vpop.xlane.xlu0 %2580
        %v2582 = vsel %vm1263, %v2495, -inf
        %2583 = vmax.xlane.f32.xlu0 %v2582
        %v2584 = vpop.xlane.xlu0 %2583
        %v2585 = vsel %vm1263, %v2573, -inf
        %2586 = vmax.xlane.f32.xlu0 %v2585
        %v2587 = vpop.xlane.xlu0 %2586
        %v2588 = vsub.f32 %v2339, %v2578
        %v2589 = vsub.f32 %v2417, %v2581
        %v2590 = vsub.f32 %v2495, %v2584
        %v2591 = vsub.f32 %v2573, %v2587
        %v2592 = vmul.f32 %v2588, 1.442695
        %v2593 = vpow.pop %v2592
        %v2594 = vmul.f32 %v2589, 1.442695
        %v2595 = vpow.pop %v2594
        %v2596 = vmul.f32 %v2590, 1.442695
        %v2597 = vpow.pop %v2596
        %v2598 = vmul.f32 %v2591, 1.442695
        %v2599 = vpow.pop %v2598
        %v2600 = vsel %vm1263, %v2593, 0.0
        %2601 = vadd.xlane.f32.xlu0 %v2600
        %v2602 = vpop.xlane.xlu0 %2601
        %v2603 = vsel %vm1263, %v2595, 0.0
        %2604 = vadd.xlane.f32.xlu0 %v2603
        %v2605 = vpop.xlane.xlu0 %2604
        %v2606 = vsel %vm1263, %v2597, 0.0
        %2607 = vadd.xlane.f32.xlu0 %v2606
        %v2608 = vpop.xlane.xlu0 %2607
        %v2609 = vsel %vm1263, %v2599, 0.0
        %2610 = vadd.xlane.f32.xlu0 %v2609
        %v2611 = vpop.xlane.xlu0 %2610
        %v2612 = vrcp.pop %v2602
        %v2613 = vrcp.pop %v2605
        %v2614 = vrcp.pop %v2608
        %v2615 = vrcp.pop %v2611
        %v2616 = vmul.f32 %v2593, %v2612
        %v2617 = vmul.f32 %v2595, %v2613
        %v2618 = vmul.f32 %v2597, %v2614
        %v2619 = vmul.f32 %v2599, %v2615
        %2620 = vrot.lane.b32.xlu0 %v916, 64
        %v2621 = vpop.permute.xlu0 %2620
        %v2624 = vsel %vm1263, %v2616, 0
        %2626 = vmatprep.subr.mxu0 0.0
        %2627 = vmatpush1.msra.mxu0 %v2621
        %2628 = vmatprep.subr.mxu0 0.0
        %2629 = vmatpush1.msra.mxu0 0.0
        %2630 = vmatprep.subr.mxu0 0.0
        %2631 = vmatpush1.msra.mxu0 0.0
        %2632 = vmatprep.subr.mxu0 0.0
        %2633 = vmatpush1.msra.mxu0 0.0
        %2634 = vmatprep.subr.mxu0 0.0
        %2635 = vmatpush1.msra.mxu0 0.0
        %2636 = vmatprep.subr.mxu0 0.0
        %2637 = vmatpush1.msra.mxu0 0.0
        %2638 = vmatprep.subr.mxu0 0.0
        %2639 = vmatpush1.msra.mxu0 0.0
        %2640 = vmatprep.subr.mxu0 0.0
        %2641 = vmatpush1.msra.mxu0 0.0
        %2642 = vmatprep.subr.mxu0 0.0
        %2643 = vmatpush1.msra.mxu0 0.0
        %2644 = vmatprep.subr.mxu0 0.0
        %2645 = vmatpush1.msra.mxu0 0.0
        %2646 = vmatprep.subr.mxu0 0.0
        %2647 = vmatpush1.msra.mxu0 0.0
        %2648 = vmatprep.subr.mxu0 0.0
        %2649 = vmatpush1.msra.mxu0 0.0
        %2650 = vmatprep.subr.mxu0 0.0
        %2651 = vmatpush1.msra.mxu0 0.0
        %2652 = vmatprep.subr.mxu0 0.0
        %2653 = vmatpush1.msra.mxu0 0.0
        %2654 = vmatprep.subr.mxu0 0.0
        %2655 = vmatpush1.msra.mxu0 0.0
        %2656 = vmatprep.subr.mxu0 0.0
        %2657 = vmatpush1.msra.mxu0 0.0
        %2658 = vmatprep.subr.mxu0 0.0
        %2659 = vmatpush1.msra.mxu0 0.0
        %2660 = vmatprep.subr.mxu0 0.0
        %2661 = vmatpush1.msra.mxu0 0.0
        %2662 = vmatprep.subr.mxu0 0.0
        %2663 = vmatpush1.msra.mxu0 0.0
        %2664 = vmatprep.subr.mxu0 0.0
        %2665 = vmatpush1.msra.mxu0 0.0
        %2666 = vmatprep.subr.mxu0 0.0
        %2667 = vmatpush1.msra.mxu0 0.0
        %2668 = vmatprep.subr.mxu0 0.0
        %2669 = vmatpush1.msra.mxu0 0.0
        %2670 = vmatprep.subr.mxu0 0.0
        %2671 = vmatpush1.msra.mxu0 0.0
        %2672 = vmatprep.subr.mxu0 0.0
        %2673 = vmatpush1.msra.mxu0 0.0
        %2674 = vmatprep.subr.mxu0 0.0
        %2675 = vmatpush1.msra.mxu0 0.0
        %2676 = vmatprep.subr.mxu0 0.0
        %2677 = vmatpush1.msra.mxu0 0.0
        %2678 = vmatprep.subr.mxu0 0.0
        %2679 = vmatpush1.msra.mxu0 0.0
        %2680 = vmatprep.subr.mxu0 0.0
        %2681 = vmatpush1.msra.mxu0 0.0
        %2682 = vmatprep.subr.mxu0 0.0
        %2683 = vmatpush1.msra.mxu0 0.0
        %2684 = vmatprep.subr.mxu0 0.0
        %2685 = vmatpush1.msra.mxu0 0.0
        %2686 = vmatprep.subr.mxu0 0.0
        %2687 = vmatpush1.msra.mxu0 0.0
        %2688 = vmatprep.subr.mxu0 0.0
        %2689 = vmatpush1.msra.mxu0 0.0
        %2690 = vmatprep.mubr.f32.mxu0 0.0
        %2691 = vmatmul.mubr.f32.gmra.mrb[0].mxu0 %v2624
        %v2692 = vpop.f32.mrb[0].mxu0
        %v2693 = vadd.f32 0.0, %v2692
        %v2694 = vpop.f32.mrb[0].mxu0
        %2695 = vdwg.mxu0
        %2696 = vrot.lane.b32.xlu0 %v921, 64
        %v2697 = vpop.permute.xlu0 %2696
        %v2700 = vsel %vm1263, %v2617, 0
        %2702 = vmatprep.subr.mxu0 0.0
        %2703 = vmatpush1.msra.mxu0 %v2697
        %2704 = vmatprep.subr.mxu0 0.0
        %2705 = vmatpush1.msra.mxu0 0.0
        %2706 = vmatprep.subr.mxu0 0.0
        %2707 = vmatpush1.msra.mxu0 0.0
        %2708 = vmatprep.subr.mxu0 0.0
        %2709 = vmatpush1.msra.mxu0 0.0
        %2710 = vmatprep.subr.mxu0 0.0
        %2711 = vmatpush1.msra.mxu0 0.0
        %2712 = vmatprep.subr.mxu0 0.0
        %2713 = vmatpush1.msra.mxu0 0.0
        %2714 = vmatprep.subr.mxu0 0.0
        %2715 = vmatpush1.msra.mxu0 0.0
        %2716 = vmatprep.subr.mxu0 0.0
        %2717 = vmatpush1.msra.mxu0 0.0
        %2718 = vmatprep.subr.mxu0 0.0
        %2719 = vmatpush1.msra.mxu0 0.0
        %2720 = vmatprep.subr.mxu0 0.0
        %2721 = vmatpush1.msra.mxu0 0.0
        %2722 = vmatprep.subr.mxu0 0.0
        %2723 = vmatpush1.msra.mxu0 0.0
        %2724 = vmatprep.subr.mxu0 0.0
        %2725 = vmatpush1.msra.mxu0 0.0
        %2726 = vmatprep.subr.mxu0 0.0
        %2727 = vmatpush1.msra.mxu0 0.0
        %2728 = vmatprep.subr.mxu0 0.0
        %2729 = vmatpush1.msra.mxu0 0.0
        %2730 = vmatprep.subr.mxu0 0.0
        %2731 = vmatpush1.msra.mxu0 0.0
        %2732 = vmatprep.subr.mxu0 0.0
        %2733 = vmatpush1.msra.mxu0 0.0
        %2734 = vmatprep.subr.mxu0 0.0
        %2735 = vmatpush1.msra.mxu0 0.0
        %2736 = vmatprep.subr.mxu0 0.0
        %2737 = vmatpush1.msra.mxu0 0.0
        %2738 = vmatprep.subr.mxu0 0.0
        %2739 = vmatpush1.msra.mxu0 0.0
        %2740 = vmatprep.subr.mxu0 0.0
        %2741 = vmatpush1.msra.mxu0 0.0
        %2742 = vmatprep.subr.mxu0 0.0
        %2743 = vmatpush1.msra.mxu0 0.0
        %2744 = vmatprep.subr.mxu0 0.0
        %2745 = vmatpush1.msra.mxu0 0.0
        %2746 = vmatprep.subr.mxu0 0.0
        %2747 = vmatpush1.msra.mxu0 0.0
        %2748 = vmatprep.subr.mxu0 0.0
        %2749 = vmatpush1.msra.mxu0 0.0
        %2750 = vmatprep.subr.mxu0 0.0
        %2751 = vmatpush1.msra.mxu0 0.0
        %2752 = vmatprep.subr.mxu0 0.0
        %2753 = vmatpush1.msra.mxu0 0.0
        %2754 = vmatprep.subr.mxu0 0.0
        %2755 = vmatpush1.msra.mxu0 0.0
        %2756 = vmatprep.subr.mxu0 0.0
        %2757 = vmatpush1.msra.mxu0 0.0
        %2758 = vmatprep.subr.mxu0 0.0
        %2759 = vmatpush1.msra.mxu0 0.0
        %2760 = vmatprep.subr.mxu0 0.0
        %2761 = vmatpush1.msra.mxu0 0.0
        %2762 = vmatprep.subr.mxu0 0.0
        %2763 = vmatpush1.msra.mxu0 0.0
        %2764 = vmatprep.subr.mxu0 0.0
        %2765 = vmatpush1.msra.mxu0 0.0
        %2766 = vmatprep.mubr.f32.mxu0 0.0
        %2767 = vmatmul.mubr.f32.gmra.mrb[0].mxu0 %v2700
        %v2768 = vpop.f32.mrb[0].mxu0
        %v2769 = vadd.f32 0.0, %v2768
        %v2770 = vpop.f32.mrb[0].mxu0
        %2771 = vdwg.mxu0
        %2772 = vrot.lane.b32.xlu0 %v926, 64
        %v2773 = vpop.permute.xlu0 %2772
        %v2776 = vsel %vm1263, %v2618, 0
        %2778 = vmatprep.subr.mxu0 0.0
        %2779 = vmatpush1.msra.mxu0 %v2773
        %2780 = vmatprep.subr.mxu0 0.0
        %2781 = vmatpush1.msra.mxu0 0.0
        %2782 = vmatprep.subr.mxu0 0.0
        %2783 = vmatpush1.msra.mxu0 0.0
        %2784 = vmatprep.subr.mxu0 0.0
        %2785 = vmatpush1.msra.mxu0 0.0
        %2786 = vmatprep.subr.mxu0 0.0
        %2787 = vmatpush1.msra.mxu0 0.0
        %2788 = vmatprep.subr.mxu0 0.0
        %2789 = vmatpush1.msra.mxu0 0.0
        %2790 = vmatprep.subr.mxu0 0.0
        %2791 = vmatpush1.msra.mxu0 0.0
        %2792 = vmatprep.subr.mxu0 0.0
        %2793 = vmatpush1.msra.mxu0 0.0
        %2794 = vmatprep.subr.mxu0 0.0
        %2795 = vmatpush1.msra.mxu0 0.0
        %2796 = vmatprep.subr.mxu0 0.0
        %2797 = vmatpush1.msra.mxu0 0.0
        %2798 = vmatprep.subr.mxu0 0.0
        %2799 = vmatpush1.msra.mxu0 0.0
        %2800 = vmatprep.subr.mxu0 0.0
        %2801 = vmatpush1.msra.mxu0 0.0
        %2802 = vmatprep.subr.mxu0 0.0
        %2803 = vmatpush1.msra.mxu0 0.0
        %2804 = vmatprep.subr.mxu0 0.0
        %2805 = vmatpush1.msra.mxu0 0.0
        %2806 = vmatprep.subr.mxu0 0.0
        %2807 = vmatpush1.msra.mxu0 0.0
        %2808 = vmatprep.subr.mxu0 0.0
        %2809 = vmatpush1.msra.mxu0 0.0
        %2810 = vmatprep.subr.mxu0 0.0
        %2811 = vmatpush1.msra.mxu0 0.0
        %2812 = vmatprep.subr.mxu0 0.0
        %2813 = vmatpush1.msra.mxu0 0.0
        %2814 = vmatprep.subr.mxu0 0.0
        %2815 = vmatpush1.msra.mxu0 0.0
        %2816 = vmatprep.subr.mxu0 0.0
        %2817 = vmatpush1.msra.mxu0 0.0
        %2818 = vmatprep.subr.mxu0 0.0
        %2819 = vmatpush1.msra.mxu0 0.0
        %2820 = vmatprep.subr.mxu0 0.0
        %2821 = vmatpush1.msra.mxu0 0.0
        %2822 = vmatprep.subr.mxu0 0.0
        %2823 = vmatpush1.msra.mxu0 0.0
        %2824 = vmatprep.subr.mxu0 0.0
        %2825 = vmatpush1.msra.mxu0 0.0
        %2826 = vmatprep.subr.mxu0 0.0
        %2827 = vmatpush1.msra.mxu0 0.0
        %2828 = vmatprep.subr.mxu0 0.0
        %2829 = vmatpush1.msra.mxu0 0.0
        %2830 = vmatprep.subr.mxu0 0.0
        %2831 = vmatpush1.msra.mxu0 0.0
        %2832 = vmatprep.subr.mxu0 0.0
        %2833 = vmatpush1.msra.mxu0 0.0
        %2834 = vmatprep.subr.mxu0 0.0
        %2835 = vmatpush1.msra.mxu0 0.0
        %2836 = vmatprep.subr.mxu0 0.0
        %2837 = vmatpush1.msra.mxu0 0.0
        %2838 = vmatprep.subr.mxu0 0.0
        %2839 = vmatpush1.msra.mxu0 0.0
        %2840 = vmatprep.subr.mxu0 0.0
        %2841 = vmatpush1.msra.mxu0 0.0
        %2842 = vmatprep.mubr.f32.mxu0 0.0
        %2843 = vmatmul.mubr.f32.gmra.mrb[0].mxu0 %v2776
        %v2844 = vpop.f32.mrb[0].mxu0
        %v2845 = vadd.f32 0.0, %v2844
        %v2846 = vpop.f32.mrb[0].mxu0
        %2847 = vdwg.mxu0
        %2848 = vrot.lane.b32.xlu0 %v931, 64
        %v2849 = vpop.permute.xlu0 %2848
        %v2852 = vsel %vm1263, %v2619, 0
        %2854 = vmatprep.subr.mxu0 0.0
        %2855 = vmatpush1.msra.mxu0 %v2849
        %2856 = vmatprep.subr.mxu0 0.0
        %2857 = vmatpush1.msra.mxu0 0.0
        %2858 = vmatprep.subr.mxu0 0.0
        %2859 = vmatpush1.msra.mxu0 0.0
        %2860 = vmatprep.subr.mxu0 0.0
        %2861 = vmatpush1.msra.mxu0 0.0
        %2862 = vmatprep.subr.mxu0 0.0
        %2863 = vmatpush1.msra.mxu0 0.0
        %2864 = vmatprep.subr.mxu0 0.0
        %2865 = vmatpush1.msra.mxu0 0.0
        %2866 = vmatprep.subr.mxu0 0.0
        %2867 = vmatpush1.msra.mxu0 0.0
        %2868 = vmatprep.subr.mxu0 0.0
        %2869 = vmatpush1.msra.mxu0 0.0
        %2870 = vmatprep.subr.mxu0 0.0
        %2871 = vmatpush1.msra.mxu0 0.0
        %2872 = vmatprep.subr.mxu0 0.0
        %2873 = vmatpush1.msra.mxu0 0.0
        %2874 = vmatprep.subr.mxu0 0.0
        %2875 = vmatpush1.msra.mxu0 0.0
        %2876 = vmatprep.subr.mxu0 0.0
        %2877 = vmatpush1.msra.mxu0 0.0
        %2878 = vmatprep.subr.mxu0 0.0
        %2879 = vmatpush1.msra.mxu0 0.0
        %2880 = vmatprep.subr.mxu0 0.0
        %2881 = vmatpush1.msra.mxu0 0.0
        %2882 = vmatprep.subr.mxu0 0.0
        %2883 = vmatpush1.msra.mxu0 0.0
        %2884 = vmatprep.subr.mxu0 0.0
        %2885 = vmatpush1.msra.mxu0 0.0
        %2886 = vmatprep.subr.mxu0 0.0
        %2887 = vmatpush1.msra.mxu0 0.0
        %2888 = vmatprep.subr.mxu0 0.0
        %2889 = vmatpush1.msra.mxu0 0.0
        %2890 = vmatprep.subr.mxu0 0.0
        %2891 = vmatpush1.msra.mxu0 0.0
        %2892 = vmatprep.subr.mxu0 0.0
        %2893 = vmatpush1.msra.mxu0 0.0
        %2894 = vmatprep.subr.mxu0 0.0
        %2895 = vmatpush1.msra.mxu0 0.0
        %2896 = vmatprep.subr.mxu0 0.0
        %2897 = vmatpush1.msra.mxu0 0.0
        %2898 = vmatprep.subr.mxu0 0.0
        %2899 = vmatpush1.msra.mxu0 0.0
        %2900 = vmatprep.subr.mxu0 0.0
        %2901 = vmatpush1.msra.mxu0 0.0
        %2902 = vmatprep.subr.mxu0 0.0
        %2903 = vmatpush1.msra.mxu0 0.0
        %2904 = vmatprep.subr.mxu0 0.0
        %2905 = vmatpush1.msra.mxu0 0.0
        %2906 = vmatprep.subr.mxu0 0.0
        %2907 = vmatpush1.msra.mxu0 0.0
        %2908 = vmatprep.subr.mxu0 0.0
        %2909 = vmatpush1.msra.mxu0 0.0
        %2910 = vmatprep.subr.mxu0 0.0
        %2911 = vmatpush1.msra.mxu0 0.0
        %2912 = vmatprep.subr.mxu0 0.0
        %2913 = vmatpush1.msra.mxu0 0.0
        %2914 = vmatprep.subr.mxu0 0.0
        %2915 = vmatpush1.msra.mxu0 0.0
        %2916 = vmatprep.subr.mxu0 0.0
        %2917 = vmatpush1.msra.mxu0 0.0
        %2918 = vmatprep.mubr.f32.mxu0 0.0
        %2919 = vmatmul.mubr.f32.gmra.mrb[0].mxu0 %v2852
        %v2920 = vpop.f32.mrb[0].mxu0
        %v2921 = vadd.f32 0.0, %v2920
        %v2922 = vpop.f32.mrb[0].mxu0
        %2923 = vdwg.mxu0
        %2924 = vrot.lane.b32.xlu0 %v827, 32
        %v2925 = vpop.permute.xlu0 %2924
        %2926 = vrot.lane.b32.xlu0 %v829, 32
        %v2927 = vpop.permute.xlu0 %2926
        %v2928 = vsel %vm958, %v2925, 0
        %v2930 = vsel %vm958, %v2927, 0
        %2932 = vmatprep.subr.mxu0 0.0
        %2933 = vmatpush1.xpose.msra.mxu0 %v2930
        %2934 = vmatprep.subr.mxu0 0.0
        %2935 = vmatpush1.xpose.msra.mxu0 0.0
        %2936 = vmatprep.subr.mxu0 0.0
        %2937 = vmatpush1.xpose.msra.mxu0 0.0
        %2938 = vmatprep.subr.mxu0 0.0
        %2939 = vmatpush1.xpose.msra.mxu0 0.0
        %2940 = vmatprep.subr.mxu0 0.0
        %2941 = vmatpush1.xpose.msra.mxu0 0.0
        %2942 = vmatprep.subr.mxu0 0.0
        %2943 = vmatpush1.xpose.msra.mxu0 0.0
        %2944 = vmatprep.subr.mxu0 0.0
        %2945 = vmatpush1.xpose.msra.mxu0 0.0
        %2946 = vmatprep.subr.mxu0 0.0
        %2947 = vmatpush1.xpose.msra.mxu0 0.0
        %2948 = vmatprep.subr.mxu0 0.0
        %2949 = vmatpush1.xpose.msra.mxu0 0.0
        %2950 = vmatprep.subr.mxu0 0.0
        %2951 = vmatpush1.xpose.msra.mxu0 0.0
        %2952 = vmatprep.subr.mxu0 0.0
        %2953 = vmatpush1.xpose.msra.mxu0 0.0
        %2954 = vmatprep.subr.mxu0 0.0
        %2955 = vmatpush1.xpose.msra.mxu0 0.0
        %2956 = vmatprep.subr.mxu0 0.0
        %2957 = vmatpush1.xpose.msra.mxu0 0.0
        %2958 = vmatprep.subr.mxu0 0.0
        %2959 = vmatpush1.xpose.msra.mxu0 0.0
        %2960 = vmatprep.subr.mxu0 0.0
        %2961 = vmatpush1.xpose.msra.mxu0 0.0
        %2962 = vmatprep.subr.mxu0 0.0
        %2963 = vmatpush1.xpose.msra.mxu0 0.0
        %2964 = vmatprep.subr.mxu0 0.0
        %2965 = vmatpush1.xpose.msra.mxu0 0.0
        %2966 = vmatprep.subr.mxu0 0.0
        %2967 = vmatpush1.xpose.msra.mxu0 0.0
        %2968 = vmatprep.subr.mxu0 0.0
        %2969 = vmatpush1.xpose.msra.mxu0 0.0
        %2970 = vmatprep.subr.mxu0 0.0
        %2971 = vmatpush1.xpose.msra.mxu0 0.0
        %2972 = vmatprep.subr.mxu0 0.0
        %2973 = vmatpush1.xpose.msra.mxu0 0.0
        %2974 = vmatprep.subr.mxu0 0.0
        %2975 = vmatpush1.xpose.msra.mxu0 0.0
        %2976 = vmatprep.subr.mxu0 0.0
        %2977 = vmatpush1.xpose.msra.mxu0 0.0
        %2978 = vmatprep.subr.mxu0 0.0
        %2979 = vmatpush1.xpose.msra.mxu0 0.0
        %2980 = vmatprep.subr.mxu0 0.0
        %2981 = vmatpush1.xpose.msra.mxu0 0.0
        %2982 = vmatprep.subr.mxu0 0.0
        %2983 = vmatpush1.xpose.msra.mxu0 0.0
        %2984 = vmatprep.subr.mxu0 0.0
        %2985 = vmatpush1.xpose.msra.mxu0 0.0
        %2986 = vmatprep.subr.mxu0 0.0
        %2987 = vmatpush1.xpose.msra.mxu0 0.0
        %2988 = vmatprep.subr.mxu0 0.0
        %2989 = vmatpush1.xpose.msra.mxu0 0.0
        %2990 = vmatprep.subr.mxu0 0.0
        %2991 = vmatpush1.xpose.msra.mxu0 0.0
        %2992 = vmatprep.subr.mxu0 0.0
        %2993 = vmatpush1.xpose.msra.mxu0 0.0
        %2994 = vmatprep.subr.mxu0 0.0
        %2995 = vmatpush1.xpose.msra.mxu0 0.0
        %2996 = vmatprep.mubr.f32.mxu0 0.0
        %2997 = vmatmul.mubr.f32.gmra.mrb[0].mxu0 %v2928
        %v2998 = vpop.f32.mrb[0].mxu0
        %v2999 = vadd.f32 %v941, %v2998
        %v3000 = vpop.f32.mrb[0].mxu0
        %3001 = vdwg.mxu0
        %3002 = vrot.lane.b32.xlu0 %v833, 32
        %v3003 = vpop.permute.xlu0 %3002
        %3004 = vrot.lane.b32.xlu0 %v835, 32
        %v3005 = vpop.permute.xlu0 %3004
        %v3006 = vsel %vm958, %v3003, 0
        %v3008 = vsel %vm958, %v3005, 0
        %3010 = vmatprep.subr.mxu0 0.0
        %3011 = vmatpush1.xpose.msra.mxu0 %v3008
        %3012 = vmatprep.subr.mxu0 0.0
        %3013 = vmatpush1.xpose.msra.mxu0 0.0
        %3014 = vmatprep.subr.mxu0 0.0
        %3015 = vmatpush1.xpose.msra.mxu0 0.0
        %3016 = vmatprep.subr.mxu0 0.0
        %3017 = vmatpush1.xpose.msra.mxu0 0.0
        %3018 = vmatprep.subr.mxu0 0.0
        %3019 = vmatpush1.xpose.msra.mxu0 0.0
        %3020 = vmatprep.subr.mxu0 0.0
        %3021 = vmatpush1.xpose.msra.mxu0 0.0
        %3022 = vmatprep.subr.mxu0 0.0
        %3023 = vmatpush1.xpose.msra.mxu0 0.0
        %3024 = vmatprep.subr.mxu0 0.0
        %3025 = vmatpush1.xpose.msra.mxu0 0.0
        %3026 = vmatprep.subr.mxu0 0.0
        %3027 = vmatpush1.xpose.msra.mxu0 0.0
        %3028 = vmatprep.subr.mxu0 0.0
        %3029 = vmatpush1.xpose.msra.mxu0 0.0
        %3030 = vmatprep.subr.mxu0 0.0
        %3031 = vmatpush1.xpose.msra.mxu0 0.0
        %3032 = vmatprep.subr.mxu0 0.0
        %3033 = vmatpush1.xpose.msra.mxu0 0.0
        %3034 = vmatprep.subr.mxu0 0.0
        %3035 = vmatpush1.xpose.msra.mxu0 0.0
        %3036 = vmatprep.subr.mxu0 0.0
        %3037 = vmatpush1.xpose.msra.mxu0 0.0
        %3038 = vmatprep.subr.mxu0 0.0
        %3039 = vmatpush1.xpose.msra.mxu0 0.0
        %3040 = vmatprep.subr.mxu0 0.0
        %3041 = vmatpush1.xpose.msra.mxu0 0.0
        %3042 = vmatprep.subr.mxu0 0.0
        %3043 = vmatpush1.xpose.msra.mxu0 0.0
        %3044 = vmatprep.subr.mxu0 0.0
        %3045 = vmatpush1.xpose.msra.mxu0 0.0
        %3046 = vmatprep.subr.mxu0 0.0
        %3047 = vmatpush1.xpose.msra.mxu0 0.0
        %3048 = vmatprep.subr.mxu0 0.0
        %3049 = vmatpush1.xpose.msra.mxu0 0.0
        %3050 = vmatprep.subr.mxu0 0.0
        %3051 = vmatpush1.xpose.msra.mxu0 0.0
        %3052 = vmatprep.subr.mxu0 0.0
        %3053 = vmatpush1.xpose.msra.mxu0 0.0
        %3054 = vmatprep.subr.mxu0 0.0
        %3055 = vmatpush1.xpose.msra.mxu0 0.0
        %3056 = vmatprep.subr.mxu0 0.0
        %3057 = vmatpush1.xpose.msra.mxu0 0.0
        %3058 = vmatprep.subr.mxu0 0.0
        %3059 = vmatpush1.xpose.msra.mxu0 0.0
        %3060 = vmatprep.subr.mxu0 0.0
        %3061 = vmatpush1.xpose.msra.mxu0 0.0
        %3062 = vmatprep.subr.mxu0 0.0
        %3063 = vmatpush1.xpose.msra.mxu0 0.0
        %3064 = vmatprep.subr.mxu0 0.0
        %3065 = vmatpush1.xpose.msra.mxu0 0.0
        %3066 = vmatprep.subr.mxu0 0.0
        %3067 = vmatpush1.xpose.msra.mxu0 0.0
        %3068 = vmatprep.subr.mxu0 0.0
        %3069 = vmatpush1.xpose.msra.mxu0 0.0
        %3070 = vmatprep.subr.mxu0 0.0
        %3071 = vmatpush1.xpose.msra.mxu0 0.0
        %3072 = vmatprep.subr.mxu0 0.0
        %3073 = vmatpush1.xpose.msra.mxu0 0.0
        %3074 = vmatprep.mubr.f32.mxu0 0.0
        %3075 = vmatmul.mubr.f32.gmra.mrb[0].mxu0 %v3006
        %v3076 = vpop.f32.mrb[0].mxu0
        %v3077 = vadd.f32 %v945, %v3076
        %v3078 = vpop.f32.mrb[0].mxu0
        %3079 = vdwg.mxu0
        %3080 = vrot.lane.b32.xlu0 %v839, 32
        %v3081 = vpop.permute.xlu0 %3080
        %3082 = vrot.lane.b32.xlu0 %v841, 32
        %v3083 = vpop.permute.xlu0 %3082
        %v3084 = vsel %vm958, %v3081, 0
        %v3086 = vsel %vm958, %v3083, 0
        %3088 = vmatprep.subr.mxu0 0.0
        %3089 = vmatpush1.xpose.msra.mxu0 %v3086
        %3090 = vmatprep.subr.mxu0 0.0
        %3091 = vmatpush1.xpose.msra.mxu0 0.0
        %3092 = vmatprep.subr.mxu0 0.0
        %3093 = vmatpush1.xpose.msra.mxu0 0.0
        %3094 = vmatprep.subr.mxu0 0.0
        %3095 = vmatpush1.xpose.msra.mxu0 0.0
        %3096 = vmatprep.subr.mxu0 0.0
        %3097 = vmatpush1.xpose.msra.mxu0 0.0
        %3098 = vmatprep.subr.mxu0 0.0
        %3099 = vmatpush1.xpose.msra.mxu0 0.0
        %3100 = vmatprep.subr.mxu0 0.0
        %3101 = vmatpush1.xpose.msra.mxu0 0.0
        %3102 = vmatprep.subr.mxu0 0.0
        %3103 = vmatpush1.xpose.msra.mxu0 0.0
        %3104 = vmatprep.subr.mxu0 0.0
        %3105 = vmatpush1.xpose.msra.mxu0 0.0
        %3106 = vmatprep.subr.mxu0 0.0
        %3107 = vmatpush1.xpose.msra.mxu0 0.0
        %3108 = vmatprep.subr.mxu0 0.0
        %3109 = vmatpush1.xpose.msra.mxu0 0.0
        %3110 = vmatprep.subr.mxu0 0.0
        %3111 = vmatpush1.xpose.msra.mxu0 0.0
        %3112 = vmatprep.subr.mxu0 0.0
        %3113 = vmatpush1.xpose.msra.mxu0 0.0
        %3114 = vmatprep.subr.mxu0 0.0
        %3115 = vmatpush1.xpose.msra.mxu0 0.0
        %3116 = vmatprep.subr.mxu0 0.0
        %3117 = vmatpush1.xpose.msra.mxu0 0.0
        %3118 = vmatprep.subr.mxu0 0.0
        %3119 = vmatpush1.xpose.msra.mxu0 0.0
        %3120 = vmatprep.subr.mxu0 0.0
        %3121 = vmatpush1.xpose.msra.mxu0 0.0
        %3122 = vmatprep.subr.mxu0 0.0
        %3123 = vmatpush1.xpose.msra.mxu0 0.0
        %3124 = vmatprep.subr.mxu0 0.0
        %3125 = vmatpush1.xpose.msra.mxu0 0.0
        %3126 = vmatprep.subr.mxu0 0.0
        %3127 = vmatpush1.xpose.msra.mxu0 0.0
        %3128 = vmatprep.subr.mxu0 0.0
        %3129 = vmatpush1.xpose.msra.mxu0 0.0
        %3130 = vmatprep.subr.mxu0 0.0
        %3131 = vmatpush1.xpose.msra.mxu0 0.0
        %3132 = vmatprep.subr.mxu0 0.0
        %3133 = vmatpush1.xpose.msra.mxu0 0.0
        %3134 = vmatprep.subr.mxu0 0.0
        %3135 = vmatpush1.xpose.msra.mxu0 0.0
        %3136 = vmatprep.subr.mxu0 0.0
        %3137 = vmatpush1.xpose.msra.mxu0 0.0
        %3138 = vmatprep.subr.mxu0 0.0
        %3139 = vmatpush1.xpose.msra.mxu0 0.0
        %3140 = vmatprep.subr.mxu0 0.0
        %3141 = vmatpush1.xpose.msra.mxu0 0.0
        %3142 = vmatprep.subr.mxu0 0.0
        %3143 = vmatpush1.xpose.msra.mxu0 0.0
        %3144 = vmatprep.subr.mxu0 0.0
        %3145 = vmatpush1.xpose.msra.mxu0 0.0
        %3146 = vmatprep.subr.mxu0 0.0
        %3147 = vmatpush1.xpose.msra.mxu0 0.0
        %3148 = vmatprep.subr.mxu0 0.0
        %3149 = vmatpush1.xpose.msra.mxu0 0.0
        %3150 = vmatprep.subr.mxu0 0.0
        %3151 = vmatpush1.xpose.msra.mxu0 0.0
        %3152 = vmatprep.mubr.f32.mxu0 0.0
        %3153 = vmatmul.mubr.f32.gmra.mrb[0].mxu0 %v3084
        %v3154 = vpop.f32.mrb[0].mxu0
        %v3155 = vadd.f32 %v949, %v3154
        %v3156 = vpop.f32.mrb[0].mxu0
        %3157 = vdwg.mxu0
        %3158 = vrot.lane.b32.xlu0 %v845, 32
        %v3159 = vpop.permute.xlu0 %3158
        %3160 = vrot.lane.b32.xlu0 %v847, 32
        %v3161 = vpop.permute.xlu0 %3160
        %v3162 = vsel %vm958, %v3159, 0
        %v3164 = vsel %vm958, %v3161, 0
        %3166 = vmatprep.subr.mxu0 0.0
        %3167 = vmatpush1.xpose.msra.mxu0 %v3164
        %3168 = vmatprep.subr.mxu0 0.0
        %3169 = vmatpush1.xpose.msra.mxu0 0.0
        %3170 = vmatprep.subr.mxu0 0.0
        %3171 = vmatpush1.xpose.msra.mxu0 0.0
        %3172 = vmatprep.subr.mxu0 0.0
        %3173 = vmatpush1.xpose.msra.mxu0 0.0
        %3174 = vmatprep.subr.mxu0 0.0
        %3175 = vmatpush1.xpose.msra.mxu0 0.0
        %3176 = vmatprep.subr.mxu0 0.0
        %3177 = vmatpush1.xpose.msra.mxu0 0.0
        %3178 = vmatprep.subr.mxu0 0.0
        %3179 = vmatpush1.xpose.msra.mxu0 0.0
        %3180 = vmatprep.subr.mxu0 0.0
        %3181 = vmatpush1.xpose.msra.mxu0 0.0
        %3182 = vmatprep.subr.mxu0 0.0
        %3183 = vmatpush1.xpose.msra.mxu0 0.0
        %3184 = vmatprep.subr.mxu0 0.0
        %3185 = vmatpush1.xpose.msra.mxu0 0.0
        %3186 = vmatprep.subr.mxu0 0.0
        %3187 = vmatpush1.xpose.msra.mxu0 0.0
        %3188 = vmatprep.subr.mxu0 0.0
        %3189 = vmatpush1.xpose.msra.mxu0 0.0
        %3190 = vmatprep.subr.mxu0 0.0
        %3191 = vmatpush1.xpose.msra.mxu0 0.0
        %3192 = vmatprep.subr.mxu0 0.0
        %3193 = vmatpush1.xpose.msra.mxu0 0.0
        %3194 = vmatprep.subr.mxu0 0.0
        %3195 = vmatpush1.xpose.msra.mxu0 0.0
        %3196 = vmatprep.subr.mxu0 0.0
        %3197 = vmatpush1.xpose.msra.mxu0 0.0
        %3198 = vmatprep.subr.mxu0 0.0
        %3199 = vmatpush1.xpose.msra.mxu0 0.0
        %3200 = vmatprep.subr.mxu0 0.0
        %3201 = vmatpush1.xpose.msra.mxu0 0.0
        %3202 = vmatprep.subr.mxu0 0.0
        %3203 = vmatpush1.xpose.msra.mxu0 0.0
        %3204 = vmatprep.subr.mxu0 0.0
        %3205 = vmatpush1.xpose.msra.mxu0 0.0
        %3206 = vmatprep.subr.mxu0 0.0
        %3207 = vmatpush1.xpose.msra.mxu0 0.0
        %3208 = vmatprep.subr.mxu0 0.0
        %3209 = vmatpush1.xpose.msra.mxu0 0.0
        %3210 = vmatprep.subr.mxu0 0.0
        %3211 = vmatpush1.xpose.msra.mxu0 0.0
        %3212 = vmatprep.subr.mxu0 0.0
        %3213 = vmatpush1.xpose.msra.mxu0 0.0
        %3214 = vmatprep.subr.mxu0 0.0
        %3215 = vmatpush1.xpose.msra.mxu0 0.0
        %3216 = vmatprep.subr.mxu0 0.0
        %3217 = vmatpush1.xpose.msra.mxu0 0.0
        %3218 = vmatprep.subr.mxu0 0.0
        %3219 = vmatpush1.xpose.msra.mxu0 0.0
        %3220 = vmatprep.subr.mxu0 0.0
        %3221 = vmatpush1.xpose.msra.mxu0 0.0
        %3222 = vmatprep.subr.mxu0 0.0
        %3223 = vmatpush1.xpose.msra.mxu0 0.0
        %3224 = vmatprep.subr.mxu0 0.0
        %3225 = vmatpush1.xpose.msra.mxu0 0.0
        %3226 = vmatprep.subr.mxu0 0.0
        %3227 = vmatpush1.xpose.msra.mxu0 0.0
        %3228 = vmatprep.subr.mxu0 0.0
        %3229 = vmatpush1.xpose.msra.mxu0 0.0
        %3230 = vmatprep.mubr.f32.mxu0 0.0
        %3231 = vmatmul.mubr.f32.gmra.mrb[0].mxu0 %v3162
        %v3232 = vpop.f32.mrb[0].mxu0
        %v3233 = vadd.f32 %v953, %v3232
        %v3234 = vpop.f32.mrb[0].mxu0
        %3235 = vdwg.mxu0
        %v3236 = vsel %vm1263, %v2999, -inf
        %3237 = vmax.xlane.f32.xlu0 %v3236
        %v3238 = vpop.xlane.xlu0 %3237
        %v3239 = vsel %vm1263, %v3077, -inf
        %3240 = vmax.xlane.f32.xlu0 %v3239
        %v3241 = vpop.xlane.xlu0 %3240
        %v3242 = vsel %vm1263, %v3155, -inf
        %3243 = vmax.xlane.f32.xlu0 %v3242
        %v3244 = vpop.xlane.xlu0 %3243
        %v3245 = vsel %vm1263, %v3233, -inf
        %3246 = vmax.xlane.f32.xlu0 %v3245
        %v3247 = vpop.xlane.xlu0 %3246
        %v3248 = vsub.f32 %v2999, %v3238
        %v3249 = vsub.f32 %v3077, %v3241
        %v3250 = vsub.f32 %v3155, %v3244
        %v3251 = vsub.f32 %v3233, %v3247
        %v3252 = vmul.f32 %v3248, 1.442695
        %v3253 = vpow.pop %v3252
        %v3254 = vmul.f32 %v3249, 1.442695
        %v3255 = vpow.pop %v3254
        %v3256 = vmul.f32 %v3250, 1.442695
        %v3257 = vpow.pop %v3256
        %v3258 = vmul.f32 %v3251, 1.442695
        %v3259 = vpow.pop %v3258
        %v3260 = vsel %vm1263, %v3253, 0.0
        %3261 = vadd.xlane.f32.xlu0 %v3260
        %v3262 = vpop.xlane.xlu0 %3261
        %v3263 = vsel %vm1263, %v3255, 0.0
        %3264 = vadd.xlane.f32.xlu0 %v3263
        %v3265 = vpop.xlane.xlu0 %3264
        %v3266 = vsel %vm1263, %v3257, 0.0
        %3267 = vadd.xlane.f32.xlu0 %v3266
        %v3268 = vpop.xlane.xlu0 %3267
        %v3269 = vsel %vm1263, %v3259, 0.0
        %3270 = vadd.xlane.f32.xlu0 %v3269
        %v3271 = vpop.xlane.xlu0 %3270
        %v3272 = vrcp.pop %v3262
        %v3273 = vrcp.pop %v3265
        %v3274 = vrcp.pop %v3268
        %v3275 = vrcp.pop %v3271
        %v3276 = vmul.f32 %v3253, %v3272
        %v3277 = vmul.f32 %v3255, %v3273
        %v3278 = vmul.f32 %v3257, %v3274
        %v3279 = vmul.f32 %v3259, %v3275
        %3280 = vrot.lane.b32.xlu0 %v916, 32
        %v3281 = vpop.permute.xlu0 %3280
        %v3284 = vsel %vm1263, %v3276, 0
        %3286 = vmatprep.subr.mxu0 0.0
        %3287 = vmatpush1.msra.mxu0 %v3281
        %3288 = vmatprep.subr.mxu0 0.0
        %3289 = vmatpush1.msra.mxu0 0.0
        %3290 = vmatprep.subr.mxu0 0.0
        %3291 = vmatpush1.msra.mxu0 0.0
        %3292 = vmatprep.subr.mxu0 0.0
        %3293 = vmatpush1.msra.mxu0 0.0
        %3294 = vmatprep.subr.mxu0 0.0
        %3295 = vmatpush1.msra.mxu0 0.0
        %3296 = vmatprep.subr.mxu0 0.0
        %3297 = vmatpush1.msra.mxu0 0.0
        %3298 = vmatprep.subr.mxu0 0.0
        %3299 = vmatpush1.msra.mxu0 0.0
        %3300 = vmatprep.subr.mxu0 0.0
        %3301 = vmatpush1.msra.mxu0 0.0
        %3302 = vmatprep.subr.mxu0 0.0
        %3303 = vmatpush1.msra.mxu0 0.0
        %3304 = vmatprep.subr.mxu0 0.0
        %3305 = vmatpush1.msra.mxu0 0.0
        %3306 = vmatprep.subr.mxu0 0.0
        %3307 = vmatpush1.msra.mxu0 0.0
        %3308 = vmatprep.subr.mxu0 0.0
        %3309 = vmatpush1.msra.mxu0 0.0
        %3310 = vmatprep.subr.mxu0 0.0
        %3311 = vmatpush1.msra.mxu0 0.0
        %3312 = vmatprep.subr.mxu0 0.0
        %3313 = vmatpush1.msra.mxu0 0.0
        %3314 = vmatprep.subr.mxu0 0.0
        %3315 = vmatpush1.msra.mxu0 0.0
        %3316 = vmatprep.subr.mxu0 0.0
        %3317 = vmatpush1.msra.mxu0 0.0
        %3318 = vmatprep.subr.mxu0 0.0
        %3319 = vmatpush1.msra.mxu0 0.0
        %3320 = vmatprep.subr.mxu0 0.0
        %3321 = vmatpush1.msra.mxu0 0.0
        %3322 = vmatprep.subr.mxu0 0.0
        %3323 = vmatpush1.msra.mxu0 0.0
        %3324 = vmatprep.subr.mxu0 0.0
        %3325 = vmatpush1.msra.mxu0 0.0
        %3326 = vmatprep.subr.mxu0 0.0
        %3327 = vmatpush1.msra.mxu0 0.0
        %3328 = vmatprep.subr.mxu0 0.0
        %3329 = vmatpush1.msra.mxu0 0.0
        %3330 = vmatprep.subr.mxu0 0.0
        %3331 = vmatpush1.msra.mxu0 0.0
        %3332 = vmatprep.subr.mxu0 0.0
        %3333 = vmatpush1.msra.mxu0 0.0
        %3334 = vmatprep.subr.mxu0 0.0
        %3335 = vmatpush1.msra.mxu0 0.0
        %3336 = vmatprep.subr.mxu0 0.0
        %3337 = vmatpush1.msra.mxu0 0.0
        %3338 = vmatprep.subr.mxu0 0.0
        %3339 = vmatpush1.msra.mxu0 0.0
        %3340 = vmatprep.subr.mxu0 0.0
        %3341 = vmatpush1.msra.mxu0 0.0
        %3342 = vmatprep.subr.mxu0 0.0
        %3343 = vmatpush1.msra.mxu0 0.0
        %3344 = vmatprep.subr.mxu0 0.0
        %3345 = vmatpush1.msra.mxu0 0.0
        %3346 = vmatprep.subr.mxu0 0.0
        %3347 = vmatpush1.msra.mxu0 0.0
        %3348 = vmatprep.subr.mxu0 0.0
        %3349 = vmatpush1.msra.mxu0 0.0
        %3350 = vmatprep.mubr.f32.mxu0 0.0
        %3351 = vmatmul.mubr.f32.gmra.mrb[0].mxu0 %v3284
        %v3352 = vpop.f32.mrb[0].mxu0
        %v3353 = vadd.f32 0.0, %v3352
        %v3354 = vpop.f32.mrb[0].mxu0
        %3355 = vdwg.mxu0
        %3356 = vrot.lane.b32.xlu0 %v921, 32
        %v3357 = vpop.permute.xlu0 %3356
        %v3360 = vsel %vm1263, %v3277, 0
        %3362 = vmatprep.subr.mxu0 0.0
        %3363 = vmatpush1.msra.mxu0 %v3357
        %3364 = vmatprep.subr.mxu0 0.0
        %3365 = vmatpush1.msra.mxu0 0.0
        %3366 = vmatprep.subr.mxu0 0.0
        %3367 = vmatpush1.msra.mxu0 0.0
        %3368 = vmatprep.subr.mxu0 0.0
        %3369 = vmatpush1.msra.mxu0 0.0
        %3370 = vmatprep.subr.mxu0 0.0
        %3371 = vmatpush1.msra.mxu0 0.0
        %3372 = vmatprep.subr.mxu0 0.0
        %3373 = vmatpush1.msra.mxu0 0.0
        %3374 = vmatprep.subr.mxu0 0.0
        %3375 = vmatpush1.msra.mxu0 0.0
        %3376 = vmatprep.subr.mxu0 0.0
        %3377 = vmatpush1.msra.mxu0 0.0
        %3378 = vmatprep.subr.mxu0 0.0
        %3379 = vmatpush1.msra.mxu0 0.0
        %3380 = vmatprep.subr.mxu0 0.0
        %3381 = vmatpush1.msra.mxu0 0.0
        %3382 = vmatprep.subr.mxu0 0.0
        %3383 = vmatpush1.msra.mxu0 0.0
        %3384 = vmatprep.subr.mxu0 0.0
        %3385 = vmatpush1.msra.mxu0 0.0
        %3386 = vmatprep.subr.mxu0 0.0
        %3387 = vmatpush1.msra.mxu0 0.0
        %3388 = vmatprep.subr.mxu0 0.0
        %3389 = vmatpush1.msra.mxu0 0.0
        %3390 = vmatprep.subr.mxu0 0.0
        %3391 = vmatpush1.msra.mxu0 0.0
        %3392 = vmatprep.subr.mxu0 0.0
        %3393 = vmatpush1.msra.mxu0 0.0
        %3394 = vmatprep.subr.mxu0 0.0
        %3395 = vmatpush1.msra.mxu0 0.0
        %3396 = vmatprep.subr.mxu0 0.0
        %3397 = vmatpush1.msra.mxu0 0.0
        %3398 = vmatprep.subr.mxu0 0.0
        %3399 = vmatpush1.msra.mxu0 0.0
        %3400 = vmatprep.subr.mxu0 0.0
        %3401 = vmatpush1.msra.mxu0 0.0
        %3402 = vmatprep.subr.mxu0 0.0
        %3403 = vmatpush1.msra.mxu0 0.0
        %3404 = vmatprep.subr.mxu0 0.0
        %3405 = vmatpush1.msra.mxu0 0.0
        %3406 = vmatprep.subr.mxu0 0.0
        %3407 = vmatpush1.msra.mxu0 0.0
        %3408 = vmatprep.subr.mxu0 0.0
        %3409 = vmatpush1.msra.mxu0 0.0
        %3410 = vmatprep.subr.mxu0 0.0
        %3411 = vmatpush1.msra.mxu0 0.0
        %3412 = vmatprep.subr.mxu0 0.0
        %3413 = vmatpush1.msra.mxu0 0.0
        %3414 = vmatprep.subr.mxu0 0.0
        %3415 = vmatpush1.msra.mxu0 0.0
        %3416 = vmatprep.subr.mxu0 0.0
        %3417 = vmatpush1.msra.mxu0 0.0
        %3418 = vmatprep.subr.mxu0 0.0
        %3419 = vmatpush1.msra.mxu0 0.0
        %3420 = vmatprep.subr.mxu0 0.0
        %3421 = vmatpush1.msra.mxu0 0.0
        %3422 = vmatprep.subr.mxu0 0.0
        %3423 = vmatpush1.msra.mxu0 0.0
        %3424 = vmatprep.subr.mxu0 0.0
        %3425 = vmatpush1.msra.mxu0 0.0
        %3426 = vmatprep.mubr.f32.mxu0 0.0
        %3427 = vmatmul.mubr.f32.gmra.mrb[0].mxu0 %v3360
        %v3428 = vpop.f32.mrb[0].mxu0
        %v3429 = vadd.f32 0.0, %v3428
        %v3430 = vpop.f32.mrb[0].mxu0
        %3431 = vdwg.mxu0
        %3432 = vrot.lane.b32.xlu0 %v926, 32
        %v3433 = vpop.permute.xlu0 %3432
        %v3436 = vsel %vm1263, %v3278, 0
        %3438 = vmatprep.subr.mxu0 0.0
        %3439 = vmatpush1.msra.mxu0 %v3433
        %3440 = vmatprep.subr.mxu0 0.0
        %3441 = vmatpush1.msra.mxu0 0.0
        %3442 = vmatprep.subr.mxu0 0.0
        %3443 = vmatpush1.msra.mxu0 0.0
        %3444 = vmatprep.subr.mxu0 0.0
        %3445 = vmatpush1.msra.mxu0 0.0
        %3446 = vmatprep.subr.mxu0 0.0
        %3447 = vmatpush1.msra.mxu0 0.0
        %3448 = vmatprep.subr.mxu0 0.0
        %3449 = vmatpush1.msra.mxu0 0.0
        %3450 = vmatprep.subr.mxu0 0.0
        %3451 = vmatpush1.msra.mxu0 0.0
        %3452 = vmatprep.subr.mxu0 0.0
        %3453 = vmatpush1.msra.mxu0 0.0
        %3454 = vmatprep.subr.mxu0 0.0
        %3455 = vmatpush1.msra.mxu0 0.0
        %3456 = vmatprep.subr.mxu0 0.0
        %3457 = vmatpush1.msra.mxu0 0.0
        %3458 = vmatprep.subr.mxu0 0.0
        %3459 = vmatpush1.msra.mxu0 0.0
        %3460 = vmatprep.subr.mxu0 0.0
        %3461 = vmatpush1.msra.mxu0 0.0
        %3462 = vmatprep.subr.mxu0 0.0
        %3463 = vmatpush1.msra.mxu0 0.0
        %3464 = vmatprep.subr.mxu0 0.0
        %3465 = vmatpush1.msra.mxu0 0.0
        %3466 = vmatprep.subr.mxu0 0.0
        %3467 = vmatpush1.msra.mxu0 0.0
        %3468 = vmatprep.subr.mxu0 0.0
        %3469 = vmatpush1.msra.mxu0 0.0
        %3470 = vmatprep.subr.mxu0 0.0
        %3471 = vmatpush1.msra.mxu0 0.0
        %3472 = vmatprep.subr.mxu0 0.0
        %3473 = vmatpush1.msra.mxu0 0.0
        %3474 = vmatprep.subr.mxu0 0.0
        %3475 = vmatpush1.msra.mxu0 0.0
        %3476 = vmatprep.subr.mxu0 0.0
        %3477 = vmatpush1.msra.mxu0 0.0
        %3478 = vmatprep.subr.mxu0 0.0
        %3479 = vmatpush1.msra.mxu0 0.0
        %3480 = vmatprep.subr.mxu0 0.0
        %3481 = vmatpush1.msra.mxu0 0.0
        %3482 = vmatprep.subr.mxu0 0.0
        %3483 = vmatpush1.msra.mxu0 0.0
        %3484 = vmatprep.subr.mxu0 0.0
        %3485 = vmatpush1.msra.mxu0 0.0
        %3486 = vmatprep.subr.mxu0 0.0
        %3487 = vmatpush1.msra.mxu0 0.0
        %3488 = vmatprep.subr.mxu0 0.0
        %3489 = vmatpush1.msra.mxu0 0.0
        %3490 = vmatprep.subr.mxu0 0.0
        %3491 = vmatpush1.msra.mxu0 0.0
        %3492 = vmatprep.subr.mxu0 0.0
        %3493 = vmatpush1.msra.mxu0 0.0
        %3494 = vmatprep.subr.mxu0 0.0
        %3495 = vmatpush1.msra.mxu0 0.0
        %3496 = vmatprep.subr.mxu0 0.0
        %3497 = vmatpush1.msra.mxu0 0.0
        %3498 = vmatprep.subr.mxu0 0.0
        %3499 = vmatpush1.msra.mxu0 0.0
        %3500 = vmatprep.subr.mxu0 0.0
        %3501 = vmatpush1.msra.mxu0 0.0
        %3502 = vmatprep.mubr.f32.mxu0 0.0
        %3503 = vmatmul.mubr.f32.gmra.mrb[0].mxu0 %v3436
        %v3504 = vpop.f32.mrb[0].mxu0
        %v3505 = vadd.f32 0.0, %v3504
        %v3506 = vpop.f32.mrb[0].mxu0
        %3507 = vdwg.mxu0
        %3508 = vrot.lane.b32.xlu0 %v931, 32
        %v3509 = vpop.permute.xlu0 %3508
        %v3512 = vsel %vm1263, %v3279, 0
        %3514 = vmatprep.subr.mxu0 0.0
        %3515 = vmatpush1.msra.mxu0 %v3509
        %3516 = vmatprep.subr.mxu0 0.0
        %3517 = vmatpush1.msra.mxu0 0.0
        %3518 = vmatprep.subr.mxu0 0.0
        %3519 = vmatpush1.msra.mxu0 0.0
        %3520 = vmatprep.subr.mxu0 0.0
        %3521 = vmatpush1.msra.mxu0 0.0
        %3522 = vmatprep.subr.mxu0 0.0
        %3523 = vmatpush1.msra.mxu0 0.0
        %3524 = vmatprep.subr.mxu0 0.0
        %3525 = vmatpush1.msra.mxu0 0.0
        %3526 = vmatprep.subr.mxu0 0.0
        %3527 = vmatpush1.msra.mxu0 0.0
        %3528 = vmatprep.subr.mxu0 0.0
        %3529 = vmatpush1.msra.mxu0 0.0
        %3530 = vmatprep.subr.mxu0 0.0
        %3531 = vmatpush1.msra.mxu0 0.0
        %3532 = vmatprep.subr.mxu0 0.0
        %3533 = vmatpush1.msra.mxu0 0.0
        %3534 = vmatprep.subr.mxu0 0.0
        %3535 = vmatpush1.msra.mxu0 0.0
        %3536 = vmatprep.subr.mxu0 0.0
        %3537 = vmatpush1.msra.mxu0 0.0
        %3538 = vmatprep.subr.mxu0 0.0
        %3539 = vmatpush1.msra.mxu0 0.0
        %3540 = vmatprep.subr.mxu0 0.0
        %3541 = vmatpush1.msra.mxu0 0.0
        %3542 = vmatprep.subr.mxu0 0.0
        %3543 = vmatpush1.msra.mxu0 0.0
        %3544 = vmatprep.subr.mxu0 0.0
        %3545 = vmatpush1.msra.mxu0 0.0
        %3546 = vmatprep.subr.mxu0 0.0
        %3547 = vmatpush1.msra.mxu0 0.0
        %3548 = vmatprep.subr.mxu0 0.0
        %3549 = vmatpush1.msra.mxu0 0.0
        %3550 = vmatprep.subr.mxu0 0.0
        %3551 = vmatpush1.msra.mxu0 0.0
        %3552 = vmatprep.subr.mxu0 0.0
        %3553 = vmatpush1.msra.mxu0 0.0
        %3554 = vmatprep.subr.mxu0 0.0
        %3555 = vmatpush1.msra.mxu0 0.0
        %3556 = vmatprep.subr.mxu0 0.0
        %3557 = vmatpush1.msra.mxu0 0.0
        %3558 = vmatprep.subr.mxu0 0.0
        %3559 = vmatpush1.msra.mxu0 0.0
        %3560 = vmatprep.subr.mxu0 0.0
        %3561 = vmatpush1.msra.mxu0 0.0
        %3562 = vmatprep.subr.mxu0 0.0
        %3563 = vmatpush1.msra.mxu0 0.0
        %3564 = vmatprep.subr.mxu0 0.0
        %3565 = vmatpush1.msra.mxu0 0.0
        %3566 = vmatprep.subr.mxu0 0.0
        %3567 = vmatpush1.msra.mxu0 0.0
        %3568 = vmatprep.subr.mxu0 0.0
        %3569 = vmatpush1.msra.mxu0 0.0
        %3570 = vmatprep.subr.mxu0 0.0
        %3571 = vmatpush1.msra.mxu0 0.0
        %3572 = vmatprep.subr.mxu0 0.0
        %3573 = vmatpush1.msra.mxu0 0.0
        %3574 = vmatprep.subr.mxu0 0.0
        %3575 = vmatpush1.msra.mxu0 0.0
        %3576 = vmatprep.subr.mxu0 0.0
        %3577 = vmatpush1.msra.mxu0 0.0
        %3578 = vmatprep.mubr.f32.mxu0 0.0
        %3579 = vmatmul.mubr.f32.gmra.mrb[0].mxu0 %v3512
        %v3580 = vpop.f32.mrb[0].mxu0
        %v3581 = vadd.f32 0.0, %v3580
        %v3582 = vpop.f32.mrb[0].mxu0
        %3583 = vdwg.mxu0
        %3588 = vrot.lane.b32.xlu0 %v2030, 32
        %v3589 = vpop.permute.xlu0 %3588
        %3590 = vrot.lane.b32.xlu0 %v2107, 32
        %v3591 = vpop.permute.xlu0 %3590
        %3592 = vrot.lane.b32.xlu0 %v2184, 32
        %v3593 = vpop.permute.xlu0 %3592
        %3594 = vrot.lane.b32.xlu0 %v2261, 32
        %v3595 = vpop.permute.xlu0 %3594
        %3604 = vrot.lane.b32.xlu0 %v2693, 64
        %v3605 = vpop.permute.xlu0 %3604
        %3606 = vrot.lane.b32.xlu0 %v2769, 64
        %v3607 = vpop.permute.xlu0 %3606
        %3608 = vrot.lane.b32.xlu0 %v2845, 64
        %v3609 = vpop.permute.xlu0 %3608
        %3610 = vrot.lane.b32.xlu0 %v2921, 64
        %v3611 = vpop.permute.xlu0 %3610
        %3620 = vrot.lane.b32.xlu0 %v3353, 96
        %v3621 = vpop.permute.xlu0 %3620
        %3622 = vrot.lane.b32.xlu0 %v3429, 96
        %v3623 = vpop.permute.xlu0 %3622
        %3624 = vrot.lane.b32.xlu0 %v3505, 96
        %v3625 = vpop.permute.xlu0 %3624
        %3626 = vrot.lane.b32.xlu0 %v3581, 96
        %v3627 = vpop.permute.xlu0 %3626
        %v3632 = vsel %vm958, %v1378, %v3589
        %v3633 = vsel %vm958, %v1451, %v3591
        %v3634 = vsel %vm958, %v1524, %v3593
        %v3635 = vsel %vm958, %v1597, %v3595
        %vm3636 = vcmask 523264
        %v3637 = vsel %vm3636, %v3632, %v3605
        %v3638 = vsel %vm3636, %v3633, %v3607
        %v3639 = vsel %vm3636, %v3634, %v3609
        %v3640 = vsel %vm3636, %v3635, %v3611
        %vm3641 = vcmask 785408
        %v3642 = vsel %vm3641, %v3637, %v3621
        %v3643 = vsel %vm3641, %v3638, %v3623
        %v3644 = vsel %vm3641, %v3639, %v3625
        %v3645 = vsel %vm3641, %v3640, %v3627
        %v3646 = vld [vmem:[#allocation8] sm:$0xf]
        %v3647 = vld [vmem:[#allocation8 + $0x4] sm:$0xf]
        %v3648 = vld [vmem:[#allocation8 + $0x8] sm:$0xf]
        %v3649 = vld [vmem:[#allocation8 + $0xc] sm:$0xf]
        %v3650 = vld [vmem:[#allocation8 + $0x10] sm:$0xf]
        %v3651 = vld [vmem:[#allocation8 + $0x14] sm:$0xf]
        %v3652 = vld [vmem:[#allocation8 + $0x18] sm:$0xf]
        %v3653 = vld [vmem:[#allocation8 + $0x1c] sm:$0xf]
        %v3654 = vld [vmem:[#allocation8 + $0x20] sm:$0xf]
        %v3655 = vld [vmem:[#allocation8 + $0x24] sm:$0xf]
        %v3656 = vld [vmem:[#allocation8 + $0x28] sm:$0xf]
        %v3657 = vld [vmem:[#allocation8 + $0x2c] sm:$0xf]
        %v3658 = vld [vmem:[#allocation8 + $0x30] sm:$0xf]
        %v3659 = vld [vmem:[#allocation8 + $0x34] sm:$0xf]
        %v3660 = vld [vmem:[#allocation8 + $0x38] sm:$0xf]
        %v3661 = vld [vmem:[#allocation8 + $0x3c] sm:$0xf]
        %v3662 = vunpack.c.l.bf16 %v3646
        %v3663 = vunpack.c.l.bf16 %v3647
        %v3664 = vunpack.c.l.bf16 %v3648
        %v3665 = vunpack.c.l.bf16 %v3649
        %v3666 = vunpack.c.l.bf16 %v3650
        %v3667 = vunpack.c.l.bf16 %v3651
        %v3668 = vunpack.c.l.bf16 %v3652
        %v3669 = vunpack.c.l.bf16 %v3653
        %v3670 = vunpack.c.l.bf16 %v3654
        %v3671 = vunpack.c.l.bf16 %v3655
        %v3672 = vunpack.c.l.bf16 %v3656
        %v3673 = vunpack.c.l.bf16 %v3657
        %v3674 = vunpack.c.l.bf16 %v3658
        %v3675 = vunpack.c.l.bf16 %v3659
        %v3676 = vunpack.c.l.bf16 %v3660
        %v3677 = vunpack.c.l.bf16 %v3661
        %v3678 = vld [vmem:[%s5] sm:$0x1]
        %v3680 = vlaneseq
        %v3681 = vshrl.u32 %v3680, 7
        %v3682 = vsub.s32 0, %v3681
        %v3683 = vrot.slane %v3678, %v3682
        %3685 = vmatprep.subr.mxu0 0.0
        %3686 = vmatpush1.msra.mxu0 %v3662
        %3687 = vmatprep.subr.mxu0 0.0
        %3688 = vmatpush1.msra.mxu0 %v3663
        %3689 = vmatprep.subr.mxu0 0.0
        %3690 = vmatpush1.msra.mxu0 %v3664
        %3691 = vmatprep.subr.mxu0 0.0
        %3692 = vmatpush1.msra.mxu0 %v3665
        %3693 = vmatprep.subr.mxu0 0.0
        %3694 = vmatpush1.msra.mxu0 %v3666
        %3695 = vmatprep.subr.mxu0 0.0
        %3696 = vmatpush1.msra.mxu0 %v3667
        %3697 = vmatprep.subr.mxu0 0.0
        %3698 = vmatpush1.msra.mxu0 %v3668
        %3699 = vmatprep.subr.mxu0 0.0
        %3700 = vmatpush1.msra.mxu0 %v3669
        %3701 = vmatprep.subr.mxu0 0.0
        %3702 = vmatpush1.msra.mxu0 %v3670
        %3703 = vmatprep.subr.mxu0 0.0
        %3704 = vmatpush1.msra.mxu0 %v3671
        %3705 = vmatprep.subr.mxu0 0.0
        %3706 = vmatpush1.msra.mxu0 %v3672
        %3707 = vmatprep.subr.mxu0 0.0
        %3708 = vmatpush1.msra.mxu0 %v3673
        %3709 = vmatprep.subr.mxu0 0.0
        %3710 = vmatpush1.msra.mxu0 %v3674
        %3711 = vmatprep.subr.mxu0 0.0
        %3712 = vmatpush1.msra.mxu0 %v3675
        %3713 = vmatprep.subr.mxu0 0.0
        %3714 = vmatpush1.msra.mxu0 %v3676
        %3715 = vmatprep.subr.mxu0 0.0
        %3716 = vmatpush1.msra.mxu0 %v3677
        %3717 = vmatprep.subr.mxu0 0.0
        %3718 = vmatpush1.msra.mxu0 0.0
        %3719 = vmatprep.subr.mxu0 0.0
        %3720 = vmatpush1.msra.mxu0 0.0
        %3721 = vmatprep.subr.mxu0 0.0
        %3722 = vmatpush1.msra.mxu0 0.0
        %3723 = vmatprep.subr.mxu0 0.0
        %3724 = vmatpush1.msra.mxu0 0.0
        %3725 = vmatprep.subr.mxu0 0.0
        %3726 = vmatpush1.msra.mxu0 0.0
        %3727 = vmatprep.subr.mxu0 0.0
        %3728 = vmatpush1.msra.mxu0 0.0
        %3729 = vmatprep.subr.mxu0 0.0
        %3730 = vmatpush1.msra.mxu0 0.0
        %3731 = vmatprep.subr.mxu0 0.0
        %3732 = vmatpush1.msra.mxu0 0.0
        %3733 = vmatprep.subr.mxu0 0.0
        %3734 = vmatpush1.msra.mxu0 0.0
        %3735 = vmatprep.subr.mxu0 0.0
        %3736 = vmatpush1.msra.mxu0 0.0
        %3737 = vmatprep.subr.mxu0 0.0
        %3738 = vmatpush1.msra.mxu0 0.0
        %3739 = vmatprep.subr.mxu0 0.0
        %3740 = vmatpush1.msra.mxu0 0.0
        %3741 = vmatprep.subr.mxu0 0.0
        %3742 = vmatpush1.msra.mxu0 0.0
        %3743 = vmatprep.subr.mxu0 0.0
        %3744 = vmatpush1.msra.mxu0 0.0
        %3745 = vmatprep.subr.mxu0 0.0
        %3746 = vmatpush1.msra.mxu0 0.0
        %3747 = vmatprep.subr.mxu0 0.0
        %3748 = vmatpush1.msra.mxu0 0.0
        %3749 = vmatprep.mubr.f32.mxu0 0.0
        %3750 = vmatmul.mubr.f32.gmra.mrb[0].mxu0 %v3642
        %v3751 = vpop.f32.mrb[0].mxu0
        %v3752 = vadd.f32 %v3683, %v3751
        %v3753 = vpop.f32.mrb[0].mxu0
        %3754 = vmatprep.mubr.f32.mxu0 0.0
        %3755 = vmatmul.mubr.f32.gmra.mrb[0].mxu0 %v3643
        %v3756 = vpop.f32.mrb[0].mxu0
        %v3757 = vadd.f32 %v3683, %v3756
        %v3758 = vpop.f32.mrb[0].mxu0
        %3759 = vmatprep.mubr.f32.mxu0 0.0
        %3760 = vmatmul.mubr.f32.gmra.mrb[0].mxu0 %v3644
        %v3761 = vpop.f32.mrb[0].mxu0
        %v3762 = vadd.f32 %v3683, %v3761
        %v3763 = vpop.f32.mrb[0].mxu0
        %3764 = vmatprep.mubr.f32.mxu0 0.0
        %3765 = vmatmul.mubr.f32.gmra.mrb[0].mxu0 %v3645
        %v3766 = vpop.f32.mrb[0].mxu0
        %v3767 = vadd.f32 %v3683, %v3766
        %v3768 = vpop.f32.mrb[0].mxu0
        %3769 = vdwg.mxu0
        %v3770 = vadd.f32 %v655, %v3752
        %v3771 = vadd.f32 %v656, %v3757
        %v3772 = vadd.f32 %v657, %v3762
        %v3773 = vadd.f32 %v658, %v3767
        %v3774 = vld [vmem:[%s12] sm:$0x1]
        %v3775 = vld [vmem:[%s13] sm:$0x1]
        %3776 = vadd.xlane.f32.xlu0 %v3770
        %v3777 = vpop.xlane.xlu0 %3776
        %3778 = vadd.xlane.f32.xlu0 %v3771
        %v3779 = vpop.xlane.xlu0 %3778
        %3780 = vadd.xlane.f32.xlu0 %v3772
        %v3781 = vpop.xlane.xlu0 %3780
        %3782 = vadd.xlane.f32.xlu0 %v3773
        %v3783 = vpop.xlane.xlu0 %3782
        %v3784 = vrcp.pop 128.0
        %v3785 = vmul.f32 %v3777, %v3784
        %v3786 = vmul.f32 %v3779, %v3784
        %v3787 = vmul.f32 %v3781, %v3784
        %v3788 = vmul.f32 %v3783, %v3784
        %v3789 = vsub.f32 %v3770, %v3785
        %v3790 = vsub.f32 %v3771, %v3786
        %v3791 = vsub.f32 %v3772, %v3787
        %v3792 = vsub.f32 %v3773, %v3788
        %v3793 = vmul.f32 %v3789, %v3789
        %v3794 = vmul.f32 %v3790, %v3790
        %v3795 = vmul.f32 %v3791, %v3791
        %v3796 = vmul.f32 %v3792, %v3792
        %3797 = vadd.xlane.f32.xlu0 %v3793
        %v3798 = vpop.xlane.xlu0 %3797
        %3799 = vadd.xlane.f32.xlu0 %v3794
        %v3800 = vpop.xlane.xlu0 %3799
        %3801 = vadd.xlane.f32.xlu0 %v3795
        %v3802 = vpop.xlane.xlu0 %3801
        %3803 = vadd.xlane.f32.xlu0 %v3796
        %v3804 = vpop.xlane.xlu0 %3803
        %v3805 = vmul.f32 %v3798, %v3784
        %v3806 = vmul.f32 %v3800, %v3784
        %v3807 = vmul.f32 %v3802, %v3784
        %v3808 = vmul.f32 %v3804, %v3784
        %v3809 = vadd.f32 %v3805, 1e-05
        %v3810 = vadd.f32 %v3806, 1e-05
        %v3811 = vadd.f32 %v3807, 1e-05
        %v3812 = vadd.f32 %v3808, 1e-05
        %v3813 = vrsqrt.pop %v3809
        %v3814 = vrsqrt.pop %v3810
        %v3815 = vrsqrt.pop %v3811
        %v3816 = vrsqrt.pop %v3812
        %v3817 = vmul.f32 %v3789, %v3813
        %v3818 = vmul.f32 %v3790, %v3814
        %v3819 = vmul.f32 %v3791, %v3815
        %v3820 = vmul.f32 %v3792, %v3816
        %v3822 = vlaneseq
        %v3823 = vshrl.u32 %v3822, 7
        %v3824 = vsub.s32 0, %v3823
        %v3825 = vrot.slane %v3774, %v3824
        %v3827 = vmul.f32 %v3817, %v3825
        %v3828 = vmul.f32 %v3818, %v3825
        %v3829 = vmul.f32 %v3819, %v3825
        %v3830 = vmul.f32 %v3820, %v3825
        %v3832 = vlaneseq
        %v3833 = vshrl.u32 %v3832, 7
        %v3834 = vsub.s32 0, %v3833
        %v3835 = vrot.slane %v3775, %v3834
        %v3837 = vadd.f32 %v3827, %v3835
        %v3838 = vadd.f32 %v3828, %v3835
        %v3839 = vadd.f32 %v3829, %v3835
        %v3840 = vadd.f32 %v3830, %v3835
        %v3841 = vld [vmem:[#allocation10] sm:$0xff]
        %v3842 = vld [vmem:[#allocation10 + $0x8] sm:$0xff]
        %v3843 = vld [vmem:[#allocation10 + $0x10] sm:$0xff]
        %v3844 = vld [vmem:[#allocation10 + $0x18] sm:$0xff]
        %v3845 = vld [vmem:[#allocation10 + $0x20] sm:$0xff]
        %v3846 = vld [vmem:[#allocation10 + $0x28] sm:$0xff]
        %v3847 = vld [vmem:[#allocation10 + $0x30] sm:$0xff]
        %v3848 = vld [vmem:[#allocation10 + $0x38] sm:$0xff]
        %v3849 = vld [vmem:[#allocation10 + $0x40] sm:$0xff]
        %v3850 = vld [vmem:[#allocation10 + $0x48] sm:$0xff]
        %v3851 = vld [vmem:[#allocation10 + $0x50] sm:$0xff]
        %v3852 = vld [vmem:[#allocation10 + $0x58] sm:$0xff]
        %v3853 = vld [vmem:[#allocation10 + $0x60] sm:$0xff]
        %v3854 = vld [vmem:[#allocation10 + $0x68] sm:$0xff]
        %v3855 = vld [vmem:[#allocation10 + $0x70] sm:$0xff]
        %v3856 = vld [vmem:[#allocation10 + $0x78] sm:$0xff]
        %v3857 = vunpack.c.l.bf16 %v3841
        %v3858 = vunpack.c.h.bf16 %v3841
        %v3859 = vunpack.c.l.bf16 %v3842
        %v3860 = vunpack.c.h.bf16 %v3842
        %v3861 = vunpack.c.l.bf16 %v3843
        %v3862 = vunpack.c.h.bf16 %v3843
        %v3863 = vunpack.c.l.bf16 %v3844
        %v3864 = vunpack.c.h.bf16 %v3844
        %v3865 = vunpack.c.l.bf16 %v3845
        %v3866 = vunpack.c.h.bf16 %v3845
        %v3867 = vunpack.c.l.bf16 %v3846
        %v3868 = vunpack.c.h.bf16 %v3846
        %v3869 = vunpack.c.l.bf16 %v3847
        %v3870 = vunpack.c.h.bf16 %v3847
        %v3871 = vunpack.c.l.bf16 %v3848
        %v3872 = vunpack.c.h.bf16 %v3848
        %v3873 = vunpack.c.l.bf16 %v3849
        %v3874 = vunpack.c.h.bf16 %v3849
        %v3875 = vunpack.c.l.bf16 %v3850
        %v3876 = vunpack.c.h.bf16 %v3850
        %v3877 = vunpack.c.l.bf16 %v3851
        %v3878 = vunpack.c.h.bf16 %v3851
        %v3879 = vunpack.c.l.bf16 %v3852
        %v3880 = vunpack.c.h.bf16 %v3852
        %v3881 = vunpack.c.l.bf16 %v3853
        %v3882 = vunpack.c.h.bf16 %v3853
        %v3883 = vunpack.c.l.bf16 %v3854
        %v3884 = vunpack.c.h.bf16 %v3854
        %v3885 = vunpack.c.l.bf16 %v3855
        %v3886 = vunpack.c.h.bf16 %v3855
        %v3887 = vunpack.c.l.bf16 %v3856
        %v3888 = vunpack.c.h.bf16 %v3856
        %v3889 = vld [vmem:[%s7] sm:$0x3]
        %v3891 = vlaneseq
        %v3892 = vshrl.u32 %v3891, 7
        %v3893 = vsub.s32 0, %v3892
        %v3894 = vrot.slane %v3889, %v3893
        %v3895 = vlaneseq
        %v3896 = vshrl.u32 %v3895, 7
        %v3897 = vsub.s32 1, %v3896
        %v3898 = vrot.slane %v3889, %v3897
        %3901 = vmatprep.subr.mxu0 %v3858
        %3902 = vmatpush1.msra.mxu0 %v3857
        %3903 = vmatprep.subr.mxu0 %v3860
        %3904 = vmatpush1.msra.mxu0 %v3859
        %3905 = vmatprep.subr.mxu0 %v3862
        %3906 = vmatpush1.msra.mxu0 %v3861
        %3907 = vmatprep.subr.mxu0 %v3864
        %3908 = vmatpush1.msra.mxu0 %v3863
        %3909 = vmatprep.subr.mxu0 %v3866
        %3910 = vmatpush1.msra.mxu0 %v3865
        %3911 = vmatprep.subr.mxu0 %v3868
        %3912 = vmatpush1.msra.mxu0 %v3867
        %3913 = vmatprep.subr.mxu0 %v3870
        %3914 = vmatpush1.msra.mxu0 %v3869
        %3915 = vmatprep.subr.mxu0 %v3872
        %3916 = vmatpush1.msra.mxu0 %v3871
        %3917 = vmatprep.subr.mxu0 %v3874
        %3918 = vmatpush1.msra.mxu0 %v3873
        %3919 = vmatprep.subr.mxu0 %v3876
        %3920 = vmatpush1.msra.mxu0 %v3875
        %3921 = vmatprep.subr.mxu0 %v3878
        %3922 = vmatpush1.msra.mxu0 %v3877
        %3923 = vmatprep.subr.mxu0 %v3880
        %3924 = vmatpush1.msra.mxu0 %v3879
        %3925 = vmatprep.subr.mxu0 %v3882
        %3926 = vmatpush1.msra.mxu0 %v3881
        %3927 = vmatprep.subr.mxu0 %v3884
        %3928 = vmatpush1.msra.mxu0 %v3883
        %3929 = vmatprep.subr.mxu0 %v3886
        %3930 = vmatpush1.msra.mxu0 %v3885
        %3931 = vmatprep.subr.mxu0 %v3888
        %3932 = vmatpush1.msra.mxu0 %v3887
        %3933 = vmatprep.subr.mxu0 0.0
        %3934 = vmatpush1.msra.mxu0 0.0
        %3935 = vmatprep.subr.mxu0 0.0
        %3936 = vmatpush1.msra.mxu0 0.0
        %3937 = vmatprep.subr.mxu0 0.0
        %3938 = vmatpush1.msra.mxu0 0.0
        %3939 = vmatprep.subr.mxu0 0.0
        %3940 = vmatpush1.msra.mxu0 0.0
        %3941 = vmatprep.subr.mxu0 0.0
        %3942 = vmatpush1.msra.mxu0 0.0
        %3943 = vmatprep.subr.mxu0 0.0
        %3944 = vmatpush1.msra.mxu0 0.0
        %3945 = vmatprep.subr.mxu0 0.0
        %3946 = vmatpush1.msra.mxu0 0.0
        %3947 = vmatprep.subr.mxu0 0.0
        %3948 = vmatpush1.msra.mxu0 0.0
        %3949 = vmatprep.subr.mxu0 0.0
        %3950 = vmatpush1.msra.mxu0 0.0
        %3951 = vmatprep.subr.mxu0 0.0
        %3952 = vmatpush1.msra.mxu0 0.0
        %3953 = vmatprep.subr.mxu0 0.0
        %3954 = vmatpush1.msra.mxu0 0.0
        %3955 = vmatprep.subr.mxu0 0.0
        %3956 = vmatpush1.msra.mxu0 0.0
        %3957 = vmatprep.subr.mxu0 0.0
        %3958 = vmatpush1.msra.mxu0 0.0
        %3959 = vmatprep.subr.mxu0 0.0
        %3960 = vmatpush1.msra.mxu0 0.0
        %3961 = vmatprep.subr.mxu0 0.0
        %3962 = vmatpush1.msra.mxu0 0.0
        %3963 = vmatprep.subr.mxu0 0.0
        %3964 = vmatpush1.msra.mxu0 0.0
        %3965 = vmatprep.mubr.f32.mxu0 0.0
        %3966 = vmatmul.mubr.f32.gmra.mrb[0].mxu0 %v3837
        %v3967 = vpop.f32.mrb[0].mxu0
        %v3968 = vadd.f32 %v3894, %v3967
        %v3969 = vpop.f32.mrb[0].mxu0
        %v3970 = vadd.f32 %v3898, %v3969
        %3971 = vmatprep.mubr.f32.mxu0 0.0
        %3972 = vmatmul.mubr.f32.gmra.mrb[0].mxu0 %v3838
        %v3973 = vpop.f32.mrb[0].mxu0
        %v3974 = vadd.f32 %v3894, %v3973
        %v3975 = vpop.f32.mrb[0].mxu0
        %v3976 = vadd.f32 %v3898, %v3975
        %3977 = vmatprep.mubr.f32.mxu0 0.0
        %3978 = vmatmul.mubr.f32.gmra.mrb[0].mxu0 %v3839
        %v3979 = vpop.f32.mrb[0].mxu0
        %v3980 = vadd.f32 %v3894, %v3979
        %v3981 = vpop.f32.mrb[0].mxu0
        %v3982 = vadd.f32 %v3898, %v3981
        %3983 = vmatprep.mubr.f32.mxu0 0.0
        %3984 = vmatmul.mubr.f32.gmra.mrb[0].mxu0 %v3840
        %v3985 = vpop.f32.mrb[0].mxu0
        %v3986 = vadd.f32 %v3894, %v3985
        %v3987 = vpop.f32.mrb[0].mxu0
        %v3988 = vadd.f32 %v3898, %v3987
        %3989 = vdwg.mxu0
        %v3990 = vmax.f32 %v3968, 0.0
        %v3991 = vmax.f32 %v3970, 0.0
        %v3992 = vmax.f32 %v3974, 0.0
        %v3993 = vmax.f32 %v3976, 0.0
        %v3994 = vmax.f32 %v3980, 0.0
        %v3995 = vmax.f32 %v3982, 0.0
        %v3996 = vmax.f32 %v3986, 0.0
        %v3997 = vmax.f32 %v3988, 0.0
        %v3998 = vld [vmem:[#allocation11] sm:$0xff]
        %v3999 = vld [vmem:[#allocation11 + $0x8] sm:$0xff]
        %v4000 = vld [vmem:[#allocation11 + $0x10] sm:$0xff]
        %v4001 = vld [vmem:[#allocation11 + $0x18] sm:$0xff]
        %v4002 = vld [vmem:[#allocation11 + $0x20] sm:$0xff]
        %v4003 = vld [vmem:[#allocation11 + $0x28] sm:$0xff]
        %v4004 = vld [vmem:[#allocation11 + $0x30] sm:$0xff]
        %v4005 = vld [vmem:[#allocation11 + $0x38] sm:$0xff]
        %v4006 = vld [vmem:[#allocation11 + $0x40] sm:$0xff]
        %v4007 = vld [vmem:[#allocation11 + $0x48] sm:$0xff]
        %v4008 = vld [vmem:[#allocation11 + $0x50] sm:$0xff]
        %v4009 = vld [vmem:[#allocation11 + $0x58] sm:$0xff]
        %v4010 = vld [vmem:[#allocation11 + $0x60] sm:$0xff]
        %v4011 = vld [vmem:[#allocation11 + $0x68] sm:$0xff]
        %v4012 = vld [vmem:[#allocation11 + $0x70] sm:$0xff]
        %v4013 = vld [vmem:[#allocation11 + $0x78] sm:$0xff]
        %v4014 = vld [vmem:[#allocation11 + $0x80] sm:$0xff]
        %v4015 = vld [vmem:[#allocation11 + $0x88] sm:$0xff]
        %v4016 = vld [vmem:[#allocation11 + $0x90] sm:$0xff]
        %v4017 = vld [vmem:[#allocation11 + $0x98] sm:$0xff]
        %v4018 = vld [vmem:[#allocation11 + $0xa0] sm:$0xff]
        %v4019 = vld [vmem:[#allocation11 + $0xa8] sm:$0xff]
        %v4020 = vld [vmem:[#allocation11 + $0xb0] sm:$0xff]
        %v4021 = vld [vmem:[#allocation11 + $0xb8] sm:$0xff]
        %v4022 = vld [vmem:[#allocation11 + $0xc0] sm:$0xff]
        %v4023 = vld [vmem:[#allocation11 + $0xc8] sm:$0xff]
        %v4024 = vld [vmem:[#allocation11 + $0xd0] sm:$0xff]
        %v4025 = vld [vmem:[#allocation11 + $0xd8] sm:$0xff]
        %v4026 = vld [vmem:[#allocation11 + $0xe0] sm:$0xff]
        %v4027 = vld [vmem:[#allocation11 + $0xe8] sm:$0xff]
        %v4028 = vld [vmem:[#allocation11 + $0xf0] sm:$0xff]
        %v4029 = vld [vmem:[#allocation11 + $0xf8] sm:$0xff]
        %v4030 = vunpack.c.l.bf16 %v3998
        %v4031 = vunpack.c.h.bf16 %v3998
        %v4032 = vunpack.c.l.bf16 %v3999
        %v4033 = vunpack.c.h.bf16 %v3999
        %v4034 = vunpack.c.l.bf16 %v4000
        %v4035 = vunpack.c.h.bf16 %v4000
        %v4036 = vunpack.c.l.bf16 %v4001
        %v4037 = vunpack.c.h.bf16 %v4001
        %v4038 = vunpack.c.l.bf16 %v4002
        %v4039 = vunpack.c.h.bf16 %v4002
        %v4040 = vunpack.c.l.bf16 %v4003
        %v4041 = vunpack.c.h.bf16 %v4003
        %v4042 = vunpack.c.l.bf16 %v4004
        %v4043 = vunpack.c.h.bf16 %v4004
        %v4044 = vunpack.c.l.bf16 %v4005
        %v4045 = vunpack.c.h.bf16 %v4005
        %v4046 = vunpack.c.l.bf16 %v4006
        %v4047 = vunpack.c.h.bf16 %v4006
        %v4048 = vunpack.c.l.bf16 %v4007
        %v4049 = vunpack.c.h.bf16 %v4007
        %v4050 = vunpack.c.l.bf16 %v4008
        %v4051 = vunpack.c.h.bf16 %v4008
        %v4052 = vunpack.c.l.bf16 %v4009
        %v4053 = vunpack.c.h.bf16 %v4009
        %v4054 = vunpack.c.l.bf16 %v4010
        %v4055 = vunpack.c.h.bf16 %v4010
        %v4056 = vunpack.c.l.bf16 %v4011
        %v4057 = vunpack.c.h.bf16 %v4011
        %v4058 = vunpack.c.l.bf16 %v4012
        %v4059 = vunpack.c.h.bf16 %v4012
        %v4060 = vunpack.c.l.bf16 %v4013
        %v4061 = vunpack.c.h.bf16 %v4013
        %v4062 = vunpack.c.l.bf16 %v4014
        %v4063 = vunpack.c.h.bf16 %v4014
        %v4064 = vunpack.c.l.bf16 %v4015
        %v4065 = vunpack.c.h.bf16 %v4015
        %v4066 = vunpack.c.l.bf16 %v4016
        %v4067 = vunpack.c.h.bf16 %v4016
        %v4068 = vunpack.c.l.bf16 %v4017
        %v4069 = vunpack.c.h.bf16 %v4017
        %v4070 = vunpack.c.l.bf16 %v4018
        %v4071 = vunpack.c.h.bf16 %v4018
        %v4072 = vunpack.c.l.bf16 %v4019
        %v4073 = vunpack.c.h.bf16 %v4019
        %v4074 = vunpack.c.l.bf16 %v4020
        %v4075 = vunpack.c.h.bf16 %v4020
        %v4076 = vunpack.c.l.bf16 %v4021
        %v4077 = vunpack.c.h.bf16 %v4021
        %v4078 = vunpack.c.l.bf16 %v4022
        %v4079 = vunpack.c.h.bf16 %v4022
        %v4080 = vunpack.c.l.bf16 %v4023
        %v4081 = vunpack.c.h.bf16 %v4023
        %v4082 = vunpack.c.l.bf16 %v4024
        %v4083 = vunpack.c.h.bf16 %v4024
        %v4084 = vunpack.c.l.bf16 %v4025
        %v4085 = vunpack.c.h.bf16 %v4025
        %v4086 = vunpack.c.l.bf16 %v4026
        %v4087 = vunpack.c.h.bf16 %v4026
        %v4088 = vunpack.c.l.bf16 %v4027
        %v4089 = vunpack.c.h.bf16 %v4027
        %v4090 = vunpack.c.l.bf16 %v4028
        %v4091 = vunpack.c.h.bf16 %v4028
        %v4092 = vunpack.c.l.bf16 %v4029
        %v4093 = vunpack.c.h.bf16 %v4029
        %v4094 = vld [vmem:[%s9] sm:$0x3]
        %v4096 = vlaneseq
        %v4097 = vshrl.u32 %v4096, 7
        %v4098 = vsub.s32 0, %v4097
        %v4099 = vrot.slane %v4094, %v4098
        %v4100 = vlaneseq
        %v4101 = vshrl.u32 %v4100, 7
        %v4102 = vsub.s32 1, %v4101
        %v4103 = vrot.slane %v4094, %v4102
        %4106 = vmatprep.subr.mxu0 %v4031
        %4107 = vmatpush1.msra.mxu0 %v4030
        %4108 = vmatprep.subr.mxu0 %v4033
        %4109 = vmatpush1.msra.mxu0 %v4032
        %4110 = vmatprep.subr.mxu0 %v4035
        %4111 = vmatpush1.msra.mxu0 %v4034
        %4112 = vmatprep.subr.mxu0 %v4037
        %4113 = vmatpush1.msra.mxu0 %v4036
        %4114 = vmatprep.subr.mxu0 %v4039
        %4115 = vmatpush1.msra.mxu0 %v4038
        %4116 = vmatprep.subr.mxu0 %v4041
        %4117 = vmatpush1.msra.mxu0 %v4040
        %4118 = vmatprep.subr.mxu0 %v4043
        %4119 = vmatpush1.msra.mxu0 %v4042
        %4120 = vmatprep.subr.mxu0 %v4045
        %4121 = vmatpush1.msra.mxu0 %v4044
        %4122 = vmatprep.subr.mxu0 %v4047
        %4123 = vmatpush1.msra.mxu0 %v4046
        %4124 = vmatprep.subr.mxu0 %v4049
        %4125 = vmatpush1.msra.mxu0 %v4048
        %4126 = vmatprep.subr.mxu0 %v4051
        %4127 = vmatpush1.msra.mxu0 %v4050
        %4128 = vmatprep.subr.mxu0 %v4053
        %4129 = vmatpush1.msra.mxu0 %v4052
        %4130 = vmatprep.subr.mxu0 %v4055
        %4131 = vmatpush1.msra.mxu0 %v4054
        %4132 = vmatprep.subr.mxu0 %v4057
        %4133 = vmatpush1.msra.mxu0 %v4056
        %4134 = vmatprep.subr.mxu0 %v4059
        %4135 = vmatpush1.msra.mxu0 %v4058
        %4136 = vmatprep.subr.mxu0 %v4061
        %4137 = vmatpush1.msra.mxu0 %v4060
        %4138 = vmatprep.subr.mxu0 %v4063
        %4139 = vmatpush1.msra.mxu0 %v4062
        %4140 = vmatprep.subr.mxu0 %v4065
        %4141 = vmatpush1.msra.mxu0 %v4064
        %4142 = vmatprep.subr.mxu0 %v4067
        %4143 = vmatpush1.msra.mxu0 %v4066
        %4144 = vmatprep.subr.mxu0 %v4069
        %4145 = vmatpush1.msra.mxu0 %v4068
        %4146 = vmatprep.subr.mxu0 %v4071
        %4147 = vmatpush1.msra.mxu0 %v4070
        %4148 = vmatprep.subr.mxu0 %v4073
        %4149 = vmatpush1.msra.mxu0 %v4072
        %4150 = vmatprep.subr.mxu0 %v4075
        %4151 = vmatpush1.msra.mxu0 %v4074
        %4152 = vmatprep.subr.mxu0 %v4077
        %4153 = vmatpush1.msra.mxu0 %v4076
        %4154 = vmatprep.subr.mxu0 %v4079
        %4155 = vmatpush1.msra.mxu0 %v4078
        %4156 = vmatprep.subr.mxu0 %v4081
        %4157 = vmatpush1.msra.mxu0 %v4080
        %4158 = vmatprep.subr.mxu0 %v4083
        %4159 = vmatpush1.msra.mxu0 %v4082
        %4160 = vmatprep.subr.mxu0 %v4085
        %4161 = vmatpush1.msra.mxu0 %v4084
        %4162 = vmatprep.subr.mxu0 %v4087
        %4163 = vmatpush1.msra.mxu0 %v4086
        %4164 = vmatprep.subr.mxu0 %v4089
        %4165 = vmatpush1.msra.mxu0 %v4088
        %4166 = vmatprep.subr.mxu0 %v4091
        %4167 = vmatpush1.msra.mxu0 %v4090
        %4168 = vmatprep.subr.mxu0 %v4093
        %4169 = vmatpush1.msra.mxu0 %v4092
        %4170 = vmatprep.mubr.f32.mxu0 %v3991
        %4171 = vmatmul.mubr.f32.gmra.mrb[0].mxu0 %v3990
        %v4172 = vpop.f32.mrb[0].mxu0
        %v4173 = vadd.f32 %v4099, %v4172
        %v4174 = vpop.f32.mrb[0].mxu0
        %v4175 = vadd.f32 %v4103, %v4174
        %4176 = vmatprep.mubr.f32.mxu0 %v3993
        %4177 = vmatmul.mubr.f32.gmra.mrb[0].mxu0 %v3992
        %v4178 = vpop.f32.mrb[0].mxu0
        %v4179 = vadd.f32 %v4099, %v4178
        %v4180 = vpop.f32.mrb[0].mxu0
        %v4181 = vadd.f32 %v4103, %v4180
        %4182 = vmatprep.mubr.f32.mxu0 %v3995
        %4183 = vmatmul.mubr.f32.gmra.mrb[0].mxu0 %v3994
        %v4184 = vpop.f32.mrb[0].mxu0
        %v4185 = vadd.f32 %v4099, %v4184
        %v4186 = vpop.f32.mrb[0].mxu0
        %v4187 = vadd.f32 %v4103, %v4186
        %4188 = vmatprep.mubr.f32.mxu0 %v3997
        %4189 = vmatmul.mubr.f32.gmra.mrb[0].mxu0 %v3996
        %v4190 = vpop.f32.mrb[0].mxu0
        %v4191 = vadd.f32 %v4099, %v4190
        %v4192 = vpop.f32.mrb[0].mxu0
        %v4193 = vadd.f32 %v4103, %v4192
        %4194 = vdwg.mxu0
        %v4195 = vmax.f32 %v4173, 0.0
        %v4196 = vmax.f32 %v4175, 0.0
        %v4197 = vmax.f32 %v4179, 0.0
        %v4198 = vmax.f32 %v4181, 0.0
        %v4199 = vmax.f32 %v4185, 0.0
        %v4200 = vmax.f32 %v4187, 0.0
        %v4201 = vmax.f32 %v4191, 0.0
        %v4202 = vmax.f32 %v4193, 0.0
        %v4203 = vld [vmem:[#allocation13] sm:$0xf]
        %v4204 = vld [vmem:[#allocation13 + $0x4] sm:$0xf]
        %v4205 = vld [vmem:[#allocation13 + $0x8] sm:$0xf]
        %v4206 = vld [vmem:[#allocation13 + $0xc] sm:$0xf]
        %v4207 = vld [vmem:[#allocation13 + $0x10] sm:$0xf]
        %v4208 = vld [vmem:[#allocation13 + $0x14] sm:$0xf]
        %v4209 = vld [vmem:[#allocation13 + $0x18] sm:$0xf]
        %v4210 = vld [vmem:[#allocation13 + $0x1c] sm:$0xf]
        %v4211 = vld [vmem:[#allocation13 + $0x20] sm:$0xf]
        %v4212 = vld [vmem:[#allocation13 + $0x24] sm:$0xf]
        %v4213 = vld [vmem:[#allocation13 + $0x28] sm:$0xf]
        %v4214 = vld [vmem:[#allocation13 + $0x2c] sm:$0xf]
        %v4215 = vld [vmem:[#allocation13 + $0x30] sm:$0xf]
        %v4216 = vld [vmem:[#allocation13 + $0x34] sm:$0xf]
        %v4217 = vld [vmem:[#allocation13 + $0x38] sm:$0xf]
        %v4218 = vld [vmem:[#allocation13 + $0x3c] sm:$0xf]
        %v4219 = vld [vmem:[#allocation13 + $0x40] sm:$0xf]
        %v4220 = vld [vmem:[#allocation13 + $0x44] sm:$0xf]
        %v4221 = vld [vmem:[#allocation13 + $0x48] sm:$0xf]
        %v4222 = vld [vmem:[#allocation13 + $0x4c] sm:$0xf]
        %v4223 = vld [vmem:[#allocation13 + $0x50] sm:$0xf]
        %v4224 = vld [vmem:[#allocation13 + $0x54] sm:$0xf]
        %v4225 = vld [vmem:[#allocation13 + $0x58] sm:$0xf]
        %v4226 = vld [vmem:[#allocation13 + $0x5c] sm:$0xf]
        %v4227 = vld [vmem:[#allocation13 + $0x60] sm:$0xf]
        %v4228 = vld [vmem:[#allocation13 + $0x64] sm:$0xf]
        %v4229 = vld [vmem:[#allocation13 + $0x68] sm:$0xf]
        %v4230 = vld [vmem:[#allocation13 + $0x6c] sm:$0xf]
        %v4231 = vld [vmem:[#allocation13 + $0x70] sm:$0xf]
        %v4232 = vld [vmem:[#allocation13 + $0x74] sm:$0xf]
        %v4233 = vld [vmem:[#allocation13 + $0x78] sm:$0xf]
        %v4234 = vld [vmem:[#allocation13 + $0x7c] sm:$0xf]
        %v4235 = vunpack.c.l.bf16 %v4203
        %v4236 = vunpack.c.l.bf16 %v4204
        %v4237 = vunpack.c.l.bf16 %v4205
        %v4238 = vunpack.c.l.bf16 %v4206
        %v4239 = vunpack.c.l.bf16 %v4207
        %v4240 = vunpack.c.l.bf16 %v4208
        %v4241 = vunpack.c.l.bf16 %v4209
        %v4242 = vunpack.c.l.bf16 %v4210
        %v4243 = vunpack.c.l.bf16 %v4211
        %v4244 = vunpack.c.l.bf16 %v4212
        %v4245 = vunpack.c.l.bf16 %v4213
        %v4246 = vunpack.c.l.bf16 %v4214
        %v4247 = vunpack.c.l.bf16 %v4215
        %v4248 = vunpack.c.l.bf16 %v4216
        %v4249 = vunpack.c.l.bf16 %v4217
        %v4250 = vunpack.c.l.bf16 %v4218
        %v4251 = vunpack.c.l.bf16 %v4219
        %v4252 = vunpack.c.l.bf16 %v4220
        %v4253 = vunpack.c.l.bf16 %v4221
        %v4254 = vunpack.c.l.bf16 %v4222
        %v4255 = vunpack.c.l.bf16 %v4223
        %v4256 = vunpack.c.l.bf16 %v4224
        %v4257 = vunpack.c.l.bf16 %v4225
        %v4258 = vunpack.c.l.bf16 %v4226
        %v4259 = vunpack.c.l.bf16 %v4227
        %v4260 = vunpack.c.l.bf16 %v4228
        %v4261 = vunpack.c.l.bf16 %v4229
        %v4262 = vunpack.c.l.bf16 %v4230
        %v4263 = vunpack.c.l.bf16 %v4231
        %v4264 = vunpack.c.l.bf16 %v4232
        %v4265 = vunpack.c.l.bf16 %v4233
        %v4266 = vunpack.c.l.bf16 %v4234
        %v4267 = vld [vmem:[%s11] sm:$0x1]
        %v4269 = vlaneseq
        %v4270 = vshrl.u32 %v4269, 7
        %v4271 = vsub.s32 0, %v4270
        %v4272 = vrot.slane %v4267, %v4271
        %4274 = vmatprep.subr.mxu0 0.0
        %4275 = vmatpush1.msra.mxu0 %v4235
        %4276 = vmatprep.subr.mxu0 0.0
        %4277 = vmatpush1.msra.mxu0 %v4236
        %4278 = vmatprep.subr.mxu0 0.0
        %4279 = vmatpush1.msra.mxu0 %v4237
        %4280 = vmatprep.subr.mxu0 0.0
        %4281 = vmatpush1.msra.mxu0 %v4238
        %4282 = vmatprep.subr.mxu0 0.0
        %4283 = vmatpush1.msra.mxu0 %v4239
        %4284 = vmatprep.subr.mxu0 0.0
        %4285 = vmatpush1.msra.mxu0 %v4240
        %4286 = vmatprep.subr.mxu0 0.0
        %4287 = vmatpush1.msra.mxu0 %v4241
        %4288 = vmatprep.subr.mxu0 0.0
        %4289 = vmatpush1.msra.mxu0 %v4242
        %4290 = vmatprep.subr.mxu0 0.0
        %4291 = vmatpush1.msra.mxu0 %v4243
        %4292 = vmatprep.subr.mxu0 0.0
        %4293 = vmatpush1.msra.mxu0 %v4244
        %4294 = vmatprep.subr.mxu0 0.0
        %4295 = vmatpush1.msra.mxu0 %v4245
        %4296 = vmatprep.subr.mxu0 0.0
        %4297 = vmatpush1.msra.mxu0 %v4246
        %4298 = vmatprep.subr.mxu0 0.0
        %4299 = vmatpush1.msra.mxu0 %v4247
        %4300 = vmatprep.subr.mxu0 0.0
        %4301 = vmatpush1.msra.mxu0 %v4248
        %4302 = vmatprep.subr.mxu0 0.0
        %4303 = vmatpush1.msra.mxu0 %v4249
        %4304 = vmatprep.subr.mxu0 0.0
        %4305 = vmatpush1.msra.mxu0 %v4250
        %4306 = vmatprep.subr.mxu0 0.0
        %4307 = vmatpush1.msra.mxu0 %v4251
        %4308 = vmatprep.subr.mxu0 0.0
        %4309 = vmatpush1.msra.mxu0 %v4252
        %4310 = vmatprep.subr.mxu0 0.0
        %4311 = vmatpush1.msra.mxu0 %v4253
        %4312 = vmatprep.subr.mxu0 0.0
        %4313 = vmatpush1.msra.mxu0 %v4254
        %4314 = vmatprep.subr.mxu0 0.0
        %4315 = vmatpush1.msra.mxu0 %v4255
        %4316 = vmatprep.subr.mxu0 0.0
        %4317 = vmatpush1.msra.mxu0 %v4256
        %4318 = vmatprep.subr.mxu0 0.0
        %4319 = vmatpush1.msra.mxu0 %v4257
        %4320 = vmatprep.subr.mxu0 0.0
        %4321 = vmatpush1.msra.mxu0 %v4258
        %4322 = vmatprep.subr.mxu0 0.0
        %4323 = vmatpush1.msra.mxu0 %v4259
        %4324 = vmatprep.subr.mxu0 0.0
        %4325 = vmatpush1.msra.mxu0 %v4260
        %4326 = vmatprep.subr.mxu0 0.0
        %4327 = vmatpush1.msra.mxu0 %v4261
        %4328 = vmatprep.subr.mxu0 0.0
        %4329 = vmatpush1.msra.mxu0 %v4262
        %4330 = vmatprep.subr.mxu0 0.0
        %4331 = vmatpush1.msra.mxu0 %v4263
        %4332 = vmatprep.subr.mxu0 0.0
        %4333 = vmatpush1.msra.mxu0 %v4264
        %4334 = vmatprep.subr.mxu0 0.0
        %4335 = vmatpush1.msra.mxu0 %v4265
        %4336 = vmatprep.subr.mxu0 0.0
        %4337 = vmatpush1.msra.mxu0 %v4266
        %4338 = vmatprep.mubr.f32.mxu0 %v4196
        %4339 = vmatmul.mubr.f32.gmra.mrb[0].mxu0 %v4195
        %v4340 = vpop.f32.mrb[0].mxu0
        %v4341 = vadd.f32 %v4272, %v4340
        %v4342 = vpop.f32.mrb[0].mxu0
        %4343 = vmatprep.mubr.f32.mxu0 %v4198
        %4344 = vmatmul.mubr.f32.gmra.mrb[0].mxu0 %v4197
        %v4345 = vpop.f32.mrb[0].mxu0
        %v4346 = vadd.f32 %v4272, %v4345
        %v4347 = vpop.f32.mrb[0].mxu0
        %4348 = vmatprep.mubr.f32.mxu0 %v4200
        %4349 = vmatmul.mubr.f32.gmra.mrb[0].mxu0 %v4199
        %v4350 = vpop.f32.mrb[0].mxu0
        %v4351 = vadd.f32 %v4272, %v4350
        %v4352 = vpop.f32.mrb[0].mxu0
        %4353 = vmatprep.mubr.f32.mxu0 %v4202
        %4354 = vmatmul.mubr.f32.gmra.mrb[0].mxu0 %v4201
        %v4355 = vpop.f32.mrb[0].mxu0
        %v4356 = vadd.f32 %v4272, %v4355
        %v4357 = vpop.f32.mrb[0].mxu0
        %4358 = vdwg.mxu0
        %v4359 = vadd.f32 %v3837, %v4341
        %v4360 = vadd.f32 %v3838, %v4346
        %v4361 = vadd.f32 %v3839, %v4351
        %v4362 = vadd.f32 %v3840, %v4356
        %v4363 = vld [vmem:[%s14] sm:$0x1]
        %v4364 = vld [vmem:[%s15] sm:$0x1]
        %4365 = vadd.xlane.f32.xlu0 %v4359
        %v4366 = vpop.xlane.xlu0 %4365
        %4367 = vadd.xlane.f32.xlu0 %v4360
        %v4368 = vpop.xlane.xlu0 %4367
        %4369 = vadd.xlane.f32.xlu0 %v4361
        %v4370 = vpop.xlane.xlu0 %4369
        %4371 = vadd.xlane.f32.xlu0 %v4362
        %v4372 = vpop.xlane.xlu0 %4371
        %v4373 = vmul.f32 %v4366, %v3784
        %v4374 = vmul.f32 %v4368, %v3784
        %v4375 = vmul.f32 %v4370, %v3784
        %v4376 = vmul.f32 %v4372, %v3784
        %v4377 = vsub.f32 %v4359, %v4373
        %v4378 = vsub.f32 %v4360, %v4374
        %v4379 = vsub.f32 %v4361, %v4375
        %v4380 = vsub.f32 %v4362, %v4376
        %v4381 = vmul.f32 %v4377, %v4377
        %v4382 = vmul.f32 %v4378, %v4378
        %v4383 = vmul.f32 %v4379, %v4379
        %v4384 = vmul.f32 %v4380, %v4380
        %4385 = vadd.xlane.f32.xlu0 %v4381
        %v4386 = vpop.xlane.xlu0 %4385
        %4387 = vadd.xlane.f32.xlu0 %v4382
        %v4388 = vpop.xlane.xlu0 %4387
        %4389 = vadd.xlane.f32.xlu0 %v4383
        %v4390 = vpop.xlane.xlu0 %4389
        %4391 = vadd.xlane.f32.xlu0 %v4384
        %v4392 = vpop.xlane.xlu0 %4391
        %v4393 = vmul.f32 %v4386, %v3784
        %v4394 = vmul.f32 %v4388, %v3784
        %v4395 = vmul.f32 %v4390, %v3784
        %v4396 = vmul.f32 %v4392, %v3784
        %v4397 = vadd.f32 %v4393, 1e-05
        %v4398 = vadd.f32 %v4394, 1e-05
        %v4399 = vadd.f32 %v4395, 1e-05
        %v4400 = vadd.f32 %v4396, 1e-05
        %v4401 = vrsqrt.pop %v4397
        %v4402 = vrsqrt.pop %v4398
        %v4403 = vrsqrt.pop %v4399
        %v4404 = vrsqrt.pop %v4400
        %v4405 = vmul.f32 %v4377, %v4401
        %v4406 = vmul.f32 %v4378, %v4402
        %v4407 = vmul.f32 %v4379, %v4403
        %v4408 = vmul.f32 %v4380, %v4404
        %v4410 = vlaneseq
        %v4411 = vshrl.u32 %v4410, 7
        %v4412 = vsub.s32 0, %v4411
        %v4413 = vrot.slane %v4363, %v4412
        %v4415 = vmul.f32 %v4405, %v4413
        %v4416 = vmul.f32 %v4406, %v4413
        %v4417 = vmul.f32 %v4407, %v4413
        %v4418 = vmul.f32 %v4408, %v4413
        %v4420 = vlaneseq
        %v4421 = vshrl.u32 %v4420, 7
        %v4422 = vsub.s32 0, %v4421
        %v4423 = vrot.slane %v4364, %v4422
        %v4425 = vadd.f32 %v4415, %v4423
        %v4426 = vadd.f32 %v4416, %v4423
        %v4427 = vadd.f32 %v4417, %v4423
        %v4428 = vadd.f32 %v4418, %v4423
        %4429 = vst [vmem:[%s651] sm:$0xff] %v4425
        %4430 = vst [vmem:[%s651 + $0x8] sm:$0xff] %v4426
        %4431 = vst [vmem:[%s651 + $0x10] sm:$0xff] %v4427
        %4432 = vst [vmem:[%s651 + $0x18] sm:$0xff] %v4428
        %s4433 = sand.u32 %s392, 1
        %s4434 = scalar_lea.sflag [#allocation4], %s4433
        %s4435 = sand.u32 %s392, 1
        %s4436 = smul.addr %s4435, 32
        %s4437 = scalar_lea.vmem [#allocation14], %s4436
        // Predicated region
        $region113: #{tpu_custom_call.1} parent=83 // pred_check
          %p4438 = pneg %p402
        $region114: #{tpu_custom_call.1} parent=83 // pred_check_branch
          %4440 = sbr.rel (%p4438) target = $region116
        $region115: #{tpu_custom_call.1} parent=83 // pred_region
          %s4441 = smul.u32 4, %s38
          %s4443 = ssub.s32 512, 512
          %4444 = vsyncadd %s4434, %s4443
          %s4445 = smul.addr %s4441, 128
          %s4446 = scalar_lea.hbm %s16, %s4445
          %s4447 = sshll.u32 %s4437, 4
          %s4448 = int_to_ptr.vmem [resolvable:$true] %s4447
          %4453 = dma.vmem_to_hbm [thread:$0]  %s4448, 512, %s4446, %s4434, 128, 128, 8
        $region116: #{tpu_custom_call.1} parent=83 // pred_fallthru
          _
      $region84: #{tpu_custom_call.1} parent=5 // pred_fallthru
        _
      %p4454 = scmp.le.s32.totalorder 2, %s33
      // Predicated region
      $region117: #{tpu_custom_call.1} parent=5 // pred_check
        %p4455 = pneg %p4454
      $region118: #{tpu_custom_call.1} parent=5 // pred_check_branch
        %4457 = sbr.rel (%p4455) target = $region120
      $region119: #{tpu_custom_call.1} parent=5 // pred_region
        %s4458 = ssub.s32 %s33, 2
        // Predicated region
        $region121: #{tpu_custom_call.1} parent=119 // pred_check
          %p4459 = pneg %p408
        $region122: #{tpu_custom_call.1} parent=119 // pred_check_branch
          %4461 = sbr.rel (%p4459) target = $region124
        $region123: #{tpu_custom_call.1} parent=119 // pred_region
          %s4462 = sand.u32 %s393, 1
          %s4463 = scalar_lea.sflag [#allocation4], %s4462
          %s4464 = sand.u32 %s393, 1
          %s4465 = smul.addr %s4464, 32
          %s4466 = scalar_lea.vmem [#allocation14], %s4465
          %4467 = dma.done %s4463, 512
        $region124: #{tpu_custom_call.1} parent=119 // pred_fallthru
          _
      $region120: #{tpu_custom_call.1} parent=5 // pred_fallthru
        _
    $region6: #{tpu_custom_call.1} parent=1 // loop_footer
      %s37 = sadd.s32 1, %s33
    $region7: #{tpu_custom_call.1} parent=1 // loop_footer_branch
      %32 = sbr.rel target = $region3
    $region8: #{tpu_custom_call.1} parent=1 // loop_exit
      _
    %4468 = vsyncpa [#allocation3], 1
    %s4469 = scalar_lea.sflag [#allocation3], 1
    %4470 = vsyncpa %s4469, 1
    %4471 = vsyncpa [#allocation6], 1
    %s4472 = scalar_lea.sflag [#allocation6], 1
    %4473 = vsyncpa %s4472, 1
    %4474 = vsyncpa [#allocation9], 1
    %4475 = vsyncpa [#allocation12], 1
    %4476 = vsyncpa [#allocation4], 1
    %s4477 = scalar_lea.sflag [#allocation4], 1
    %4478 = vsyncpa %s4477, 1

</llo_original>
